<compile_context>
chip_gen: v6e
topology: v6e:2x2x1
jax: 0.10.0
libtpu: 0.0.40
codegen_flags: <defaults>
</compile_context>

<pallas_src>
import functools

import jax
import jax.numpy as jnp
from jax import lax
from jax.experimental import pallas as pl
from jax.experimental.pallas import tpu as pltpu

LANE = 128


def _round_up(x, m):
    return (x + m - 1) // m * m


def _bottleneck_kernel(x_top_ref, x_main_ref, x_bot_ref,
                       w1_ref, w2_ref, w3_ref,
                       b1_ref, b2_ref, b3_ref,
                       out_ref, pad_ref, *, W, TH):
    """One (batch, row-tile) pair per grid step.

    x_top_ref : (1, W, Cin)         bf16 halo image-row above the tile (clamped)
    x_main_ref: (1, TH*W, Cin)      bf16 interior rows of the tile
    x_bot_ref : (1, W, Cin)         bf16 halo image-row below the tile (clamped)
    w1_ref    : (Cin, P)            bf16 1x1 conv, BN1 scale folded in
    w2_ref    : (3, 3*Ppad, P)      bf16 3x3 conv, [kh, kw*Ppad + cin, cout],
                                    BN2 folded; K rows with cin >= P are zero
    w3_ref    : (P, Cout)           bf16 1x1 conv, BN3 scale folded in
    b*_ref    : (1, C)              f32 folded BN biases
    out_ref   : (1, TH*W, Cout)     bf16 output tile
    pad_ref   : ((TH+2)*W, 3*Ppad)  bf16 scratch: dw-expanded conv1 activations
                                    (fully rewritten every step -> no staleness)
    """
    THW = TH * W
    EXT = (TH + 2) * W
    P = w3_ref.shape[0]
    Ppad = w2_ref.shape[1] // 3
    f32 = jnp.float32

    t = pl.program_id(1)
    nt = pl.num_programs(1)

    # --- conv1 (1x1) over tile + 1-row vertical halo (recompute-at-halo) ----
    x_ext = jnp.concatenate(
        [x_top_ref[0], x_main_ref[0], x_bot_ref[0]], axis=0)       # (EXT, Cin)
    t1 = jnp.dot(x_ext, w1_ref[...], preferred_element_type=f32)   # (EXT, P)
    t1 = jnp.maximum(t1 + b1_ref[...], 0.0)

    # conv2's zero padding lives in conv1-output space: at the image top/bottom
    # the halo rows must be exactly zero, not conv1(0-input) = relu(b1).
    brow = lax.broadcasted_iota(jnp.int32, (EXT, 1), 0)
    keep = jnp.logical_and(
        jnp.logical_or(brow >= W, t > 0),
        jnp.logical_or(brow < (TH + 1) * W, t < nt - 1))
    t1 = jnp.where(keep, t1, 0.0)

    # --- horizontal (dw) expansion, hoisted out of the 3x3 tap loop ----------
    # Shifts + edge selects in f32 (v5e: no bf16 VALU), shift on the XLU via
    # pltpu.roll; each kw block is stored as a full Ppad-wide, 128-lane-aligned
    # slab (padded lanes stored as zeros) -> unmasked full-lane vst.
    w_idx = lax.broadcasted_iota(jnp.int32, (EXT, 1), 0) % W
    lane_pad = Ppad - P
    lane_zeros = (jnp.zeros((EXT, lane_pad), pad_ref.dtype) if lane_pad else None)
    for kw, dw in enumerate((-1, 0, 1)):
        if dw == 0:
            slab = t1
        else:
            shifted = pltpu.roll(t1, (-dw) % EXT, axis=0)   # slab[j] = t1[j + dw]
            valid = jnp.logical_and(w_idx + dw >= 0, w_idx + dw <= W - 1)
            slab = jnp.where(valid, shifted, 0.0)
        slab = slab.astype(pad_ref.dtype)
        if lane_pad:
            slab = jnp.concatenate([slab, lane_zeros], axis=1)
        pad_ref[:, kw * Ppad:(kw + 1) * Ppad] = slab

    # --- conv2 (3x3, stride 1, pad 1): 3 matmuls with K = 3*Ppad -------------
    # kh*W offsets (0, W, 2W) are multiples of 16 -> zero-copy bf16 K-slices.
    acc = jnp.dot(pad_ref[0:THW, :], w2_ref[0], preferred_element_type=f32)
    acc = acc + jnp.dot(pad_ref[W:W + THW, :], w2_ref[1],
                        preferred_element_type=f32)
    acc = acc + jnp.dot(pad_ref[2 * W:2 * W + THW, :], w2_ref[2],
                        preferred_element_type=f32)
    t2 = jnp.maximum(acc + b2_ref[...], 0.0)                        # (THW, P)

    # --- conv3 (1x1) + bias + residual + relu; bf16 store --------------------
    t3 = jnp.dot(t2.astype(w3_ref.dtype), w3_ref[...],
                 preferred_element_type=f32)                        # (THW, Cout)
    t3 = t3 + b3_ref[...] + x_main_ref[0].astype(f32)
    out_ref[0] = jnp.maximum(t3, 0.0).astype(out_ref.dtype)


def bottleneck_pallas(x_nhwc, params, *, tile_h=None):
    """x_nhwc: (N, H, W, Cin) bfloat16 (NHWC). Returns (N, H, W, Cout) bfloat16."""
    N, H, W, Cin = x_nhwc.shape
    assert x_nhwc.dtype == jnp.bfloat16
    assert W % 16 == 0, "W must be a multiple of 16 (bf16 sublane tile)"
    P = params["w1"].shape[1]
    Ppad = params["w2"].shape[1] // 3
    Cout = params["w3"].shape[1]
    assert params["w1"].shape[0] == Cin
    assert Cout == Cin, "downsample is None => inplanes must equal planes*4"

    TH = tile_h if tile_h is not None else (8 if H % 8 == 0 else H)
    assert H % TH == 0
    NT = H // TH
    THW = TH * W
    HW = H * W

    x = x_nhwc.reshape(N, HW, Cin)          # free reshape; channels on lanes
    bf16 = jnp.bfloat16
    w1 = params["w1"].astype(bf16)
    w2 = params["w2"].astype(bf16)
    w3 = params["w3"].astype(bf16)
    b1, b2, b3 = params["b1"], params["b2"], params["b3"]          # f32

    def const_spec(shape):
        # Weights/biases never change across grid steps -> single-buffered.
        return pl.BlockSpec(shape, lambda n, t: (0,) * len(shape),
                            pipeline_mode=pl.Buffered(1))

    # x passed three times: tile interior (blocked on the tile) plus one halo
    # image-row above/below via W-row blocks whose block index is the image row
    # (clamped at the image edge; the kernel zero-masks those rows).
    x_top_spec = pl.BlockSpec(
        (1, W, Cin), lambda n, t: (n, jnp.maximum(t * TH - 1, 0), 0))
    x_main_spec = pl.BlockSpec((1, THW, Cin), lambda n, t: (n, t, 0))
    x_bot_spec = pl.BlockSpec(
        (1, W, Cin), lambda n, t: (n, jnp.minimum(t * TH + TH, H - 1), 0))
    out_spec = pl.BlockSpec((1, THW, Cout), lambda n, t: (n, t, 0))

    # Scoped-VMEM limit sized from the actual resident blocks (+ margin).
    resident = (2 * (THW + 2 * W) * Cin * 2          # x blocks, double-buffered
                + 2 * THW * Cout * 2                 # out block, double-buffered
                + (w1.size + w2.size + w3.size) * 2  # single-buffered weights
                + (b1.size + b2.size + b3.size) * 4
                + (TH + 2) * W * 3 * Ppad * 2)       # pad scratch
    vmem_limit = int(min(48 << 20, max(4 * resident + (8 << 20), 32 << 20)))

    out = pl.pallas_call(
        functools.partial(_bottleneck_kernel, W=W, TH=TH),
        out_shape=jax.ShapeDtypeStruct((N, HW, Cout), jnp.bfloat16),
        grid=(N, NT),
        in_specs=[
            x_top_spec, x_main_spec, x_bot_spec,
            const_spec(w1.shape), const_spec(w2.shape), const_spec(w3.shape),
            const_spec(b1.shape), const_spec(b2.shape), const_spec(b3.shape),
        ],
        out_specs=out_spec,
        scratch_shapes=[pltpu.VMEM(((TH + 2) * W, 3 * Ppad), jnp.bfloat16)],
        compiler_params=pltpu.CompilerParams(
            dimension_semantics=("parallel", "parallel"),
            vmem_limit_bytes=vmem_limit),
    )(x, x, x, w1, w2, w3, b1, b2, b3)

    return out.reshape(N, H, W, Cout)


# ---------------------------------------------------------------------------
# Parameter construction (deterministic, synthetic) + pure-JAX reference.
# ---------------------------------------------------------------------------
def _fold_bn(gamma, beta, mean, var, eps=1e-5):
    scale = gamma / jnp.sqrt(var + eps)
    bias = beta - mean * scale
    return scale, bias


def make_params(key, inplanes, planes):
    """Conv weights in MXU matmul layout with eval-mode BN scales folded in.

    w2 K-layout per kh tap is [kw * Ppad + cin], Ppad = round_up(planes, 128),
    so each per-kw lane block of the conv2 slab is 128-lane aligned; padded K
    rows are zero.
    """
    exp = 4
    Ppad = _round_up(planes, LANE)
    ks = jax.random.split(key, 15)
    f32 = jnp.float32

    # PyTorch conv weight layout (O, I, kH, kW)
    w1_oihw = 0.1 * jax.random.normal(ks[0], (planes, inplanes, 1, 1), f32)
    w2_oihw = 0.1 * jax.random.normal(ks[1], (planes, planes, 3, 3), f32)
    w3_oihw = 0.1 * jax.random.normal(ks[2], (planes * exp, planes, 1, 1), f32)

    def bn(kg, kb, km, kv, c):
        gamma = jax.random.uniform(kg, (c,), f32, 0.5, 1.5)
        beta = 0.1 * jax.random.normal(kb, (c,), f32)
        mean = 0.1 * jax.random.normal(km, (c,), f32)
        var = jax.random.uniform(kv, (c,), f32, 0.5, 1.5)
        return _fold_bn(gamma, beta, mean, var)

    s1, b1 = bn(ks[3], ks[4], ks[5], ks[6], planes)
    s2, b2 = bn(ks[7], ks[8], ks[9], ks[10], planes)
    s3, b3 = bn(ks[11], ks[12], ks[13], ks[14], planes * exp)

    w1 = jnp.transpose(w1_oihw[:, :, 0, 0], (1, 0)) * s1[None, :]
    w2_khkwio = jnp.transpose(w2_oihw, (2, 3, 1, 0)) * s2[None, None, None, :]
    w2 = jnp.zeros((3, 3 * Ppad, planes), f32)
    for kw in range(3):
        w2 = w2.at[:, kw * Ppad:kw * Ppad + planes, :].set(w2_khkwio[:, kw])
    w3 = jnp.transpose(w3_oihw[:, :, 0, 0], (1, 0)) * s3[None, :]

    return {
        "w1": w1, "w2": w2, "w3": w3,
        "b1": b1.reshape(1, -1), "b2": b2.reshape(1, -1), "b3": b3.reshape(1, -1),
    }


def bottleneck_reference(x_nhwc, params):
    """Pure-JAX NHWC reference (lax conv) with the same bf16 casts as the kernel."""
    f32, bf16 = jnp.float32, jnp.bfloat16
    x = x_nhwc.astype(bf16)
    Cin = x.shape[-1]
    P = params["w1"].shape[1]
    Ppad = params["w2"].shape[1] // 3
    Cout = params["w3"].shape[1]
    dn = ("NHWC", "HWIO", "NHWC")

    w1 = params["w1"].astype(bf16).reshape(1, 1, Cin, P)
    w2 = params["w2"].astype(bf16).reshape(3, 3, Ppad, P)[:, :, :P, :]
    w3 = params["w3"].astype(bf16).reshape(1, 1, P, Cout)

    def conv(a, w, pad):
        return lax.conv_general_dilated(a, w, (1, 1), pad, dimension_numbers=dn,
                                        preferred_element_type=f32)

    o = jnp.maximum(conv(x, w1, "VALID") + params["b1"][0], 0.0)
    o = jnp.maximum(conv(o.astype(bf16), w2, "SAME") + params["b2"][0], 0.0)
    o = conv(o.astype(bf16), w3, "VALID") + params["b3"][0] + x.astype(f32)
    return jnp.maximum(o, 0.0)


if __name__ == "__main__":
    key = jax.random.PRNGKey(0)
    k_x, k_p = jax.random.split(key)

    planes = 32
    inplanes = planes * 4          # 128: required since downsample is None
    N, H, W = 2, 16, 16

    # NHWC bf16 is the activation layout carried between blocks; no wrapper
    # NCHW transpose or f32<->bf16 pass surrounds the kernel.
    x = jax.random.normal(k_x, (N, H, W, inplanes), jnp.float32).astype(jnp.bfloat16)
    params = make_params(k_p, inplanes, planes)

    out = jax.block_until_ready(bottleneck_pallas(x, params))
    ref = bottleneck_reference(x, params)

    assert out.shape == (N, H, W, inplanes)
    assert out.dtype == jnp.bfloat16
    out_f32 = out.astype(jnp.float32)
    err = jnp.max(jnp.abs(out_f32 - ref))
    assert jnp.allclose(out_f32, ref, atol=5e-2, rtol=5e-2), f"max abs err = {err}"

    print("KERNEL_OK")
</pallas_src>

<mosaic_0001>
module attributes {stable_mosaic.version = 11 : i64} {
  func.func @_bottleneck_kernel(%arg0: i32, %arg1: i32, %arg2: memref<1x16x128xbf16, #tpu.memory_space<vmem>>, %arg3: memref<1x128x128xbf16, #tpu.memory_space<vmem>>, %arg4: memref<1x16x128xbf16, #tpu.memory_space<vmem>>, %arg5: memref<128x32xbf16, #tpu.memory_space<vmem>>, %arg6: memref<3x384x32xbf16, #tpu.memory_space<vmem>>, %arg7: memref<32x128xbf16, #tpu.memory_space<vmem>>, %arg8: memref<1x32xf32, #tpu.memory_space<vmem>>, %arg9: memref<1x32xf32, #tpu.memory_space<vmem>>, %arg10: memref<1x128xf32, #tpu.memory_space<vmem>>, %arg11: memref<1x128x128xbf16, #tpu.memory_space<vmem>>, %arg12: memref<160x384xbf16, #tpu.memory_space<vmem>>) attributes {dimension_semantics = [#tpu.dimension_semantics<parallel>, #tpu.dimension_semantics<parallel>], iteration_bounds = array<i64: 2, 2>, scalar_prefetch = 0 : i64, scratch_operands = 1 : i64, tpu.core_type = #tpu.core_type<tc>, window_params = [{transform_indices = @transform_0, window_bounds = array<i64: 1, 16, 128>}, {transform_indices = @transform_1, window_bounds = array<i64: 1, 128, 128>}, {transform_indices = @transform_2, window_bounds = array<i64: 1, 16, 128>}, {pipeline_mode = #tpu.pipeline_mode<synchronous>, transform_indices = @transform_3, window_bounds = array<i64: 128, 32>}, {pipeline_mode = #tpu.pipeline_mode<synchronous>, transform_indices = @transform_4, window_bounds = array<i64: 3, 384, 32>}, {pipeline_mode = #tpu.pipeline_mode<synchronous>, transform_indices = @transform_5, window_bounds = array<i64: 32, 128>}, {pipeline_mode = #tpu.pipeline_mode<synchronous>, transform_indices = @transform_6, window_bounds = array<i64: 1, 32>}, {pipeline_mode = #tpu.pipeline_mode<synchronous>, transform_indices = @transform_7, window_bounds = array<i64: 1, 32>}, {pipeline_mode = #tpu.pipeline_mode<synchronous>, transform_indices = @transform_8, window_bounds = array<i64: 1, 128>}, {transform_indices = @transform_9, window_bounds = array<i64: 1, 128, 128>}]} {
    %c0 = arith.constant 0 : index
    %c0_0 = arith.constant 0 : index
    %c0_1 = arith.constant 0 : index
    %0 = vector.load %arg2[%c0, %c0_0, %c0_1] : memref<1x16x128xbf16, #tpu.memory_space<vmem>>, vector<1x16x128xbf16>
    %1 = vector.shape_cast %0 : vector<1x16x128xbf16> to vector<16x128xbf16>
    %c0_2 = arith.constant 0 : index
    %c0_3 = arith.constant 0 : index
    %c0_4 = arith.constant 0 : index
    %2 = vector.load %arg3[%c0_2, %c0_3, %c0_4] : memref<1x128x128xbf16, #tpu.memory_space<vmem>>, vector<1x128x128xbf16>
    %3 = vector.shape_cast %2 : vector<1x128x128xbf16> to vector<128x128xbf16>
    %c0_5 = arith.constant 0 : index
    %c0_6 = arith.constant 0 : index
    %c0_7 = arith.constant 0 : index
    %4 = vector.load %arg4[%c0_5, %c0_6, %c0_7] : memref<1x16x128xbf16, #tpu.memory_space<vmem>>, vector<1x16x128xbf16>
    %5 = vector.shape_cast %4 : vector<1x16x128xbf16> to vector<16x128xbf16>
    %6 = tpu.concatenate %1, %3, %5 in 0 : vector<16x128xbf16>, vector<128x128xbf16>, vector<16x128xbf16> -> vector<160x128xbf16>
    %c0_8 = arith.constant 0 : index
    %c0_9 = arith.constant 0 : index
    %7 = vector.load %arg5[%c0_8, %c0_9] : memref<128x32xbf16, #tpu.memory_space<vmem>>, vector<128x32xbf16>
    %cst = arith.constant dense<0.000000e+00> : vector<160x32xf32>
    %8 = tpu.matmul %6, %7, %cst {dimension_numbers = #tpu.dot_dimension_numbers<[1], [0], [0], [1], [0, 0, 1, 1], [], []>} : vector<160x128xbf16>, vector<128x32xbf16>, vector<160x32xf32> -> vector<160x32xf32>
    %c0_10 = arith.constant 0 : index
    %c0_11 = arith.constant 0 : index
    %9 = vector.load %arg8[%c0_10, %c0_11] : memref<1x32xf32, #tpu.memory_space<vmem>>, vector<1x32xf32>
    %10 = vector.broadcast %9 : vector<1x32xf32> to vector<160x32xf32>
    %11 = arith.addf %8, %10 : vector<160x32xf32>
    %cst_12 = arith.constant 0.000000e+00 : f32
    %12 = vector.broadcast %cst_12 : f32 to vector<160x32xf32>
    %13 = arith.maximumf %11, %12 : vector<160x32xf32>
    %14 = tpu.iota {dimensions = array<i32: 0>} : vector<160x1xi32>
    %c16_i32 = arith.constant 16 : i32
    %15 = vector.broadcast %c16_i32 : i32 to vector<160x1xi32>
    %16 = arith.cmpi sge, %14, %15 : vector<160x1xi32>
    %c0_i32 = arith.constant 0 : i32
    %17 = arith.cmpi sgt, %arg1, %c0_i32 : i32
    %18 = vector.broadcast %17 : i1 to vector<160x1xi1>
    %19 = arith.ori %16, %18 : vector<160x1xi1>
    %c144_i32 = arith.constant 144 : i32
    %20 = vector.broadcast %c144_i32 : i32 to vector<160x1xi32>
    %21 = arith.cmpi slt, %14, %20 : vector<160x1xi32>
    %c1_i32 = arith.constant 1 : i32
    %22 = arith.cmpi slt, %arg1, %c1_i32 : i32
    %23 = vector.broadcast %22 : i1 to vector<160x1xi1>
    %24 = arith.ori %21, %23 : vector<160x1xi1>
    %25 = arith.andi %19, %24 : vector<160x1xi1>
    %cst_13 = arith.constant 0.000000e+00 : f32
    %26 = vector.shape_cast %25 : vector<160x1xi1> to vector<160x1xi1>
    %27 = vector.broadcast %26 : vector<160x1xi1> to vector<160x32xi1>
    %28 = vector.broadcast %cst_13 : f32 to vector<160x32xf32>
    %29 = arith.select %27, %13, %28 : vector<160x32xi1>, vector<160x32xf32>
    %30 = tpu.iota {dimensions = array<i32: 0>} : vector<160x1xi32>
    %c16_i32_14 = arith.constant 16 : i32
    %c0_i32_15 = arith.constant 0 : i32
    %31 = arith.cmpi eq, %c16_i32_14, %c0_i32_15 : i32
    %c1_i32_16 = arith.constant 1 : i32
    %32 = arith.select %31, %c1_i32_16, %c16_i32_14 : i32
    %33 = vector.broadcast %32 : i32 to vector<160x1xi32>
    %34 = arith.remsi %30, %33 : vector<160x1xi32>
    %c0_i32_17 = arith.constant 0 : i32
    %35 = vector.broadcast %c0_i32_17 : i32 to vector<160x1xi32>
    %36 = arith.cmpi ne, %34, %35 : vector<160x1xi32>
    %c0_i32_18 = arith.constant 0 : i32
    %37 = vector.broadcast %c0_i32_18 : i32 to vector<160x1xi32>
    %38 = arith.cmpi slt, %34, %37 : vector<160x1xi32>
    %c0_i32_19 = arith.constant 0 : i32
    %39 = arith.cmpi slt, %32, %c0_i32_19 : i32
    %40 = vector.broadcast %39 : i1 to vector<160x1xi1>
    %41 = vector.broadcast %40 : vector<160x1xi1> to vector<160x1xi1>
    %42 = arith.xori %38, %41 : vector<160x1xi1>
    %43 = arith.andi %42, %36 : vector<160x1xi1>
    %44 = vector.broadcast %32 : i32 to vector<160x1xi32>
    %45 = arith.addi %34, %44 : vector<160x1xi32>
    %46 = arith.select %43, %45, %34 : vector<160x1xi1>, vector<160x1xi32>
    %cst_20 = arith.constant 0.000000e+00 : bf16
    %47 = vector.broadcast %cst_20 : bf16 to vector<160x96xbf16>
    %c1_i32_21 = arith.constant 1 : i32
    %48 = tpu.dynamic_rotate %29 by %c1_i32_21 dim 0 : vector<160x32xf32>, i32 -> vector<160x32xf32>
    %c-1_i32 = arith.constant -1 : i32
    %49 = vector.broadcast %c-1_i32 : i32 to vector<160x1xi32>
    %50 = arith.addi %46, %49 : vector<160x1xi32>
    %c0_i32_22 = arith.constant 0 : i32
    %51 = vector.broadcast %c0_i32_22 : i32 to vector<160x1xi32>
    %52 = arith.cmpi sge, %50, %51 : vector<160x1xi32>
    %c-1_i32_23 = arith.constant -1 : i32
    %53 = vector.broadcast %c-1_i32_23 : i32 to vector<160x1xi32>
    %54 = arith.addi %46, %53 : vector<160x1xi32>
    %c15_i32 = arith.constant 15 : i32
    %55 = vector.broadcast %c15_i32 : i32 to vector<160x1xi32>
    %56 = arith.cmpi sle, %54, %55 : vector<160x1xi32>
    %57 = arith.andi %52, %56 : vector<160x1xi1>
    %cst_24 = arith.constant 0.000000e+00 : f32
    %58 = vector.shape_cast %57 : vector<160x1xi1> to vector<160x1xi1>
    %59 = vector.broadcast %58 : vector<160x1xi1> to vector<160x32xi1>
    %60 = vector.broadcast %cst_24 : f32 to vector<160x32xf32>
    %61 = arith.select %59, %48, %60 : vector<160x32xi1>, vector<160x32xf32>
    %62 = arith.truncf %61 : vector<160x32xf32> to vector<160x32xbf16>
    %63 = tpu.concatenate %62, %47 in 1 : vector<160x32xbf16>, vector<160x96xbf16> -> vector<160x128xbf16>
    %c0_25 = arith.constant 0 : index
    %c0_26 = arith.constant 0 : index
    %64 = vector.load %arg12[%c0_25, %c0_26] : memref<160x384xbf16, #tpu.memory_space<vmem>>, vector<160x128xbf16>
    tpu.vector_store %arg12[%c0_25, %c0_26], %63 {strides = array<i32>} : memref<160x384xbf16, #tpu.memory_space<vmem>>, vector<160x128xbf16>,
    %65 = arith.truncf %29 : vector<160x32xf32> to vector<160x32xbf16>
    %66 = tpu.concatenate %65, %47 in 1 : vector<160x32xbf16>, vector<160x96xbf16> -> vector<160x128xbf16>
    %c0_27 = arith.constant 0 : index
    %c128 = arith.constant 128 : index
    %67 = vector.load %arg12[%c0_27, %c128] : memref<160x384xbf16, #tpu.memory_space<vmem>>, vector<160x128xbf16>
    tpu.vector_store %arg12[%c0_27, %c128], %66 {strides = array<i32>} : memref<160x384xbf16, #tpu.memory_space<vmem>>, vector<160x128xbf16>,
    %c159_i32 = arith.constant 159 : i32
    %68 = tpu.dynamic_rotate %29 by %c159_i32 dim 0 : vector<160x32xf32>, i32 -> vector<160x32xf32>
    %c1_i32_28 = arith.constant 1 : i32
    %69 = vector.broadcast %c1_i32_28 : i32 to vector<160x1xi32>
    %70 = arith.addi %46, %69 : vector<160x1xi32>
    %c0_i32_29 = arith.constant 0 : i32
    %71 = vector.broadcast %c0_i32_29 : i32 to vector<160x1xi32>
    %72 = arith.cmpi sge, %70, %71 : vector<160x1xi32>
    %c1_i32_30 = arith.constant 1 : i32
    %73 = vector.broadcast %c1_i32_30 : i32 to vector<160x1xi32>
    %74 = arith.addi %46, %73 : vector<160x1xi32>
    %c15_i32_31 = arith.constant 15 : i32
    %75 = vector.broadcast %c15_i32_31 : i32 to vector<160x1xi32>
    %76 = arith.cmpi sle, %74, %75 : vector<160x1xi32>
    %77 = arith.andi %72, %76 : vector<160x1xi1>
    %cst_32 = arith.constant 0.000000e+00 : f32
    %78 = vector.shape_cast %77 : vector<160x1xi1> to vector<160x1xi1>
    %79 = vector.broadcast %78 : vector<160x1xi1> to vector<160x32xi1>
    %80 = vector.broadcast %cst_32 : f32 to vector<160x32xf32>
    %81 = arith.select %79, %68, %80 : vector<160x32xi1>, vector<160x32xf32>
    %82 = arith.truncf %81 : vector<160x32xf32> to vector<160x32xbf16>
    %83 = tpu.concatenate %82, %47 in 1 : vector<160x32xbf16>, vector<160x96xbf16> -> vector<160x128xbf16>
    %c0_33 = arith.constant 0 : index
    %c256 = arith.constant 256 : index
    %84 = vector.load %arg12[%c0_33, %c256] : memref<160x384xbf16, #tpu.memory_space<vmem>>, vector<160x128xbf16>
    tpu.vector_store %arg12[%c0_33, %c256], %83 {strides = array<i32>} : memref<160x384xbf16, #tpu.memory_space<vmem>>, vector<160x128xbf16>,
    %c0_34 = arith.constant 0 : index
    %c0_35 = arith.constant 0 : index
    %85 = vector.load %arg12[%c0_34, %c0_35] : memref<160x384xbf16, #tpu.memory_space<vmem>>, vector<128x384xbf16>
    %c0_36 = arith.constant 0 : index
    %c0_37 = arith.constant 0 : index
    %c0_38 = arith.constant 0 : index
    %86 = vector.load %arg6[%c0_36, %c0_37, %c0_38] : memref<3x384x32xbf16, #tpu.memory_space<vmem>>, vector<1x384x32xbf16>
    %87 = vector.shape_cast %86 : vector<1x384x32xbf16> to vector<384x32xbf16>
    %cst_39 = arith.constant dense<0.000000e+00> : vector<128x32xf32>
    %88 = tpu.matmul %85, %87, %cst_39 {dimension_numbers = #tpu.dot_dimension_numbers<[1], [0], [0], [1], [0, 0, 1, 1], [], []>} : vector<128x384xbf16>, vector<384x32xbf16>, vector<128x32xf32> -> vector<128x32xf32>
    %c16 = arith.constant 16 : index
    %c0_40 = arith.constant 0 : index
    %89 = vector.load %arg12[%c16, %c0_40] : memref<160x384xbf16, #tpu.memory_space<vmem>>, vector<128x384xbf16>
    %c1 = arith.constant 1 : index
    %c0_41 = arith.constant 0 : index
    %c0_42 = arith.constant 0 : index
    %90 = vector.load %arg6[%c1, %c0_41, %c0_42] : memref<3x384x32xbf16, #tpu.memory_space<vmem>>, vector<1x384x32xbf16>
    %91 = vector.shape_cast %90 : vector<1x384x32xbf16> to vector<384x32xbf16>
    %cst_43 = arith.constant dense<0.000000e+00> : vector<128x32xf32>
    %92 = tpu.matmul %89, %91, %cst_43 {dimension_numbers = #tpu.dot_dimension_numbers<[1], [0], [0], [1], [0, 0, 1, 1], [], []>} : vector<128x384xbf16>, vector<384x32xbf16>, vector<128x32xf32> -> vector<128x32xf32>
    %93 = arith.addf %88, %92 : vector<128x32xf32>
    %c32 = arith.constant 32 : index
    %c0_44 = arith.constant 0 : index
    %94 = vector.load %arg12[%c32, %c0_44] : memref<160x384xbf16, #tpu.memory_space<vmem>>, vector<128x384xbf16>
    %c2 = arith.constant 2 : index
    %c0_45 = arith.constant 0 : index
    %c0_46 = arith.constant 0 : index
    %95 = vector.load %arg6[%c2, %c0_45, %c0_46] : memref<3x384x32xbf16, #tpu.memory_space<vmem>>, vector<1x384x32xbf16>
    %96 = vector.shape_cast %95 : vector<1x384x32xbf16> to vector<384x32xbf16>
    %cst_47 = arith.constant dense<0.000000e+00> : vector<128x32xf32>
    %97 = tpu.matmul %94, %96, %cst_47 {dimension_numbers = #tpu.dot_dimension_numbers<[1], [0], [0], [1], [0, 0, 1, 1], [], []>} : vector<128x384xbf16>, vector<384x32xbf16>, vector<128x32xf32> -> vector<128x32xf32>
    %98 = arith.addf %93, %97 : vector<128x32xf32>
    %c0_48 = arith.constant 0 : index
    %c0_49 = arith.constant 0 : index
    %99 = vector.load %arg9[%c0_48, %c0_49] : memref<1x32xf32, #tpu.memory_space<vmem>>, vector<1x32xf32>
    %100 = vector.broadcast %99 : vector<1x32xf32> to vector<128x32xf32>
    %101 = arith.addf %98, %100 : vector<128x32xf32>
    %cst_50 = arith.constant 0.000000e+00 : f32
    %102 = vector.broadcast %cst_50 : f32 to vector<128x32xf32>
    %103 = arith.maximumf %101, %102 : vector<128x32xf32>
    %104 = arith.truncf %103 : vector<128x32xf32> to vector<128x32xbf16>
    %c0_51 = arith.constant 0 : index
    %c0_52 = arith.constant 0 : index
    %105 = vector.load %arg7[%c0_51, %c0_52] : memref<32x128xbf16, #tpu.memory_space<vmem>>, vector<32x128xbf16>
    %cst_53 = arith.constant dense<0.000000e+00> : vector<128x128xf32>
    %106 = tpu.matmul %104, %105, %cst_53 {dimension_numbers = #tpu.dot_dimension_numbers<[1], [0], [0], [1], [0, 0, 1, 1], [], []>} : vector<128x32xbf16>, vector<32x128xbf16>, vector<128x128xf32> -> vector<128x128xf32>
    %c0_54 = arith.constant 0 : index
    %c0_55 = arith.constant 0 : index
    %107 = vector.load %arg10[%c0_54, %c0_55] : memref<1x128xf32, #tpu.memory_space<vmem>>, vector<1x128xf32>
    %108 = vector.broadcast %107 : vector<1x128xf32> to vector<128x128xf32>
    %109 = arith.addf %106, %108 : vector<128x128xf32>
    %c0_56 = arith.constant 0 : index
    %c0_57 = arith.constant 0 : index
    %c0_58 = arith.constant 0 : index
    %110 = vector.load %arg3[%c0_56, %c0_57, %c0_58] : memref<1x128x128xbf16, #tpu.memory_space<vmem>>, vector<1x128x128xbf16>
    %111 = vector.shape_cast %110 : vector<1x128x128xbf16> to vector<128x128xbf16>
    %112 = arith.extf %111 : vector<128x128xbf16> to vector<128x128xf32>
    %113 = arith.addf %109, %112 : vector<128x128xf32>
    %cst_59 = arith.constant 0.000000e+00 : f32
    %114 = vector.broadcast %cst_59 : f32 to vector<128x128xf32>
    %115 = arith.maximumf %113, %114 : vector<128x128xf32>
    %116 = arith.truncf %115 : vector<128x128xf32> to vector<128x128xbf16>
    %c0_60 = arith.constant 0 : index
    %c0_61 = arith.constant 0 : index
    %c0_62 = arith.constant 0 : index
    %117 = vector.load %arg11[%c0_60, %c0_61, %c0_62] : memref<1x128x128xbf16, #tpu.memory_space<vmem>>, vector<1x128x128xbf16>
    %118 = vector.shape_cast %117 : vector<1x128x128xbf16> to vector<128x128xbf16>
    %119 = vector.shape_cast %116 : vector<128x128xbf16> to vector<1x128x128xbf16>
    tpu.vector_store %arg11[%c0_60, %c0_61, %c0_62], %119 {strides = array<i32>} : memref<1x128x128xbf16, #tpu.memory_space<vmem>>, vector<1x128x128xbf16>,
    return
  }
  func.func @transform_0(%arg0: i32, %arg1: i32) -> (i32, i32, i32) {
    %c8_i32 = arith.constant 8 : i32
    %0 = arith.muli %arg1, %c8_i32 : i32
    %c1_i32 = arith.constant 1 : i32
    %1 = arith.subi %0, %c1_i32 : i32
    %c0_i32 = arith.constant 0 : i32
    %2 = arith.maxsi %1, %c0_i32 : i32
    %c0_i32_0 = arith.constant 0 : i32
    %c0_i32_1 = arith.constant 0 : i32
    return %arg0, %2, %c0_i32_0 : i32, i32, i32
  }
  func.func @transform_1(%arg0: i32, %arg1: i32) -> (i32, i32, i32) {
    %c0_i32 = arith.constant 0 : i32
    %c0_i32_0 = arith.constant 0 : i32
    return %arg0, %arg1, %c0_i32 : i32, i32, i32
  }
  func.func @transform_2(%arg0: i32, %arg1: i32) -> (i32, i32, i32) {
    %c8_i32 = arith.constant 8 : i32
    %0 = arith.muli %arg1, %c8_i32 : i32
    %c8_i32_0 = arith.constant 8 : i32
    %1 = arith.addi %0, %c8_i32_0 : i32
    %c15_i32 = arith.constant 15 : i32
    %2 = arith.minsi %1, %c15_i32 : i32
    %c0_i32 = arith.constant 0 : i32
    %c0_i32_1 = arith.constant 0 : i32
    return %arg0, %2, %c0_i32 : i32, i32, i32
  }
  func.func @transform_3(%arg0: i32, %arg1: i32) -> (i32, i32) {
    %c0_i32 = arith.constant 0 : i32
    %c0_i32_0 = arith.constant 0 : i32
    %c0_i32_1 = arith.constant 0 : i32
    return %c0_i32, %c0_i32_0 : i32, i32
  }
  func.func @transform_4(%arg0: i32, %arg1: i32) -> (i32, i32, i32) {
    %c0_i32 = arith.constant 0 : i32
    %c0_i32_0 = arith.constant 0 : i32
    %c0_i32_1 = arith.constant 0 : i32
    %c0_i32_2 = arith.constant 0 : i32
    return %c0_i32, %c0_i32_0, %c0_i32_1 : i32, i32, i32
  }
  func.func @transform_5(%arg0: i32, %arg1: i32) -> (i32, i32) {
    %c0_i32 = arith.constant 0 : i32
    %c0_i32_0 = arith.constant 0 : i32
    %c0_i32_1 = arith.constant 0 : i32
    return %c0_i32, %c0_i32_0 : i32, i32
  }
  func.func @transform_6(%arg0: i32, %arg1: i32) -> (i32, i32) {
    %c0_i32 = arith.constant 0 : i32
    %c0_i32_0 = arith.constant 0 : i32
    %c0_i32_1 = arith.constant 0 : i32
    return %c0_i32, %c0_i32_0 : i32, i32
  }
  func.func @transform_7(%arg0: i32, %arg1: i32) -> (i32, i32) {
    %c0_i32 = arith.constant 0 : i32
    %c0_i32_0 = arith.constant 0 : i32
    %c0_i32_1 = arith.constant 0 : i32
    return %c0_i32, %c0_i32_0 : i32, i32
  }
  func.func @transform_8(%arg0: i32, %arg1: i32) -> (i32, i32) {
    %c0_i32 = arith.constant 0 : i32
    %c0_i32_0 = arith.constant 0 : i32
    %c0_i32_1 = arith.constant 0 : i32
    return %c0_i32, %c0_i32_0 : i32, i32
  }
  func.func @transform_9(%arg0: i32, %arg1: i32) -> (i32, i32, i32) {
    %c0_i32 = arith.constant 0 : i32
    %c0_i32_0 = arith.constant 0 : i32
    return %arg0, %arg1, %c0_i32 : i32, i32, i32
  }
}

</mosaic_0001>

<llo_original>
// kernel: tpu_custom_call.1
$region0: #{tpu_custom_call.1}
  #allocation0 [shape = 'u32[]', space=smem, size = 0x4, offset = 0x4, fixed_abs, tag = 'smem constant byte address 0x4 - core index']
  #allocation1 [shape = 'u32[144,128]{1,0:T(1,128)}', space=vmem, size = 0x12000, scoped, tag = 'internal scratch']
  #allocation2 [shape = 'bf16[160,384]{1,0:T(8,128)(2,1)}', space=vmem, size = 0x1e000, scoped, tag = 'scratch operand']
  %s0 = inlined_call_operand.vmem [shape: bf16[2,256,128], index: 0, kind: input, shape index: {}]
  %s1 = inlined_call_operand.vmem [shape: bf16[2,256,128], index: 1, kind: input, shape index: {}]
  %s2 = inlined_call_operand.vmem [shape: bf16[2,256,128], index: 2, kind: input, shape index: {}]
  %s3 = inlined_call_operand.vmem [shape: bf16[128,32], index: 3, kind: input, shape index: {}]
  %s4 = inlined_call_operand.vmem [shape: bf16[3,384,32], index: 4, kind: input, shape index: {}]
  %s5 = inlined_call_operand.vmem [shape: bf16[32,128], index: 5, kind: input, shape index: {}]
  %s6 = inlined_call_operand.vmem [shape: f32[1,32], index: 6, kind: input, shape index: {}]
  %s7 = inlined_call_operand.vmem [shape: f32[1,32], index: 7, kind: input, shape index: {}]
  %s8 = inlined_call_operand.vmem [shape: f32[1,128], index: 8, kind: input, shape index: {}]
  %s9 = inlined_call_operand.hbm [shape: bf16[2,256,128], index: 9, kind: output, shape index: {}]
  %s10 = sld [smem:[#allocation0]]
  $region69: #{tpu_custom_call.1} parent=0
    _
  %s12 = ssub.s32 1, %s10
  %s13 = scalar_select 0, %s12, %s10
  $region1: #{tpu_custom_call.1} parent=0
    #allocation3 [shape = 'u8[65536]{0}', space=vmem, size = 0x10000, scoped, tag = 'output window, operand 0']
    #allocation4 [shape = 's32[2]{0}', space=sflag, size = 0x8, scoped, tag = 'scoped memory for tpu_custom_call.1']
    %14 = vsyncpa [#allocation4], 0
    %s15 = scalar_lea.sflag [#allocation4], 1
    %16 = vsyncpa %s15, 0
    loop: start=0, step=1, limit=6
    $region2: #{tpu_custom_call.1} parent=1 // loop_pre_header
      _
    $region3: #{tpu_custom_call.1} parent=1 // loop_header
      %s18 = sphi 0, %s22
      %p19 = scmp.ge.s32.totalorder %s18, 6
      %s25 = sphi 0, %s37
      %s26 = sphi 0, %s33
      %s27 = sphi 0, %s25
      %s28 = sphi 0, %s26
      %s29 = sphi 0, %s27
      %s30 = sphi 0, %s28
      %s50 = sphi 0, %s52
      %s53 = sphi 0, %s50
      %s54 = sphi 0, %s53
      %s70 = sphi 0, %s54
      %s78 = sphi 0, %s80
      %s81 = sphi 0, %s78
      %s82 = sphi 0, %s81
      %s98 = sphi 0, %s82
      %s114 = sphi 0, %s116
      %s117 = sphi 0, %s114
      %s118 = sphi 0, %s117
      %s134 = sphi 0, %s118
      %s138 = sphi 0, %s138
      %s140 = sphi 0, %s138
      %s141 = sphi 0, %s140
      %s155 = sphi 0, %s141
      %s159 = sphi 0, %s159
      %s161 = sphi 0, %s159
      %s162 = sphi 0, %s161
      %s176 = sphi 0, %s162
      %s180 = sphi 0, %s180
      %s182 = sphi 0, %s180
      %s183 = sphi 0, %s182
      %s197 = sphi 0, %s183
      %s201 = sphi 0, %s201
      %s203 = sphi 0, %s201
      %s204 = sphi 0, %s203
      %s218 = sphi 0, %s204
      %s222 = sphi 0, %s222
      %s224 = sphi 0, %s222
      %s225 = sphi 0, %s224
      %s239 = sphi 0, %s225
      %s243 = sphi 0, %s243
      %s245 = sphi 0, %s243
      %s246 = sphi 0, %s245
      %s260 = sphi 0, %s246
      %s268 = sphi 0, %s270
      %s271 = sphi 0, %s268
      %s272 = sphi 0, %s271
      %s288 = sphi 0, %s272
    $region4: #{tpu_custom_call.1} parent=1 // loop_header_branch
      %21 = sbr.rel (%p19) target = $region8
    $region5: #{tpu_custom_call.1} parent=1 // loop_body
      %s23 = ssub.s32 %s18, 1
      %s24 = ssub.s32 %s18, 2
      %s31 = sadd.s32 1, %s26
      %p32 = scmp.ge.s32.totalorder %s31, 2
      %s33 = scalar_select %p32, 0, %s31
      %s34 = sadd.s32 1, %s25
      %s35 = scalar_select %p32, %s34, %s25
      %p36 = scmp.ge.s32.totalorder %s35, 2
      %s37 = scalar_select %p36, 0, %s35
      %s38 = smul.u32 %s26, 8
      %s39 = ssub.s32 %s38, 1
      %p40 = scmp.gt.s32.totalorder %s39, 0
      %s41 = scalar_select %p40, %s39, 0
      %s42 = smul.u32 %s33, 8
      %s43 = ssub.s32 %s42, 1
      %p44 = scmp.gt.s32.totalorder %s43, 0
      %s45 = scalar_select %p44, %s43, 0
      %s46 = ssub.s32 %s25, %s37
      %s47 = ssub.s32 %s41, %s45
      %s48 = sor.u32 %s46, %s47
      %p49 = scmp.eq.s32.totalorder %s48, 0
      %s51 = sadd.s32 %s50, 1
      %s52 = scalar_select %p49, %s50, %s51
      %p55 = pneg %p49
      %p56 = scmp.eq.s32.totalorder %s18, 3
      %p57 = por %p55, %p56
      %p58 = scmp.ne.s32.totalorder %s50, %s53
      %p59 = scmp.eq.s32.totalorder %s18, 0
      %p60 = por %p58, %p59
      %p61 = scmp.ne.s32.totalorder %s50, %s53
      %p62 = scmp.eq.s32.totalorder %s23, 3
      %p63 = por %p61, %p62
      %p64 = scmp.ne.s32.totalorder %s53, %s54
      %p65 = scmp.eq.s32.totalorder %s23, 0
      %p66 = por %p64, %p65
      %p67 = scmp.ne.s32.totalorder %s53, %s54
      %p68 = scmp.eq.s32.totalorder %s24, 3
      %p69 = por %p67, %p68
      %p71 = scmp.ne.s32.totalorder %s54, %s70
      %p72 = scmp.eq.s32.totalorder %s24, 0
      %p73 = por %p71, %p72
      %s74 = ssub.s32 %s25, %s37
      %s75 = ssub.s32 %s26, %s33
      %s76 = sor.u32 %s74, %s75
      %p77 = scmp.eq.s32.totalorder %s76, 0
      %s79 = sadd.s32 %s78, 1
      %s80 = scalar_select %p77, %s78, %s79
      %p83 = pneg %p77
      %p84 = scmp.eq.s32.totalorder %s18, 3
      %p85 = por %p83, %p84
      %p86 = scmp.ne.s32.totalorder %s78, %s81
      %p87 = scmp.eq.s32.totalorder %s18, 0
      %p88 = por %p86, %p87
      %p89 = scmp.ne.s32.totalorder %s78, %s81
      %p90 = scmp.eq.s32.totalorder %s23, 3
      %p91 = por %p89, %p90
      %p92 = scmp.ne.s32.totalorder %s81, %s82
      %p93 = scmp.eq.s32.totalorder %s23, 0
      %p94 = por %p92, %p93
      %p95 = scmp.ne.s32.totalorder %s81, %s82
      %p96 = scmp.eq.s32.totalorder %s24, 3
      %p97 = por %p95, %p96
      %p99 = scmp.ne.s32.totalorder %s82, %s98
      %p100 = scmp.eq.s32.totalorder %s24, 0
      %p101 = por %p99, %p100
      %s102 = smul.u32 %s26, 8
      %s103 = sadd.s32 %s102, 8
      %p104 = scmp.lt.s32.totalorder %s103, 15
      %s105 = scalar_select %p104, %s103, 15
      %s106 = smul.u32 %s33, 8
      %s107 = sadd.s32 %s106, 8
      %p108 = scmp.lt.s32.totalorder %s107, 15
      %s109 = scalar_select %p108, %s107, 15
      %s110 = ssub.s32 %s25, %s37
      %s111 = ssub.s32 %s105, %s109
      %s112 = sor.u32 %s110, %s111
      %p113 = scmp.eq.s32.totalorder %s112, 0
      %s115 = sadd.s32 %s114, 1
      %s116 = scalar_select %p113, %s114, %s115
      %p119 = pneg %p113
      %p120 = scmp.eq.s32.totalorder %s18, 3
      %p121 = por %p119, %p120
      %p122 = scmp.ne.s32.totalorder %s114, %s117
      %p123 = scmp.eq.s32.totalorder %s18, 0
      %p124 = por %p122, %p123
      %p125 = scmp.ne.s32.totalorder %s114, %s117
      %p126 = scmp.eq.s32.totalorder %s23, 3
      %p127 = por %p125, %p126
      %p128 = scmp.ne.s32.totalorder %s117, %s118
      %p129 = scmp.eq.s32.totalorder %s23, 0
      %p130 = por %p128, %p129
      %p131 = scmp.ne.s32.totalorder %s117, %s118
      %p132 = scmp.eq.s32.totalorder %s24, 3
      %p133 = por %p131, %p132
      %p135 = scmp.ne.s32.totalorder %s118, %s134
      %p136 = scmp.eq.s32.totalorder %s24, 0
      %p137 = por %p135, %p136
      %s139 = sadd.s32 %s138, 1
      %p142 = scmp.eq.s32.totalorder %s18, 3
      %p143 = scmp.ne.s32.totalorder %s138, %s140
      %p144 = scmp.eq.s32.totalorder %s18, 0
      %p145 = por %p143, %p144
      %p146 = scmp.ne.s32.totalorder %s138, %s140
      %p147 = scmp.eq.s32.totalorder %s23, 3
      %p148 = por %p146, %p147
      %p149 = scmp.ne.s32.totalorder %s140, %s141
      %p150 = scmp.eq.s32.totalorder %s23, 0
      %p151 = por %p149, %p150
      %p152 = scmp.ne.s32.totalorder %s140, %s141
      %p153 = scmp.eq.s32.totalorder %s24, 3
      %p154 = por %p152, %p153
      %p156 = scmp.ne.s32.totalorder %s141, %s155
      %p157 = scmp.eq.s32.totalorder %s24, 0
      %p158 = por %p156, %p157
      %s160 = sadd.s32 %s159, 1
      %p163 = scmp.eq.s32.totalorder %s18, 3
      %p164 = scmp.ne.s32.totalorder %s159, %s161
      %p165 = scmp.eq.s32.totalorder %s18, 0
      %p166 = por %p164, %p165
      %p167 = scmp.ne.s32.totalorder %s159, %s161
      %p168 = scmp.eq.s32.totalorder %s23, 3
      %p169 = por %p167, %p168
      %p170 = scmp.ne.s32.totalorder %s161, %s162
      %p171 = scmp.eq.s32.totalorder %s23, 0
      %p172 = por %p170, %p171
      %p173 = scmp.ne.s32.totalorder %s161, %s162
      %p174 = scmp.eq.s32.totalorder %s24, 3
      %p175 = por %p173, %p174
      %p177 = scmp.ne.s32.totalorder %s162, %s176
      %p178 = scmp.eq.s32.totalorder %s24, 0
      %p179 = por %p177, %p178
      %s181 = sadd.s32 %s180, 1
      %p184 = scmp.eq.s32.totalorder %s18, 3
      %p185 = scmp.ne.s32.totalorder %s180, %s182
      %p186 = scmp.eq.s32.totalorder %s18, 0
      %p187 = por %p185, %p186
      %p188 = scmp.ne.s32.totalorder %s180, %s182
      %p189 = scmp.eq.s32.totalorder %s23, 3
      %p190 = por %p188, %p189
      %p191 = scmp.ne.s32.totalorder %s182, %s183
      %p192 = scmp.eq.s32.totalorder %s23, 0
      %p193 = por %p191, %p192
      %p194 = scmp.ne.s32.totalorder %s182, %s183
      %p195 = scmp.eq.s32.totalorder %s24, 3
      %p196 = por %p194, %p195
      %p198 = scmp.ne.s32.totalorder %s183, %s197
      %p199 = scmp.eq.s32.totalorder %s24, 0
      %p200 = por %p198, %p199
      %s202 = sadd.s32 %s201, 1
      %p205 = scmp.eq.s32.totalorder %s18, 3
      %p206 = scmp.ne.s32.totalorder %s201, %s203
      %p207 = scmp.eq.s32.totalorder %s18, 0
      %p208 = por %p206, %p207
      %p209 = scmp.ne.s32.totalorder %s201, %s203
      %p210 = scmp.eq.s32.totalorder %s23, 3
      %p211 = por %p209, %p210
      %p212 = scmp.ne.s32.totalorder %s203, %s204
      %p213 = scmp.eq.s32.totalorder %s23, 0
      %p214 = por %p212, %p213
      %p215 = scmp.ne.s32.totalorder %s203, %s204
      %p216 = scmp.eq.s32.totalorder %s24, 3
      %p217 = por %p215, %p216
      %p219 = scmp.ne.s32.totalorder %s204, %s218
      %p220 = scmp.eq.s32.totalorder %s24, 0
      %p221 = por %p219, %p220
      %s223 = sadd.s32 %s222, 1
      %p226 = scmp.eq.s32.totalorder %s18, 3
      %p227 = scmp.ne.s32.totalorder %s222, %s224
      %p228 = scmp.eq.s32.totalorder %s18, 0
      %p229 = por %p227, %p228
      %p230 = scmp.ne.s32.totalorder %s222, %s224
      %p231 = scmp.eq.s32.totalorder %s23, 3
      %p232 = por %p230, %p231
      %p233 = scmp.ne.s32.totalorder %s224, %s225
      %p234 = scmp.eq.s32.totalorder %s23, 0
      %p235 = por %p233, %p234
      %p236 = scmp.ne.s32.totalorder %s224, %s225
      %p237 = scmp.eq.s32.totalorder %s24, 3
      %p238 = por %p236, %p237
      %p240 = scmp.ne.s32.totalorder %s225, %s239
      %p241 = scmp.eq.s32.totalorder %s24, 0
      %p242 = por %p240, %p241
      %s244 = sadd.s32 %s243, 1
      %p247 = scmp.eq.s32.totalorder %s18, 3
      %p248 = scmp.ne.s32.totalorder %s243, %s245
      %p249 = scmp.eq.s32.totalorder %s18, 0
      %p250 = por %p248, %p249
      %p251 = scmp.ne.s32.totalorder %s243, %s245
      %p252 = scmp.eq.s32.totalorder %s23, 3
      %p253 = por %p251, %p252
      %p254 = scmp.ne.s32.totalorder %s245, %s246
      %p255 = scmp.eq.s32.totalorder %s23, 0
      %p256 = por %p254, %p255
      %p257 = scmp.ne.s32.totalorder %s245, %s246
      %p258 = scmp.eq.s32.totalorder %s24, 3
      %p259 = por %p257, %p258
      %p261 = scmp.ne.s32.totalorder %s246, %s260
      %p262 = scmp.eq.s32.totalorder %s24, 0
      %p263 = por %p261, %p262
      %s264 = ssub.s32 %s25, %s37
      %s265 = ssub.s32 %s26, %s33
      %s266 = sor.u32 %s264, %s265
      %p267 = scmp.eq.s32.totalorder %s266, 0
      %s269 = sadd.s32 %s268, 1
      %s270 = scalar_select %p267, %s268, %s269
      %p273 = pneg %p267
      %p274 = scmp.eq.s32.totalorder %s18, 3
      %p275 = por %p273, %p274
      %p276 = scmp.ne.s32.totalorder %s268, %s271
      %p277 = scmp.eq.s32.totalorder %s18, 0
      %p278 = por %p276, %p277
      %p279 = scmp.ne.s32.totalorder %s268, %s271
      %p280 = scmp.eq.s32.totalorder %s23, 3
      %p281 = por %p279, %p280
      %p282 = scmp.ne.s32.totalorder %s271, %s272
      %p283 = scmp.eq.s32.totalorder %s23, 0
      %p284 = por %p282, %p283
      %p285 = scmp.ne.s32.totalorder %s271, %s272
      %p286 = scmp.eq.s32.totalorder %s24, 3
      %p287 = por %p285, %p286
      %p289 = scmp.ne.s32.totalorder %s272, %s288
      %p290 = scmp.eq.s32.totalorder %s24, 0
      %p291 = por %p289, %p290
      %p292 = scmp.le.s32.totalorder 1, %s18
      %p293 = scmp.lt.s32.totalorder %s18, 5
      %p294 = pnand %p292, %p293
      %p295 = pneg %p294
      // Predicated region
      $region9: #{tpu_custom_call.1} parent=5 // pred_check
        _
      $region10: #{tpu_custom_call.1} parent=5 // pred_check_branch
        %297 = sbr.rel (%p294) target = $region12
      $region11: #{tpu_custom_call.1} parent=5 // pred_region
        %s298 = ssub.s32 %s18, 1
        // Predicated region
        $region13: #{tpu_custom_call.1} parent=11 // pred_check
          %p299 = pneg %p151
        $region14: #{tpu_custom_call.1} parent=11 // pred_check_branch
          %301 = sbr.rel (%p299) target = $region16
        $region15: #{tpu_custom_call.1} parent=11 // pred_region
          _
        $region16: #{tpu_custom_call.1} parent=11 // pred_fallthru
          _
        // Predicated region
        $region17: #{tpu_custom_call.1} parent=11 // pred_check
          %p302 = pneg %p172
        $region18: #{tpu_custom_call.1} parent=11 // pred_check_branch
          %304 = sbr.rel (%p302) target = $region20
        $region19: #{tpu_custom_call.1} parent=11 // pred_region
          _
        $region20: #{tpu_custom_call.1} parent=11 // pred_fallthru
          _
        // Predicated region
        $region21: #{tpu_custom_call.1} parent=11 // pred_check
          %p305 = pneg %p193
        $region22: #{tpu_custom_call.1} parent=11 // pred_check_branch
          %307 = sbr.rel (%p305) target = $region24
        $region23: #{tpu_custom_call.1} parent=11 // pred_region
          _
        $region24: #{tpu_custom_call.1} parent=11 // pred_fallthru
          _
        // Predicated region
        $region25: #{tpu_custom_call.1} parent=11 // pred_check
          %p308 = pneg %p214
        $region26: #{tpu_custom_call.1} parent=11 // pred_check_branch
          %310 = sbr.rel (%p308) target = $region28
        $region27: #{tpu_custom_call.1} parent=11 // pred_region
          _
        $region28: #{tpu_custom_call.1} parent=11 // pred_fallthru
          _
        // Predicated region
        $region29: #{tpu_custom_call.1} parent=11 // pred_check
          %p311 = pneg %p235
        $region30: #{tpu_custom_call.1} parent=11 // pred_check_branch
          %313 = sbr.rel (%p311) target = $region32
        $region31: #{tpu_custom_call.1} parent=11 // pred_region
          _
        $region32: #{tpu_custom_call.1} parent=11 // pred_fallthru
          _
        // Predicated region
        $region33: #{tpu_custom_call.1} parent=11 // pred_check
          %p314 = pneg %p256
        $region34: #{tpu_custom_call.1} parent=11 // pred_check_branch
          %316 = sbr.rel (%p314) target = $region36
        $region35: #{tpu_custom_call.1} parent=11 // pred_region
          _
        $region36: #{tpu_custom_call.1} parent=11 // pred_fallthru
          _
      $region12: #{tpu_custom_call.1} parent=5 // pred_fallthru
        _
      %p317 = scmp.lt.s32.totalorder %s18, 4
      // Predicated region
      $region37: #{tpu_custom_call.1} parent=5 // pred_check
        %p318 = pneg %p317
      $region38: #{tpu_custom_call.1} parent=5 // pred_check_branch
        %320 = sbr.rel (%p318) target = $region40
      $region39: #{tpu_custom_call.1} parent=5 // pred_region
        // Predicated region
        $region41: #{tpu_custom_call.1} parent=39 // pred_check
          %p321 = pneg %p60
        $region42: #{tpu_custom_call.1} parent=39 // pred_check_branch
          %323 = sbr.rel (%p321) target = $region44
        $region43: #{tpu_custom_call.1} parent=39 // pred_region
          %s324 = smul.u32 %s26, 8
          %s325 = ssub.s32 %s324, 1
          %p326 = scmp.gt.s32.totalorder %s325, 0
          %s327 = scalar_select %p326, %s325, 0
          %s328 = smul.u32 2, %s327
          %p329 = scmp.lt.s32.totalorder %s25, 1
          %s330 = scalar_select %p329, %s25, 1
          %p331 = scmp.lt.s32.totalorder %s328, 31
          %s332 = scalar_select %p331, %s328, 31
          %s333 = smul.addr %s330, 32
          %s334 = sadd.s32 %s332, %s333
          %s335 = smul.addr %s334, 4
          %s336 = scalar_lea.vmem %s0, %s335
          %s337 = smul.u32 %s26, 8
          %s338 = ssub.s32 %s337, 1
          %p339 = scmp.gt.s32.totalorder %s338, 0
          %s340 = scalar_select %p339, %s338, 0
          %s341 = smul.u32 2, %s340
        $region44: #{tpu_custom_call.1} parent=39 // pred_fallthru
          _
        // Predicated region
        $region45: #{tpu_custom_call.1} parent=39 // pred_check
          %p342 = pneg %p88
        $region46: #{tpu_custom_call.1} parent=39 // pred_check_branch
          %344 = sbr.rel (%p342) target = $region48
        $region47: #{tpu_custom_call.1} parent=39 // pred_region
          %s345 = smul.u32 16, %s26
          %p346 = scmp.lt.s32.totalorder %s25, 1
          %s347 = scalar_select %p346, %s25, 1
          %p348 = scmp.lt.s32.totalorder %s345, 31
          %s349 = scalar_select %p348, %s345, 31
          %s350 = smul.addr %s347, 32
          %s351 = sadd.s32 %s349, %s350
          %s352 = smul.addr %s351, 4
          %s353 = scalar_lea.vmem %s1, %s352
          %s354 = smul.u32 16, %s26
        $region48: #{tpu_custom_call.1} parent=39 // pred_fallthru
          _
        // Predicated region
        $region49: #{tpu_custom_call.1} parent=39 // pred_check
          %p355 = pneg %p124
        $region50: #{tpu_custom_call.1} parent=39 // pred_check_branch
          %357 = sbr.rel (%p355) target = $region52
        $region51: #{tpu_custom_call.1} parent=39 // pred_region
          %s358 = smul.u32 %s26, 8
          %s359 = sadd.s32 %s358, 8
          %p360 = scmp.lt.s32.totalorder %s359, 15
          %s361 = scalar_select %p360, %s359, 15
          %s362 = smul.u32 2, %s361
          %p363 = scmp.lt.s32.totalorder %s25, 1
          %s364 = scalar_select %p363, %s25, 1
          %p365 = scmp.lt.s32.totalorder %s362, 31
          %s366 = scalar_select %p365, %s362, 31
          %s367 = smul.addr %s364, 32
          %s368 = sadd.s32 %s366, %s367
          %s369 = smul.addr %s368, 4
          %s370 = scalar_lea.vmem %s2, %s369
          %s371 = smul.u32 %s26, 8
          %s372 = sadd.s32 %s371, 8
          %p373 = scmp.lt.s32.totalorder %s372, 15
          %s374 = scalar_select %p373, %s372, 15
          %s375 = smul.u32 2, %s374
        $region52: #{tpu_custom_call.1} parent=39 // pred_fallthru
          _
      $region40: #{tpu_custom_call.1} parent=5 // pred_fallthru
        _
      %p376 = scmp.le.s32.totalorder 1, %s18
      %p377 = scmp.lt.s32.totalorder %s18, 5
      %p378 = pnand %p376, %p377
      %p379 = pneg %p378
      // Predicated region
      $region53: #{tpu_custom_call.1} parent=5 // pred_check
        _
      $region54: #{tpu_custom_call.1} parent=5 // pred_check_branch
        %381 = sbr.rel (%p378) target = $region56
      $region55: #{tpu_custom_call.1} parent=5 // pred_region
        %s382 = ssub.s32 %s18, 1
        %s383 = smul.u32 %s28, 8
        %s384 = ssub.s32 %s383, 1
        %p385 = scmp.gt.s32.totalorder %s384, 0
        %s386 = scalar_select %p385, %s384, 0
        %s387 = smul.u32 2, %s386
        %p388 = scmp.lt.s32.totalorder %s27, 1
        %s389 = scalar_select %p388, %s27, 1
        %p390 = scmp.lt.s32.totalorder %s387, 31
        %s391 = scalar_select %p390, %s387, 31
        %s392 = smul.addr %s389, 32
        %s393 = sadd.s32 %s391, %s392
        %s394 = smul.addr %s393, 4
        %s395 = scalar_lea.vmem %s0, %s394
        %p396 = pneg %p66
        %p397 = pneg %p63
        %s398 = smul.u32 16, %s28
        %p399 = scmp.lt.s32.totalorder %s27, 1
        %s400 = scalar_select %p399, %s27, 1
        %p401 = scmp.lt.s32.totalorder %s398, 31
        %s402 = scalar_select %p401, %s398, 31
        %s403 = smul.addr %s400, 32
        %s404 = sadd.s32 %s402, %s403
        %s405 = smul.addr %s404, 4
        %s406 = scalar_lea.vmem %s1, %s405
        %p407 = pneg %p94
        %p408 = pneg %p91
        %s409 = smul.u32 %s28, 8
        %s410 = sadd.s32 %s409, 8
        %p411 = scmp.lt.s32.totalorder %s410, 15
        %s412 = scalar_select %p411, %s410, 15
        %s413 = smul.u32 2, %s412
        %p414 = scmp.lt.s32.totalorder %s27, 1
        %s415 = scalar_select %p414, %s27, 1
        %p416 = scmp.lt.s32.totalorder %s413, 31
        %s417 = scalar_select %p416, %s413, 31
        %s418 = smul.addr %s415, 32
        %s419 = sadd.s32 %s417, %s418
        %s420 = smul.addr %s419, 4
        %s421 = scalar_lea.vmem %s2, %s420
        %p422 = pneg %p130
        %p423 = pneg %p127
        %p424 = pneg %p151
        %p425 = pneg %p148
        %p426 = pneg %p172
        %p427 = pneg %p169
        %p428 = pneg %p193
        %p429 = pneg %p190
        %p430 = pneg %p214
        %p431 = pneg %p211
        %p432 = pneg %p235
        %p433 = pneg %p232
        %p434 = pneg %p256
        %p435 = pneg %p253
        %p436 = pneg %p284
        %p437 = pneg %p281
        %s438 = sand.u32 %s271, 1
        %s439 = scalar_lea.sflag [#allocation4], %s438
        %s440 = sand.u32 %s271, 1
        %s441 = smul.addr %s440, 64
        %s442 = scalar_lea.vmem [#allocation3], %s441
        %s443 = smul.u32 %s28, 8
        %s444 = ssub.s32 %s443, 1
        %p445 = scmp.gt.s32.totalorder %s444, 0
        %s446 = scalar_select %p445, %s444, 0
        %s447 = smul.u32 2, %s446
        %p448 = scmp.lt.s32.totalorder %s27, 1
        %s449 = scalar_select %p448, %s27, 1
        %p450 = scmp.lt.s32.totalorder %s447, 31
        %s451 = scalar_select %p450, %s447, 31
        %s452 = smul.addr %s449, 32
        %s453 = sadd.s32 %s451, %s452
        %s454 = smul.addr %s453, 4
        %s455 = scalar_lea.vmem %s0, %s454
        %s456 = smul.u32 %s28, 8
        %s457 = ssub.s32 %s456, 1
        %p458 = scmp.gt.s32.totalorder %s457, 0
        %s459 = scalar_select %p458, %s457, 0
        %s460 = smul.u32 2, %s459
        %s461 = smul.u32 16, %s28
        %p462 = scmp.lt.s32.totalorder %s27, 1
        %s463 = scalar_select %p462, %s27, 1
        %p464 = scmp.lt.s32.totalorder %s461, 31
        %s465 = scalar_select %p464, %s461, 31
        %s466 = smul.addr %s463, 32
        %s467 = sadd.s32 %s465, %s466
        %s468 = smul.addr %s467, 4
        %s469 = scalar_lea.vmem %s1, %s468
        %s470 = smul.u32 16, %s28
        %s471 = smul.u32 %s28, 8
        %s472 = sadd.s32 %s471, 8
        %p473 = scmp.lt.s32.totalorder %s472, 15
        %s474 = scalar_select %p473, %s472, 15
        %s475 = smul.u32 2, %s474
        %p476 = scmp.lt.s32.totalorder %s27, 1
        %s477 = scalar_select %p476, %s27, 1
        %p478 = scmp.lt.s32.totalorder %s475, 31
        %s479 = scalar_select %p478, %s475, 31
        %s480 = smul.addr %s477, 32
        %s481 = sadd.s32 %s479, %s480
        %s482 = smul.addr %s481, 4
        %s483 = scalar_lea.vmem %s2, %s482
        %s484 = smul.u32 %s28, 8
        %s485 = sadd.s32 %s484, 8
        %p486 = scmp.lt.s32.totalorder %s485, 15
        %s487 = scalar_select %p486, %s485, 15
        %s488 = smul.u32 2, %s487
        %s489 = smul.u32 16, %s28
        %v491 = vld [vmem:[%s455] sm:$0xf]
        %v492 = vld [vmem:[%s455 + $0x4] sm:$0xf]
        %v493 = vld [vmem:[%s469] sm:$0xf]
        %v494 = vld [vmem:[%s469 + $0x4] sm:$0xf]
        %v495 = vld [vmem:[%s469 + $0x8] sm:$0xf]
        %v496 = vld [vmem:[%s469 + $0xc] sm:$0xf]
        %v497 = vld [vmem:[%s469 + $0x10] sm:$0xf]
        %v498 = vld [vmem:[%s469 + $0x14] sm:$0xf]
        %v499 = vld [vmem:[%s469 + $0x18] sm:$0xf]
        %v500 = vld [vmem:[%s469 + $0x1c] sm:$0xf]
        %v501 = vld [vmem:[%s469 + $0x20] sm:$0xf]
        %v502 = vld [vmem:[%s469 + $0x24] sm:$0xf]
        %v503 = vld [vmem:[%s469 + $0x28] sm:$0xf]
        %v504 = vld [vmem:[%s469 + $0x2c] sm:$0xf]
        %v505 = vld [vmem:[%s469 + $0x30] sm:$0xf]
        %v506 = vld [vmem:[%s469 + $0x34] sm:$0xf]
        %v507 = vld [vmem:[%s469 + $0x38] sm:$0xf]
        %v508 = vld [vmem:[%s469 + $0x3c] sm:$0xf]
        %v509 = vld [vmem:[%s483] sm:$0xf]
        %v510 = vld [vmem:[%s483 + $0x4] sm:$0xf]
        %v513 = vunpack.c.l.b16 %v491
        %v514 = vunpack.c.l.b16 %v492
        %v515 = vpack.c.b16 %v514, %v513
        %v533 = vunpack.c.l.b16 %v493
        %v534 = vunpack.c.l.b16 %v494
        %v535 = vunpack.c.l.b16 %v495
        %v536 = vunpack.c.l.b16 %v496
        %v537 = vunpack.c.l.b16 %v497
        %v538 = vunpack.c.l.b16 %v498
        %v539 = vunpack.c.l.b16 %v499
        %v540 = vunpack.c.l.b16 %v500
        %v541 = vunpack.c.l.b16 %v501
        %v542 = vunpack.c.l.b16 %v502
        %v543 = vunpack.c.l.b16 %v503
        %v544 = vunpack.c.l.b16 %v504
        %v545 = vunpack.c.l.b16 %v505
        %v546 = vunpack.c.l.b16 %v506
        %v547 = vunpack.c.l.b16 %v507
        %v548 = vunpack.c.l.b16 %v508
        %v549 = vpack.c.b16 %v534, %v533
        %v550 = vpack.c.b16 %v536, %v535
        %v551 = vpack.c.b16 %v538, %v537
        %v552 = vpack.c.b16 %v540, %v539
        %v553 = vpack.c.b16 %v542, %v541
        %v554 = vpack.c.b16 %v544, %v543
        %v555 = vpack.c.b16 %v546, %v545
        %v556 = vpack.c.b16 %v548, %v547
        %v567 = vunpack.c.l.b16 %v509
        %v568 = vunpack.c.l.b16 %v510
        %v569 = vpack.c.b16 %v568, %v567
        %v571 = vld [vmem:[%s3] sm:$0xf]
        %v572 = vld [vmem:[%s3 + $0x4] sm:$0xf]
        %v573 = vld [vmem:[%s3 + $0x8] sm:$0xf]
        %v574 = vld [vmem:[%s3 + $0xc] sm:$0xf]
        %v575 = vld [vmem:[%s3 + $0x10] sm:$0xf]
        %v576 = vld [vmem:[%s3 + $0x14] sm:$0xf]
        %v577 = vld [vmem:[%s3 + $0x18] sm:$0xf]
        %v578 = vld [vmem:[%s3 + $0x1c] sm:$0xf]
        %v579 = vld [vmem:[%s3 + $0x20] sm:$0xf]
        %v580 = vld [vmem:[%s3 + $0x24] sm:$0xf]
        %v581 = vld [vmem:[%s3 + $0x28] sm:$0xf]
        %v582 = vld [vmem:[%s3 + $0x2c] sm:$0xf]
        %v583 = vld [vmem:[%s3 + $0x30] sm:$0xf]
        %v584 = vld [vmem:[%s3 + $0x34] sm:$0xf]
        %v585 = vld [vmem:[%s3 + $0x38] sm:$0xf]
        %v586 = vld [vmem:[%s3 + $0x3c] sm:$0xf]
        %v587 = vld [vmem:[%s6] sm:$0x1]
        %v589 = vlaneseq
        %v590 = vshrl.u32 %v589, 7
        %v591 = vsub.s32 0, %v590
        %v592 = vrot.slane %v587, %v591
        %v610 = vunpack.c.l.b16 %v571
        %v611 = vunpack.c.l.b16 %v572
        %v612 = vunpack.c.l.b16 %v573
        %v613 = vunpack.c.l.b16 %v574
        %v614 = vunpack.c.l.b16 %v575
        %v615 = vunpack.c.l.b16 %v576
        %v616 = vunpack.c.l.b16 %v577
        %v617 = vunpack.c.l.b16 %v578
        %v618 = vunpack.c.l.b16 %v579
        %v619 = vunpack.c.l.b16 %v580
        %v620 = vunpack.c.l.b16 %v581
        %v621 = vunpack.c.l.b16 %v582
        %v622 = vunpack.c.l.b16 %v583
        %v623 = vunpack.c.l.b16 %v584
        %v624 = vunpack.c.l.b16 %v585
        %v625 = vunpack.c.l.b16 %v586
        %v626 = vpack.c.b16 %v611, %v610
        %v627 = vpack.c.b16 %v613, %v612
        %v628 = vpack.c.b16 %v615, %v614
        %v629 = vpack.c.b16 %v617, %v616
        %v630 = vpack.c.b16 %v619, %v618
        %v631 = vpack.c.b16 %v621, %v620
        %v632 = vpack.c.b16 %v623, %v622
        %v633 = vpack.c.b16 %v625, %v624
        %642 = vmatprep.subr.bf16.mxu0 0
        %643 = vmatpush1.bf16.msra.mxu0 %v633
        %644 = vmatprep.subr.bf16.mxu0 0
        %645 = vmatpush1.bf16.msra.mxu0 %v632
        %646 = vmatprep.subr.bf16.mxu0 0
        %647 = vmatpush1.bf16.msra.mxu0 %v631
        %648 = vmatprep.subr.bf16.mxu0 0
        %649 = vmatpush1.bf16.msra.mxu0 %v630
        %650 = vmatprep.subr.bf16.mxu0 0
        %651 = vmatpush1.bf16.msra.mxu0 %v629
        %652 = vmatprep.subr.bf16.mxu0 0
        %653 = vmatpush1.bf16.msra.mxu0 %v628
        %654 = vmatprep.subr.bf16.mxu0 0
        %655 = vmatpush1.bf16.msra.mxu0 %v627
        %656 = vmatprep.subr.bf16.mxu0 0
        %657 = vmatpush1.bf16.msra.mxu0 %v626
        %658 = vmatprep.subr.bf16.mxu0 0
        %659 = vmatpush2.bf16.msra.mxu0 0
        %660 = vmatprep.subr.bf16.mxu0 0
        %661 = vmatpush2.bf16.msra.mxu0 0
        %662 = vmatprep.subr.bf16.mxu0 0
        %663 = vmatpush2.bf16.msra.mxu0 0
        %664 = vmatprep.subr.bf16.mxu0 0
        %665 = vmatpush2.bf16.msra.mxu0 0
        %666 = vmatprep.subr.bf16.mxu0 0
        %667 = vmatpush2.bf16.msra.mxu0 0
        %668 = vmatprep.subr.bf16.mxu0 0
        %669 = vmatpush2.bf16.msra.mxu0 0
        %670 = vmatprep.subr.bf16.mxu0 0
        %671 = vmatpush2.bf16.msra.mxu0 0
        %672 = vmatprep.subr.bf16.mxu0 0
        %673 = vmatpush2.bf16.msra.mxu0 0
        %674 = vmatprep.mubr.bf16.mxu0 0
        %675 = vmatmul.mubr.bf16.gmra.mxu0 %v515
        %v676 = vpop.f32.mrf.mxu0
        %v677 = vadd.f32 %v592, %v676
        %v678 = vpop.f32.mrf.mxu0
        %v679 = vpop.f32.mrf.mxu0
        %v680 = vadd.f32 %v592, %v679
        %v681 = vpop.f32.mrf.mxu0
        %682 = vmatprep.mubr.bf16.mxu0 0
        %683 = vmatmul.mubr.bf16.gmra.mxu0 %v549
        %v684 = vpop.f32.mrf.mxu0
        %v685 = vadd.f32 %v592, %v684
        %v686 = vpop.f32.mrf.mxu0
        %v687 = vpop.f32.mrf.mxu0
        %v688 = vadd.f32 %v592, %v687
        %v689 = vpop.f32.mrf.mxu0
        %690 = vmatprep.mubr.bf16.mxu0 0
        %691 = vmatmul.mubr.bf16.gmra.mxu0 %v550
        %v692 = vpop.f32.mrf.mxu0
        %v693 = vadd.f32 %v592, %v692
        %v694 = vpop.f32.mrf.mxu0
        %v695 = vpop.f32.mrf.mxu0
        %v696 = vadd.f32 %v592, %v695
        %v697 = vpop.f32.mrf.mxu0
        %698 = vmatprep.mubr.bf16.mxu0 0
        %699 = vmatmul.mubr.bf16.gmra.mxu0 %v551
        %v700 = vpop.f32.mrf.mxu0
        %v701 = vadd.f32 %v592, %v700
        %v702 = vpop.f32.mrf.mxu0
        %v703 = vpop.f32.mrf.mxu0
        %v704 = vadd.f32 %v592, %v703
        %v705 = vpop.f32.mrf.mxu0
        %706 = vmatprep.mubr.bf16.mxu0 0
        %707 = vmatmul.mubr.bf16.gmra.mxu0 %v552
        %v708 = vpop.f32.mrf.mxu0
        %v709 = vadd.f32 %v592, %v708
        %v710 = vpop.f32.mrf.mxu0
        %v711 = vpop.f32.mrf.mxu0
        %v712 = vadd.f32 %v592, %v711
        %v713 = vpop.f32.mrf.mxu0
        %714 = vmatprep.mubr.bf16.mxu0 0
        %715 = vmatmul.mubr.bf16.gmra.mxu0 %v553
        %v716 = vpop.f32.mrf.mxu0
        %v717 = vadd.f32 %v592, %v716
        %v718 = vpop.f32.mrf.mxu0
        %v719 = vpop.f32.mrf.mxu0
        %v720 = vadd.f32 %v592, %v719
        %v721 = vpop.f32.mrf.mxu0
        %722 = vmatprep.mubr.bf16.mxu0 0
        %723 = vmatmul.mubr.bf16.gmra.mxu0 %v554
        %v724 = vpop.f32.mrf.mxu0
        %v725 = vadd.f32 %v592, %v724
        %v726 = vpop.f32.mrf.mxu0
        %v727 = vpop.f32.mrf.mxu0
        %v728 = vadd.f32 %v592, %v727
        %v729 = vpop.f32.mrf.mxu0
        %730 = vmatprep.mubr.bf16.mxu0 0
        %731 = vmatmul.mubr.bf16.gmra.mxu0 %v555
        %v732 = vpop.f32.mrf.mxu0
        %v733 = vadd.f32 %v592, %v732
        %v734 = vpop.f32.mrf.mxu0
        %v735 = vpop.f32.mrf.mxu0
        %v736 = vadd.f32 %v592, %v735
        %v737 = vpop.f32.mrf.mxu0
        %738 = vmatprep.mubr.bf16.mxu0 0
        %739 = vmatmul.mubr.bf16.gmra.mxu0 %v556
        %v740 = vpop.f32.mrf.mxu0
        %v741 = vadd.f32 %v592, %v740
        %v742 = vpop.f32.mrf.mxu0
        %v743 = vpop.f32.mrf.mxu0
        %v744 = vadd.f32 %v592, %v743
        %v745 = vpop.f32.mrf.mxu0
        %746 = vmatprep.mubr.bf16.mxu0 0
        %747 = vmatmul.mubr.bf16.gmra.mxu0 %v569
        %v748 = vpop.f32.mrf.mxu0
        %v749 = vadd.f32 %v592, %v748
        %v750 = vpop.f32.mrf.mxu0
        %v751 = vpop.f32.mrf.mxu0
        %v752 = vadd.f32 %v592, %v751
        %v753 = vpop.f32.mrf.mxu0
        %754 = vdwg.mxu0
        %v755 = vmax.f32 %v677, 0.0
        %v756 = vmax.f32 %v680, 0.0
        %v757 = vmax.f32 %v685, 0.0
        %v758 = vmax.f32 %v688, 0.0
        %v759 = vmax.f32 %v693, 0.0
        %v760 = vmax.f32 %v696, 0.0
        %v761 = vmax.f32 %v701, 0.0
        %v762 = vmax.f32 %v704, 0.0
        %v763 = vmax.f32 %v709, 0.0
        %v764 = vmax.f32 %v712, 0.0
        %v765 = vmax.f32 %v717, 0.0
        %v766 = vmax.f32 %v720, 0.0
        %v767 = vmax.f32 %v725, 0.0
        %v768 = vmax.f32 %v728, 0.0
        %v769 = vmax.f32 %v733, 0.0
        %v770 = vmax.f32 %v736, 0.0
        %v771 = vmax.f32 %v741, 0.0
        %v772 = vmax.f32 %v744, 0.0
        %v773 = vmax.f32 %v749, 0.0
        %v774 = vmax.f32 %v752, 0.0
        %v775 = vlaneseq
        %v776 = vshrl.u32 %v775, 7
        %v777 = vadd.s32 %v776, 8
        %v778 = vadd.s32 %v776, 16
        %v779 = vadd.s32 %v776, 24
        %v780 = vadd.s32 %v776, 32
        %v781 = vadd.s32 %v776, 40
        %v782 = vadd.s32 %v776, 48
        %v783 = vadd.s32 %v776, 56
        %v784 = vadd.s32 %v776, 64
        %v785 = vadd.s32 %v776, 72
        %v786 = vadd.s32 %v776, 80
        %v787 = vadd.s32 %v776, 88
        %v788 = vadd.s32 %v776, 96
        %v789 = vadd.s32 %v776, 104
        %v790 = vadd.s32 %v776, 112
        %v791 = vadd.s32 %v776, 120
        %v792 = vadd.s32 %v776, 128
        %v793 = vadd.s32 %v776, 136
        %v794 = vadd.s32 %v776, 144
        %v795 = vadd.s32 %v776, 152
        %vm796 = vcmp.ge.s32.totalorder %v776, 16
        %vm797 = vcmp.ge.s32.totalorder %v777, 16
        %vm798 = vcmp.ge.s32.totalorder %v778, 16
        %vm799 = vcmp.ge.s32.totalorder %v779, 16
        %vm800 = vcmp.ge.s32.totalorder %v780, 16
        %vm801 = vcmp.ge.s32.totalorder %v781, 16
        %vm802 = vcmp.ge.s32.totalorder %v782, 16
        %vm803 = vcmp.ge.s32.totalorder %v783, 16
        %vm804 = vcmp.ge.s32.totalorder %v784, 16
        %vm805 = vcmp.ge.s32.totalorder %v785, 16
        %vm806 = vcmp.ge.s32.totalorder %v786, 16
        %vm807 = vcmp.ge.s32.totalorder %v787, 16
        %vm808 = vcmp.ge.s32.totalorder %v788, 16
        %vm809 = vcmp.ge.s32.totalorder %v789, 16
        %vm810 = vcmp.ge.s32.totalorder %v790, 16
        %vm811 = vcmp.ge.s32.totalorder %v791, 16
        %vm812 = vcmp.ge.s32.totalorder %v792, 16
        %vm813 = vcmp.ge.s32.totalorder %v793, 16
        %vm814 = vcmp.ge.s32.totalorder %v794, 16
        %vm815 = vcmp.ge.s32.totalorder %v795, 16
        %p816 = scmp.gt.s32.totalorder %s28, 0
        %s817 = scalar_select %p816, 1, 0
        %v818 = vstv %s817
        %vm819 = vcmp.eq.s32.totalorder %v818, 1
        %vm820 = vmor %vm796, %vm819
        %vm821 = vmor %vm797, %vm819
        %vm822 = vmor %vm798, %vm819
        %vm823 = vmor %vm799, %vm819
        %vm824 = vmor %vm800, %vm819
        %vm825 = vmor %vm801, %vm819
        %vm826 = vmor %vm802, %vm819
        %vm827 = vmor %vm803, %vm819
        %vm828 = vmor %vm804, %vm819
        %vm829 = vmor %vm805, %vm819
        %vm830 = vmor %vm806, %vm819
        %vm831 = vmor %vm807, %vm819
        %vm832 = vmor %vm808, %vm819
        %vm833 = vmor %vm809, %vm819
        %vm834 = vmor %vm810, %vm819
        %vm835 = vmor %vm811, %vm819
        %vm836 = vmor %vm812, %vm819
        %vm837 = vmor %vm813, %vm819
        %vm838 = vmor %vm814, %vm819
        %vm839 = vmor %vm815, %vm819
        %vm840 = vcmp.lt.s32.totalorder %v776, 144
        %vm841 = vcmp.lt.s32.totalorder %v777, 144
        %vm842 = vcmp.lt.s32.totalorder %v778, 144
        %vm843 = vcmp.lt.s32.totalorder %v779, 144
        %vm844 = vcmp.lt.s32.totalorder %v780, 144
        %vm845 = vcmp.lt.s32.totalorder %v781, 144
        %vm846 = vcmp.lt.s32.totalorder %v782, 144
        %vm847 = vcmp.lt.s32.totalorder %v783, 144
        %vm848 = vcmp.lt.s32.totalorder %v784, 144
        %vm849 = vcmp.lt.s32.totalorder %v785, 144
        %vm850 = vcmp.lt.s32.totalorder %v786, 144
        %vm851 = vcmp.lt.s32.totalorder %v787, 144
        %vm852 = vcmp.lt.s32.totalorder %v788, 144
        %vm853 = vcmp.lt.s32.totalorder %v789, 144
        %vm854 = vcmp.lt.s32.totalorder %v790, 144
        %vm855 = vcmp.lt.s32.totalorder %v791, 144
        %vm856 = vcmp.lt.s32.totalorder %v792, 144
        %vm857 = vcmp.lt.s32.totalorder %v793, 144
        %vm858 = vcmp.lt.s32.totalorder %v794, 144
        %vm859 = vcmp.lt.s32.totalorder %v795, 144
        %p860 = scmp.lt.s32.totalorder %s28, 1
        %s861 = scalar_select %p860, 1, 0
        %v862 = vstv %s861
        %vm863 = vcmp.eq.s32.totalorder %v862, 1
        %vm864 = vmor %vm840, %vm863
        %vm865 = vmor %vm841, %vm863
        %vm866 = vmor %vm842, %vm863
        %vm867 = vmor %vm843, %vm863
        %vm868 = vmor %vm844, %vm863
        %vm869 = vmor %vm845, %vm863
        %vm870 = vmor %vm846, %vm863
        %vm871 = vmor %vm847, %vm863
        %vm872 = vmor %vm848, %vm863
        %vm873 = vmor %vm849, %vm863
        %vm874 = vmor %vm850, %vm863
        %vm875 = vmor %vm851, %vm863
        %vm876 = vmor %vm852, %vm863
        %vm877 = vmor %vm853, %vm863
        %vm878 = vmor %vm854, %vm863
        %vm879 = vmor %vm855, %vm863
        %vm880 = vmor %vm856, %vm863
        %vm881 = vmor %vm857, %vm863
        %vm882 = vmor %vm858, %vm863
        %vm883 = vmor %vm859, %vm863
        %vm884 = vmand %vm820, %vm864
        %vm885 = vmand %vm821, %vm865
        %vm886 = vmand %vm822, %vm866
        %vm887 = vmand %vm823, %vm867
        %vm888 = vmand %vm824, %vm868
        %vm889 = vmand %vm825, %vm869
        %vm890 = vmand %vm826, %vm870
        %vm891 = vmand %vm827, %vm871
        %vm892 = vmand %vm828, %vm872
        %vm893 = vmand %vm829, %vm873
        %vm894 = vmand %vm830, %vm874
        %vm895 = vmand %vm831, %vm875
        %vm896 = vmand %vm832, %vm876
        %vm897 = vmand %vm833, %vm877
        %vm898 = vmand %vm834, %vm878
        %vm899 = vmand %vm835, %vm879
        %vm900 = vmand %vm836, %vm880
        %vm901 = vmand %vm837, %vm881
        %vm902 = vmand %vm838, %vm882
        %vm903 = vmand %vm839, %vm883
        %v904 = vsel %vm884, 1, 0
        %v905 = vsel %vm885, 1, 0
        %v906 = vsel %vm886, 1, 0
        %v907 = vsel %vm887, 1, 0
        %v908 = vsel %vm888, 1, 0
        %v909 = vsel %vm889, 1, 0
        %v910 = vsel %vm890, 1, 0
        %v911 = vsel %vm891, 1, 0
        %v912 = vsel %vm892, 1, 0
        %v913 = vsel %vm893, 1, 0
        %v914 = vsel %vm894, 1, 0
        %v915 = vsel %vm895, 1, 0
        %v916 = vsel %vm896, 1, 0
        %v917 = vsel %vm897, 1, 0
        %v918 = vsel %vm898, 1, 0
        %v919 = vsel %vm899, 1, 0
        %v920 = vsel %vm900, 1, 0
        %v921 = vsel %vm901, 1, 0
        %v922 = vsel %vm902, 1, 0
        %v923 = vsel %vm903, 1, 0
        %vm924 = vcmp.eq.s32.totalorder %v904, 1
        %vm925 = vcmp.eq.s32.totalorder %v905, 1
        %vm926 = vcmp.eq.s32.totalorder %v906, 1
        %vm927 = vcmp.eq.s32.totalorder %v907, 1
        %vm928 = vcmp.eq.s32.totalorder %v908, 1
        %vm929 = vcmp.eq.s32.totalorder %v909, 1
        %vm930 = vcmp.eq.s32.totalorder %v910, 1
        %vm931 = vcmp.eq.s32.totalorder %v911, 1
        %vm932 = vcmp.eq.s32.totalorder %v912, 1
        %vm933 = vcmp.eq.s32.totalorder %v913, 1
        %vm934 = vcmp.eq.s32.totalorder %v914, 1
        %vm935 = vcmp.eq.s32.totalorder %v915, 1
        %vm936 = vcmp.eq.s32.totalorder %v916, 1
        %vm937 = vcmp.eq.s32.totalorder %v917, 1
        %vm938 = vcmp.eq.s32.totalorder %v918, 1
        %vm939 = vcmp.eq.s32.totalorder %v919, 1
        %vm940 = vcmp.eq.s32.totalorder %v920, 1
        %vm941 = vcmp.eq.s32.totalorder %v921, 1
        %vm942 = vcmp.eq.s32.totalorder %v922, 1
        %vm943 = vcmp.eq.s32.totalorder %v923, 1
        %v944 = vsel %vm924, %v755, 0.0
        %v945 = vsel %vm925, %v756, 0.0
        %v946 = vsel %vm926, %v757, 0.0
        %v947 = vsel %vm927, %v758, 0.0
        %v948 = vsel %vm928, %v759, 0.0
        %v949 = vsel %vm929, %v760, 0.0
        %v950 = vsel %vm930, %v761, 0.0
        %v951 = vsel %vm931, %v762, 0.0
        %v952 = vsel %vm932, %v763, 0.0
        %v953 = vsel %vm933, %v764, 0.0
        %v954 = vsel %vm934, %v765, 0.0
        %v955 = vsel %vm935, %v766, 0.0
        %v956 = vsel %vm936, %v767, 0.0
        %v957 = vsel %vm937, %v768, 0.0
        %v958 = vsel %vm938, %v769, 0.0
        %v959 = vsel %vm939, %v770, 0.0
        %v960 = vsel %vm940, %v771, 0.0
        %v961 = vsel %vm941, %v772, 0.0
        %v962 = vsel %vm942, %v773, 0.0
        %v963 = vsel %vm943, %v774, 0.0
        %vm964 = vcmp.lt.s32.totalorder %v776, 0
        %v965 = vsub.s32 0, %v776
        %v966 = vsel %vm964, %v965, %v776
        %v967 = vshrl.u32 %v966, 4
        %v968 = vand.u32 %v966, 15
        %v969 = vsub.s32 0, %v968
        %v970 = vsel %vm964, %v969, %v968
        %vm971 = vcmp.lt.s32.totalorder %v777, 0
        %v972 = vsub.s32 0, %v777
        %v973 = vsel %vm971, %v972, %v777
        %v974 = vshrl.u32 %v973, 4
        %v975 = vand.u32 %v973, 15
        %v976 = vsub.s32 0, %v975
        %v977 = vsel %vm971, %v976, %v975
        %vm978 = vcmp.lt.s32.totalorder %v778, 0
        %v979 = vsub.s32 0, %v778
        %v980 = vsel %vm978, %v979, %v778
        %v981 = vshrl.u32 %v980, 4
        %v982 = vand.u32 %v980, 15
        %v983 = vsub.s32 0, %v982
        %v984 = vsel %vm978, %v983, %v982
        %vm985 = vcmp.lt.s32.totalorder %v779, 0
        %v986 = vsub.s32 0, %v779
        %v987 = vsel %vm985, %v986, %v779
        %v988 = vshrl.u32 %v987, 4
        %v989 = vand.u32 %v987, 15
        %v990 = vsub.s32 0, %v989
        %v991 = vsel %vm985, %v990, %v989
        %vm992 = vcmp.lt.s32.totalorder %v780, 0
        %v993 = vsub.s32 0, %v780
        %v994 = vsel %vm992, %v993, %v780
        %v995 = vshrl.u32 %v994, 4
        %v996 = vand.u32 %v994, 15
        %v997 = vsub.s32 0, %v996
        %v998 = vsel %vm992, %v997, %v996
        %vm999 = vcmp.lt.s32.totalorder %v781, 0
        %v1000 = vsub.s32 0, %v781
        %v1001 = vsel %vm999, %v1000, %v781
        %v1002 = vshrl.u32 %v1001, 4
        %v1003 = vand.u32 %v1001, 15
        %v1004 = vsub.s32 0, %v1003
        %v1005 = vsel %vm999, %v1004, %v1003
        %vm1006 = vcmp.lt.s32.totalorder %v782, 0
        %v1007 = vsub.s32 0, %v782
        %v1008 = vsel %vm1006, %v1007, %v782
        %v1009 = vshrl.u32 %v1008, 4
        %v1010 = vand.u32 %v1008, 15
        %v1011 = vsub.s32 0, %v1010
        %v1012 = vsel %vm1006, %v1011, %v1010
        %vm1013 = vcmp.lt.s32.totalorder %v783, 0
        %v1014 = vsub.s32 0, %v783
        %v1015 = vsel %vm1013, %v1014, %v783
        %v1016 = vshrl.u32 %v1015, 4
        %v1017 = vand.u32 %v1015, 15
        %v1018 = vsub.s32 0, %v1017
        %v1019 = vsel %vm1013, %v1018, %v1017
        %vm1020 = vcmp.lt.s32.totalorder %v784, 0
        %v1021 = vsub.s32 0, %v784
        %v1022 = vsel %vm1020, %v1021, %v784
        %v1023 = vshrl.u32 %v1022, 4
        %v1024 = vand.u32 %v1022, 15
        %v1025 = vsub.s32 0, %v1024
        %v1026 = vsel %vm1020, %v1025, %v1024
        %vm1027 = vcmp.lt.s32.totalorder %v785, 0
        %v1028 = vsub.s32 0, %v785
        %v1029 = vsel %vm1027, %v1028, %v785
        %v1030 = vshrl.u32 %v1029, 4
        %v1031 = vand.u32 %v1029, 15
        %v1032 = vsub.s32 0, %v1031
        %v1033 = vsel %vm1027, %v1032, %v1031
        %vm1034 = vcmp.lt.s32.totalorder %v786, 0
        %v1035 = vsub.s32 0, %v786
        %v1036 = vsel %vm1034, %v1035, %v786
        %v1037 = vshrl.u32 %v1036, 4
        %v1038 = vand.u32 %v1036, 15
        %v1039 = vsub.s32 0, %v1038
        %v1040 = vsel %vm1034, %v1039, %v1038
        %vm1041 = vcmp.lt.s32.totalorder %v787, 0
        %v1042 = vsub.s32 0, %v787
        %v1043 = vsel %vm1041, %v1042, %v787
        %v1044 = vshrl.u32 %v1043, 4
        %v1045 = vand.u32 %v1043, 15
        %v1046 = vsub.s32 0, %v1045
        %v1047 = vsel %vm1041, %v1046, %v1045
        %vm1048 = vcmp.lt.s32.totalorder %v788, 0
        %v1049 = vsub.s32 0, %v788
        %v1050 = vsel %vm1048, %v1049, %v788
        %v1051 = vshrl.u32 %v1050, 4
        %v1052 = vand.u32 %v1050, 15
        %v1053 = vsub.s32 0, %v1052
        %v1054 = vsel %vm1048, %v1053, %v1052
        %vm1055 = vcmp.lt.s32.totalorder %v789, 0
        %v1056 = vsub.s32 0, %v789
        %v1057 = vsel %vm1055, %v1056, %v789
        %v1058 = vshrl.u32 %v1057, 4
        %v1059 = vand.u32 %v1057, 15
        %v1060 = vsub.s32 0, %v1059
        %v1061 = vsel %vm1055, %v1060, %v1059
        %vm1062 = vcmp.lt.s32.totalorder %v790, 0
        %v1063 = vsub.s32 0, %v790
        %v1064 = vsel %vm1062, %v1063, %v790
        %v1065 = vshrl.u32 %v1064, 4
        %v1066 = vand.u32 %v1064, 15
        %v1067 = vsub.s32 0, %v1066
        %v1068 = vsel %vm1062, %v1067, %v1066
        %vm1069 = vcmp.lt.s32.totalorder %v791, 0
        %v1070 = vsub.s32 0, %v791
        %v1071 = vsel %vm1069, %v1070, %v791
        %v1072 = vshrl.u32 %v1071, 4
        %v1073 = vand.u32 %v1071, 15
        %v1074 = vsub.s32 0, %v1073
        %v1075 = vsel %vm1069, %v1074, %v1073
        %vm1076 = vcmp.lt.s32.totalorder %v792, 0
        %v1077 = vsub.s32 0, %v792
        %v1078 = vsel %vm1076, %v1077, %v792
        %v1079 = vshrl.u32 %v1078, 4
        %v1080 = vand.u32 %v1078, 15
        %v1081 = vsub.s32 0, %v1080
        %v1082 = vsel %vm1076, %v1081, %v1080
        %vm1083 = vcmp.lt.s32.totalorder %v793, 0
        %v1084 = vsub.s32 0, %v793
        %v1085 = vsel %vm1083, %v1084, %v793
        %v1086 = vshrl.u32 %v1085, 4
        %v1087 = vand.u32 %v1085, 15
        %v1088 = vsub.s32 0, %v1087
        %v1089 = vsel %vm1083, %v1088, %v1087
        %vm1090 = vcmp.lt.s32.totalorder %v794, 0
        %v1091 = vsub.s32 0, %v794
        %v1092 = vsel %vm1090, %v1091, %v794
        %v1093 = vshrl.u32 %v1092, 4
        %v1094 = vand.u32 %v1092, 15
        %v1095 = vsub.s32 0, %v1094
        %v1096 = vsel %vm1090, %v1095, %v1094
        %vm1097 = vcmp.lt.s32.totalorder %v795, 0
        %v1098 = vsub.s32 0, %v795
        %v1099 = vsel %vm1097, %v1098, %v795
        %v1100 = vshrl.u32 %v1099, 4
        %v1101 = vand.u32 %v1099, 15
        %v1102 = vsub.s32 0, %v1101
        %v1103 = vsel %vm1097, %v1102, %v1101
        %vm1104 = vcmp.ne.s32.totalorder %v970, 0
        %vm1105 = vcmp.ne.s32.totalorder %v977, 0
        %vm1106 = vcmp.ne.s32.totalorder %v984, 0
        %vm1107 = vcmp.ne.s32.totalorder %v991, 0
        %vm1108 = vcmp.ne.s32.totalorder %v998, 0
        %vm1109 = vcmp.ne.s32.totalorder %v1005, 0
        %vm1110 = vcmp.ne.s32.totalorder %v1012, 0
        %vm1111 = vcmp.ne.s32.totalorder %v1019, 0
        %vm1112 = vcmp.ne.s32.totalorder %v1026, 0
        %vm1113 = vcmp.ne.s32.totalorder %v1033, 0
        %vm1114 = vcmp.ne.s32.totalorder %v1040, 0
        %vm1115 = vcmp.ne.s32.totalorder %v1047, 0
        %vm1116 = vcmp.ne.s32.totalorder %v1054, 0
        %vm1117 = vcmp.ne.s32.totalorder %v1061, 0
        %vm1118 = vcmp.ne.s32.totalorder %v1068, 0
        %vm1119 = vcmp.ne.s32.totalorder %v1075, 0
        %vm1120 = vcmp.ne.s32.totalorder %v1082, 0
        %vm1121 = vcmp.ne.s32.totalorder %v1089, 0
        %vm1122 = vcmp.ne.s32.totalorder %v1096, 0
        %vm1123 = vcmp.ne.s32.totalorder %v1103, 0
        %vm1124 = vcmp.lt.s32.totalorder %v970, 0
        %vm1125 = vcmp.lt.s32.totalorder %v977, 0
        %vm1126 = vcmp.lt.s32.totalorder %v984, 0
        %vm1127 = vcmp.lt.s32.totalorder %v991, 0
        %vm1128 = vcmp.lt.s32.totalorder %v998, 0
        %vm1129 = vcmp.lt.s32.totalorder %v1005, 0
        %vm1130 = vcmp.lt.s32.totalorder %v1012, 0
        %vm1131 = vcmp.lt.s32.totalorder %v1019, 0
        %vm1132 = vcmp.lt.s32.totalorder %v1026, 0
        %vm1133 = vcmp.lt.s32.totalorder %v1033, 0
        %vm1134 = vcmp.lt.s32.totalorder %v1040, 0
        %vm1135 = vcmp.lt.s32.totalorder %v1047, 0
        %vm1136 = vcmp.lt.s32.totalorder %v1054, 0
        %vm1137 = vcmp.lt.s32.totalorder %v1061, 0
        %vm1138 = vcmp.lt.s32.totalorder %v1068, 0
        %vm1139 = vcmp.lt.s32.totalorder %v1075, 0
        %vm1140 = vcmp.lt.s32.totalorder %v1082, 0
        %vm1141 = vcmp.lt.s32.totalorder %v1089, 0
        %vm1142 = vcmp.lt.s32.totalorder %v1096, 0
        %vm1143 = vcmp.lt.s32.totalorder %v1103, 0
        %vm1144 = vmand %vm1124, %vm1104
        %vm1145 = vmand %vm1125, %vm1105
        %vm1146 = vmand %vm1126, %vm1106
        %vm1147 = vmand %vm1127, %vm1107
        %vm1148 = vmand %vm1128, %vm1108
        %vm1149 = vmand %vm1129, %vm1109
        %vm1150 = vmand %vm1130, %vm1110
        %vm1151 = vmand %vm1131, %vm1111
        %vm1152 = vmand %vm1132, %vm1112
        %vm1153 = vmand %vm1133, %vm1113
        %vm1154 = vmand %vm1134, %vm1114
        %vm1155 = vmand %vm1135, %vm1115
        %vm1156 = vmand %vm1136, %vm1116
        %vm1157 = vmand %vm1137, %vm1117
        %vm1158 = vmand %vm1138, %vm1118
        %vm1159 = vmand %vm1139, %vm1119
        %vm1160 = vmand %vm1140, %vm1120
        %vm1161 = vmand %vm1141, %vm1121
        %vm1162 = vmand %vm1142, %vm1122
        %vm1163 = vmand %vm1143, %vm1123
        %v1164 = vadd.s32 %v970, 16
        %v1165 = vadd.s32 %v977, 16
        %v1166 = vadd.s32 %v984, 16
        %v1167 = vadd.s32 %v991, 16
        %v1168 = vadd.s32 %v998, 16
        %v1169 = vadd.s32 %v1005, 16
        %v1170 = vadd.s32 %v1012, 16
        %v1171 = vadd.s32 %v1019, 16
        %v1172 = vadd.s32 %v1026, 16
        %v1173 = vadd.s32 %v1033, 16
        %v1174 = vadd.s32 %v1040, 16
        %v1175 = vadd.s32 %v1047, 16
        %v1176 = vadd.s32 %v1054, 16
        %v1177 = vadd.s32 %v1061, 16
        %v1178 = vadd.s32 %v1068, 16
        %v1179 = vadd.s32 %v1075, 16
        %v1180 = vadd.s32 %v1082, 16
        %v1181 = vadd.s32 %v1089, 16
        %v1182 = vadd.s32 %v1096, 16
        %v1183 = vadd.s32 %v1103, 16
        %v1184 = vsel %vm1144, %v1164, %v970
        %v1185 = vsel %vm1145, %v1165, %v977
        %v1186 = vsel %vm1146, %v1166, %v984
        %v1187 = vsel %vm1147, %v1167, %v991
        %v1188 = vsel %vm1148, %v1168, %v998
        %v1189 = vsel %vm1149, %v1169, %v1005
        %v1190 = vsel %vm1150, %v1170, %v1012
        %v1191 = vsel %vm1151, %v1171, %v1019
        %v1192 = vsel %vm1152, %v1172, %v1026
        %v1193 = vsel %vm1153, %v1173, %v1033
        %v1194 = vsel %vm1154, %v1174, %v1040
        %v1195 = vsel %vm1155, %v1175, %v1047
        %v1196 = vsel %vm1156, %v1176, %v1054
        %v1197 = vsel %vm1157, %v1177, %v1061
        %v1198 = vsel %vm1158, %v1178, %v1068
        %v1199 = vsel %vm1159, %v1179, %v1075
        %v1200 = vsel %vm1160, %v1180, %v1082
        %v1201 = vsel %vm1161, %v1181, %v1089
        %v1202 = vsel %vm1162, %v1182, %v1096
        %v1203 = vsel %vm1163, %v1183, %v1103
        %v1204 = vrot.slane %v944, 7
        %v1205 = vrot.slane %v945, 7
        %v1206 = vrot.slane %v946, 7
        %v1207 = vrot.slane %v947, 7
        %v1208 = vrot.slane %v948, 7
        %v1209 = vrot.slane %v949, 7
        %v1210 = vrot.slane %v950, 7
        %v1211 = vrot.slane %v951, 7
        %v1212 = vrot.slane %v952, 7
        %v1213 = vrot.slane %v953, 7
        %v1214 = vrot.slane %v954, 7
        %v1215 = vrot.slane %v955, 7
        %v1216 = vrot.slane %v956, 7
        %v1217 = vrot.slane %v957, 7
        %v1218 = vrot.slane %v958, 7
        %v1219 = vrot.slane %v959, 7
        %v1220 = vrot.slane %v960, 7
        %v1221 = vrot.slane %v961, 7
        %v1222 = vrot.slane %v962, 7
        %v1223 = vrot.slane %v963, 7
        %vm1224 = vcmp.lt.s32.totalorder %v776, 1
        %v1225 = vsel %vm1224, %v1222, %v1223
        %v1226 = vsel %vm1224, %v1221, %v1222
        %v1227 = vsel %vm1224, %v1220, %v1221
        %v1228 = vsel %vm1224, %v1219, %v1220
        %v1229 = vsel %vm1224, %v1218, %v1219
        %v1230 = vsel %vm1224, %v1217, %v1218
        %v1231 = vsel %vm1224, %v1216, %v1217
        %v1232 = vsel %vm1224, %v1215, %v1216
        %v1233 = vsel %vm1224, %v1214, %v1215
        %v1234 = vsel %vm1224, %v1213, %v1214
        %v1235 = vsel %vm1224, %v1212, %v1213
        %v1236 = vsel %vm1224, %v1211, %v1212
        %v1237 = vsel %vm1224, %v1210, %v1211
        %v1238 = vsel %vm1224, %v1209, %v1210
        %v1239 = vsel %vm1224, %v1208, %v1209
        %v1240 = vsel %vm1224, %v1207, %v1208
        %v1241 = vsel %vm1224, %v1206, %v1207
        %v1242 = vsel %vm1224, %v1205, %v1206
        %v1243 = vsel %vm1224, %v1204, %v1205
        %v1244 = vsel %vm1224, %v1223, %v1204
        %v1245 = vadd.s32 %v1184, 4294967295
        %v1246 = vadd.s32 %v1185, 4294967295
        %v1247 = vadd.s32 %v1186, 4294967295
        %v1248 = vadd.s32 %v1187, 4294967295
        %v1249 = vadd.s32 %v1188, 4294967295
        %v1250 = vadd.s32 %v1189, 4294967295
        %v1251 = vadd.s32 %v1190, 4294967295
        %v1252 = vadd.s32 %v1191, 4294967295
        %v1253 = vadd.s32 %v1192, 4294967295
        %v1254 = vadd.s32 %v1193, 4294967295
        %v1255 = vadd.s32 %v1194, 4294967295
        %v1256 = vadd.s32 %v1195, 4294967295
        %v1257 = vadd.s32 %v1196, 4294967295
        %v1258 = vadd.s32 %v1197, 4294967295
        %v1259 = vadd.s32 %v1198, 4294967295
        %v1260 = vadd.s32 %v1199, 4294967295
        %v1261 = vadd.s32 %v1200, 4294967295
        %v1262 = vadd.s32 %v1201, 4294967295
        %v1263 = vadd.s32 %v1202, 4294967295
        %v1264 = vadd.s32 %v1203, 4294967295
        %vm1265 = vcmp.ge.s32.totalorder %v1245, 0
        %vm1266 = vcmp.ge.s32.totalorder %v1246, 0
        %vm1267 = vcmp.ge.s32.totalorder %v1247, 0
        %vm1268 = vcmp.ge.s32.totalorder %v1248, 0
        %vm1269 = vcmp.ge.s32.totalorder %v1249, 0
        %vm1270 = vcmp.ge.s32.totalorder %v1250, 0
        %vm1271 = vcmp.ge.s32.totalorder %v1251, 0
        %vm1272 = vcmp.ge.s32.totalorder %v1252, 0
        %vm1273 = vcmp.ge.s32.totalorder %v1253, 0
        %vm1274 = vcmp.ge.s32.totalorder %v1254, 0
        %vm1275 = vcmp.ge.s32.totalorder %v1255, 0
        %vm1276 = vcmp.ge.s32.totalorder %v1256, 0
        %vm1277 = vcmp.ge.s32.totalorder %v1257, 0
        %vm1278 = vcmp.ge.s32.totalorder %v1258, 0
        %vm1279 = vcmp.ge.s32.totalorder %v1259, 0
        %vm1280 = vcmp.ge.s32.totalorder %v1260, 0
        %vm1281 = vcmp.ge.s32.totalorder %v1261, 0
        %vm1282 = vcmp.ge.s32.totalorder %v1262, 0
        %vm1283 = vcmp.ge.s32.totalorder %v1263, 0
        %vm1284 = vcmp.ge.s32.totalorder %v1264, 0
        %vm1285 = vcmp.le.s32.totalorder %v1245, 15
        %vm1286 = vcmp.le.s32.totalorder %v1246, 15
        %vm1287 = vcmp.le.s32.totalorder %v1247, 15
        %vm1288 = vcmp.le.s32.totalorder %v1248, 15
        %vm1289 = vcmp.le.s32.totalorder %v1249, 15
        %vm1290 = vcmp.le.s32.totalorder %v1250, 15
        %vm1291 = vcmp.le.s32.totalorder %v1251, 15
        %vm1292 = vcmp.le.s32.totalorder %v1252, 15
        %vm1293 = vcmp.le.s32.totalorder %v1253, 15
        %vm1294 = vcmp.le.s32.totalorder %v1254, 15
        %vm1295 = vcmp.le.s32.totalorder %v1255, 15
        %vm1296 = vcmp.le.s32.totalorder %v1256, 15
        %vm1297 = vcmp.le.s32.totalorder %v1257, 15
        %vm1298 = vcmp.le.s32.totalorder %v1258, 15
        %vm1299 = vcmp.le.s32.totalorder %v1259, 15
        %vm1300 = vcmp.le.s32.totalorder %v1260, 15
        %vm1301 = vcmp.le.s32.totalorder %v1261, 15
        %vm1302 = vcmp.le.s32.totalorder %v1262, 15
        %vm1303 = vcmp.le.s32.totalorder %v1263, 15
        %vm1304 = vcmp.le.s32.totalorder %v1264, 15
        %vm1305 = vmand %vm1265, %vm1285
        %vm1306 = vmand %vm1266, %vm1286
        %vm1307 = vmand %vm1267, %vm1287
        %vm1308 = vmand %vm1268, %vm1288
        %vm1309 = vmand %vm1269, %vm1289
        %vm1310 = vmand %vm1270, %vm1290
        %vm1311 = vmand %vm1271, %vm1291
        %vm1312 = vmand %vm1272, %vm1292
        %vm1313 = vmand %vm1273, %vm1293
        %vm1314 = vmand %vm1274, %vm1294
        %vm1315 = vmand %vm1275, %vm1295
        %vm1316 = vmand %vm1276, %vm1296
        %vm1317 = vmand %vm1277, %vm1297
        %vm1318 = vmand %vm1278, %vm1298
        %vm1319 = vmand %vm1279, %vm1299
        %vm1320 = vmand %vm1280, %vm1300
        %vm1321 = vmand %vm1281, %vm1301
        %vm1322 = vmand %vm1282, %vm1302
        %vm1323 = vmand %vm1283, %vm1303
        %vm1324 = vmand %vm1284, %vm1304
        %v1325 = vsel %vm1305, 1, 0
        %v1326 = vsel %vm1306, 1, 0
        %v1327 = vsel %vm1307, 1, 0
        %v1328 = vsel %vm1308, 1, 0
        %v1329 = vsel %vm1309, 1, 0
        %v1330 = vsel %vm1310, 1, 0
        %v1331 = vsel %vm1311, 1, 0
        %v1332 = vsel %vm1312, 1, 0
        %v1333 = vsel %vm1313, 1, 0
        %v1334 = vsel %vm1314, 1, 0
        %v1335 = vsel %vm1315, 1, 0
        %v1336 = vsel %vm1316, 1, 0
        %v1337 = vsel %vm1317, 1, 0
        %v1338 = vsel %vm1318, 1, 0
        %v1339 = vsel %vm1319, 1, 0
        %v1340 = vsel %vm1320, 1, 0
        %v1341 = vsel %vm1321, 1, 0
        %v1342 = vsel %vm1322, 1, 0
        %v1343 = vsel %vm1323, 1, 0
        %v1344 = vsel %vm1324, 1, 0
        %vm1345 = vcmp.eq.s32.totalorder %v1325, 1
        %vm1346 = vcmp.eq.s32.totalorder %v1326, 1
        %vm1347 = vcmp.eq.s32.totalorder %v1327, 1
        %vm1348 = vcmp.eq.s32.totalorder %v1328, 1
        %vm1349 = vcmp.eq.s32.totalorder %v1329, 1
        %vm1350 = vcmp.eq.s32.totalorder %v1330, 1
        %vm1351 = vcmp.eq.s32.totalorder %v1331, 1
        %vm1352 = vcmp.eq.s32.totalorder %v1332, 1
        %vm1353 = vcmp.eq.s32.totalorder %v1333, 1
        %vm1354 = vcmp.eq.s32.totalorder %v1334, 1
        %vm1355 = vcmp.eq.s32.totalorder %v1335, 1
        %vm1356 = vcmp.eq.s32.totalorder %v1336, 1
        %vm1357 = vcmp.eq.s32.totalorder %v1337, 1
        %vm1358 = vcmp.eq.s32.totalorder %v1338, 1
        %vm1359 = vcmp.eq.s32.totalorder %v1339, 1
        %vm1360 = vcmp.eq.s32.totalorder %v1340, 1
        %vm1361 = vcmp.eq.s32.totalorder %v1341, 1
        %vm1362 = vcmp.eq.s32.totalorder %v1342, 1
        %vm1363 = vcmp.eq.s32.totalorder %v1343, 1
        %vm1364 = vcmp.eq.s32.totalorder %v1344, 1
        %v1365 = vsel %vm1345, %v1244, 0.0
        %v1366 = vsel %vm1346, %v1243, 0.0
        %v1367 = vsel %vm1347, %v1242, 0.0
        %v1368 = vsel %vm1348, %v1241, 0.0
        %v1369 = vsel %vm1349, %v1240, 0.0
        %v1370 = vsel %vm1350, %v1239, 0.0
        %v1371 = vsel %vm1351, %v1238, 0.0
        %v1372 = vsel %vm1352, %v1237, 0.0
        %v1373 = vsel %vm1353, %v1236, 0.0
        %v1374 = vsel %vm1354, %v1235, 0.0
        %v1375 = vsel %vm1355, %v1234, 0.0
        %v1376 = vsel %vm1356, %v1233, 0.0
        %v1377 = vsel %vm1357, %v1232, 0.0
        %v1378 = vsel %vm1358, %v1231, 0.0
        %v1379 = vsel %vm1359, %v1230, 0.0
        %v1380 = vsel %vm1360, %v1229, 0.0
        %v1381 = vsel %vm1361, %v1228, 0.0
        %v1382 = vsel %vm1362, %v1227, 0.0
        %v1383 = vsel %vm1363, %v1226, 0.0
        %v1384 = vsel %vm1364, %v1225, 0.0
        %v1385 = vpack.c.bf16 %v1366, %v1365
        %v1386 = vpack.c.bf16 %v1368, %v1367
        %v1387 = vpack.c.bf16 %v1370, %v1369
        %v1388 = vpack.c.bf16 %v1372, %v1371
        %v1389 = vpack.c.bf16 %v1374, %v1373
        %v1390 = vpack.c.bf16 %v1376, %v1375
        %v1391 = vpack.c.bf16 %v1378, %v1377
        %v1392 = vpack.c.bf16 %v1380, %v1379
        %v1393 = vpack.c.bf16 %v1382, %v1381
        %v1394 = vpack.c.bf16 %v1384, %v1383
        %vm1395 = vcmask 261120
        %v1398 = vsel %vm1395, %v1385, 0
        %v1400 = vsel %vm1395, %v1386, 0
        %v1402 = vsel %vm1395, %v1387, 0
        %v1404 = vsel %vm1395, %v1388, 0
        %v1406 = vsel %vm1395, %v1389, 0
        %v1408 = vsel %vm1395, %v1390, 0
        %v1410 = vsel %vm1395, %v1391, 0
        %v1412 = vsel %vm1395, %v1392, 0
        %v1414 = vsel %vm1395, %v1393, 0
        %v1416 = vsel %vm1395, %v1394, 0
        %v1427 = vunpack.c.l.b16 %v1398
        %v1428 = vunpack.c.h.b16 %v1398
        %v1429 = vunpack.c.l.b16 %v1400
        %v1430 = vunpack.c.h.b16 %v1400
        %v1431 = vunpack.c.l.b16 %v1402
        %v1432 = vunpack.c.h.b16 %v1402
        %v1433 = vunpack.c.l.b16 %v1404
        %v1434 = vunpack.c.h.b16 %v1404
        %v1435 = vunpack.c.l.b16 %v1406
        %v1436 = vunpack.c.h.b16 %v1406
        %v1437 = vunpack.c.l.b16 %v1408
        %v1438 = vunpack.c.h.b16 %v1408
        %v1439 = vunpack.c.l.b16 %v1410
        %v1440 = vunpack.c.h.b16 %v1410
        %v1441 = vunpack.c.l.b16 %v1412
        %v1442 = vunpack.c.h.b16 %v1412
        %v1443 = vunpack.c.l.b16 %v1414
        %v1444 = vunpack.c.h.b16 %v1414
        %v1445 = vunpack.c.l.b16 %v1416
        %v1446 = vunpack.c.h.b16 %v1416
        %v1447 = vpack.c.b16 %v1427, %v1427
        %v1448 = vpack.c.b16 %v1428, %v1428
        %v1449 = vpack.c.b16 %v1429, %v1429
        %v1450 = vpack.c.b16 %v1430, %v1430
        %v1451 = vpack.c.b16 %v1431, %v1431
        %v1452 = vpack.c.b16 %v1432, %v1432
        %v1453 = vpack.c.b16 %v1433, %v1433
        %v1454 = vpack.c.b16 %v1434, %v1434
        %v1455 = vpack.c.b16 %v1435, %v1435
        %v1456 = vpack.c.b16 %v1436, %v1436
        %v1457 = vpack.c.b16 %v1437, %v1437
        %v1458 = vpack.c.b16 %v1438, %v1438
        %v1459 = vpack.c.b16 %v1439, %v1439
        %v1460 = vpack.c.b16 %v1440, %v1440
        %v1461 = vpack.c.b16 %v1441, %v1441
        %v1462 = vpack.c.b16 %v1442, %v1442
        %v1463 = vpack.c.b16 %v1443, %v1443
        %v1464 = vpack.c.b16 %v1444, %v1444
        %v1465 = vpack.c.b16 %v1445, %v1445
        %v1466 = vpack.c.b16 %v1446, %v1446
        %1487 = vst [vmem:[#allocation2] sm:$0xf] %v1447
        %1488 = vst [vmem:[#allocation2 + $0xc] sm:$0xf] %v1448
        %1489 = vst [vmem:[#allocation2 + $0x18] sm:$0xf] %v1449
        %1490 = vst [vmem:[#allocation2 + $0x24] sm:$0xf] %v1450
        %1491 = vst [vmem:[#allocation2 + $0x30] sm:$0xf] %v1451
        %1492 = vst [vmem:[#allocation2 + $0x3c] sm:$0xf] %v1452
        %1493 = vst [vmem:[#allocation2 + $0x48] sm:$0xf] %v1453
        %1494 = vst [vmem:[#allocation2 + $0x54] sm:$0xf] %v1454
        %1495 = vst [vmem:[#allocation2 + $0x60] sm:$0xf] %v1455
        %1496 = vst [vmem:[#allocation2 + $0x6c] sm:$0xf] %v1456
        %1497 = vst [vmem:[#allocation2 + $0x78] sm:$0xf] %v1457
        %1498 = vst [vmem:[#allocation2 + $0x84] sm:$0xf] %v1458
        %1499 = vst [vmem:[#allocation2 + $0x90] sm:$0xf] %v1459
        %1500 = vst [vmem:[#allocation2 + $0x9c] sm:$0xf] %v1460
        %1501 = vst [vmem:[#allocation2 + $0xa8] sm:$0xf] %v1461
        %1502 = vst [vmem:[#allocation2 + $0xb4] sm:$0xf] %v1462
        %1503 = vst [vmem:[#allocation2 + $0xc0] sm:$0xf] %v1463
        %1504 = vst [vmem:[#allocation2 + $0xcc] sm:$0xf] %v1464
        %1505 = vst [vmem:[#allocation2 + $0xd8] sm:$0xf] %v1465
        %1506 = vst [vmem:[#allocation2 + $0xe4] sm:$0xf] %v1466
        %v1507 = vpack.c.bf16 %v945, %v944
        %v1508 = vpack.c.bf16 %v947, %v946
        %v1509 = vpack.c.bf16 %v949, %v948
        %v1510 = vpack.c.bf16 %v951, %v950
        %v1511 = vpack.c.bf16 %v953, %v952
        %v1512 = vpack.c.bf16 %v955, %v954
        %v1513 = vpack.c.bf16 %v957, %v956
        %v1514 = vpack.c.bf16 %v959, %v958
        %v1515 = vpack.c.bf16 %v961, %v960
        %v1516 = vpack.c.bf16 %v963, %v962
        %v1518 = vsel %vm1395, %v1507, 0
        %v1520 = vsel %vm1395, %v1508, 0
        %v1522 = vsel %vm1395, %v1509, 0
        %v1524 = vsel %vm1395, %v1510, 0
        %v1526 = vsel %vm1395, %v1511, 0
        %v1528 = vsel %vm1395, %v1512, 0
        %v1530 = vsel %vm1395, %v1513, 0
        %v1532 = vsel %vm1395, %v1514, 0
        %v1534 = vsel %vm1395, %v1515, 0
        %v1536 = vsel %vm1395, %v1516, 0
        %v1547 = vunpack.c.l.b16 %v1518
        %v1548 = vunpack.c.h.b16 %v1518
        %v1549 = vunpack.c.l.b16 %v1520
        %v1550 = vunpack.c.h.b16 %v1520
        %v1551 = vunpack.c.l.b16 %v1522
        %v1552 = vunpack.c.h.b16 %v1522
        %v1553 = vunpack.c.l.b16 %v1524
        %v1554 = vunpack.c.h.b16 %v1524
        %v1555 = vunpack.c.l.b16 %v1526
        %v1556 = vunpack.c.h.b16 %v1526
        %v1557 = vunpack.c.l.b16 %v1528
        %v1558 = vunpack.c.h.b16 %v1528
        %v1559 = vunpack.c.l.b16 %v1530
        %v1560 = vunpack.c.h.b16 %v1530
        %v1561 = vunpack.c.l.b16 %v1532
        %v1562 = vunpack.c.h.b16 %v1532
        %v1563 = vunpack.c.l.b16 %v1534
        %v1564 = vunpack.c.h.b16 %v1534
        %v1565 = vunpack.c.l.b16 %v1536
        %v1566 = vunpack.c.h.b16 %v1536
        %v1567 = vpack.c.b16 %v1547, %v1547
        %v1568 = vpack.c.b16 %v1548, %v1548
        %v1569 = vpack.c.b16 %v1549, %v1549
        %v1570 = vpack.c.b16 %v1550, %v1550
        %v1571 = vpack.c.b16 %v1551, %v1551
        %v1572 = vpack.c.b16 %v1552, %v1552
        %v1573 = vpack.c.b16 %v1553, %v1553
        %v1574 = vpack.c.b16 %v1554, %v1554
        %v1575 = vpack.c.b16 %v1555, %v1555
        %v1576 = vpack.c.b16 %v1556, %v1556
        %v1577 = vpack.c.b16 %v1557, %v1557
        %v1578 = vpack.c.b16 %v1558, %v1558
        %v1579 = vpack.c.b16 %v1559, %v1559
        %v1580 = vpack.c.b16 %v1560, %v1560
        %v1581 = vpack.c.b16 %v1561, %v1561
        %v1582 = vpack.c.b16 %v1562, %v1562
        %v1583 = vpack.c.b16 %v1563, %v1563
        %v1584 = vpack.c.b16 %v1564, %v1564
        %v1585 = vpack.c.b16 %v1565, %v1565
        %v1586 = vpack.c.b16 %v1566, %v1566
        %1607 = vst [vmem:[#allocation2 + $0x4] sm:$0xf] %v1567
        %1608 = vst [vmem:[#allocation2 + $0x10] sm:$0xf] %v1568
        %1609 = vst [vmem:[#allocation2 + $0x1c] sm:$0xf] %v1569
        %1610 = vst [vmem:[#allocation2 + $0x28] sm:$0xf] %v1570
        %1611 = vst [vmem:[#allocation2 + $0x34] sm:$0xf] %v1571
        %1612 = vst [vmem:[#allocation2 + $0x40] sm:$0xf] %v1572
        %1613 = vst [vmem:[#allocation2 + $0x4c] sm:$0xf] %v1573
        %1614 = vst [vmem:[#allocation2 + $0x58] sm:$0xf] %v1574
        %1615 = vst [vmem:[#allocation2 + $0x64] sm:$0xf] %v1575
        %1616 = vst [vmem:[#allocation2 + $0x70] sm:$0xf] %v1576
        %1617 = vst [vmem:[#allocation2 + $0x7c] sm:$0xf] %v1577
        %1618 = vst [vmem:[#allocation2 + $0x88] sm:$0xf] %v1578
        %1619 = vst [vmem:[#allocation2 + $0x94] sm:$0xf] %v1579
        %1620 = vst [vmem:[#allocation2 + $0xa0] sm:$0xf] %v1580
        %1621 = vst [vmem:[#allocation2 + $0xac] sm:$0xf] %v1581
        %1622 = vst [vmem:[#allocation2 + $0xb8] sm:$0xf] %v1582
        %1623 = vst [vmem:[#allocation2 + $0xc4] sm:$0xf] %v1583
        %1624 = vst [vmem:[#allocation2 + $0xd0] sm:$0xf] %v1584
        %1625 = vst [vmem:[#allocation2 + $0xdc] sm:$0xf] %v1585
        %1626 = vst [vmem:[#allocation2 + $0xe8] sm:$0xf] %v1586
        %v1627 = vrot.slane %v944, 1
        %v1628 = vrot.slane %v945, 1
        %v1629 = vrot.slane %v946, 1
        %v1630 = vrot.slane %v947, 1
        %v1631 = vrot.slane %v948, 1
        %v1632 = vrot.slane %v949, 1
        %v1633 = vrot.slane %v950, 1
        %v1634 = vrot.slane %v951, 1
        %v1635 = vrot.slane %v952, 1
        %v1636 = vrot.slane %v953, 1
        %v1637 = vrot.slane %v954, 1
        %v1638 = vrot.slane %v955, 1
        %v1639 = vrot.slane %v956, 1
        %v1640 = vrot.slane %v957, 1
        %v1641 = vrot.slane %v958, 1
        %v1642 = vrot.slane %v959, 1
        %v1643 = vrot.slane %v960, 1
        %v1644 = vrot.slane %v961, 1
        %v1645 = vrot.slane %v962, 1
        %v1646 = vrot.slane %v963, 1
        %vm1647 = vcmp.lt.s32.totalorder %v776, 7
        %v1648 = vsel %vm1647, %v1645, %v1646
        %v1649 = vsel %vm1647, %v1644, %v1645
        %v1650 = vsel %vm1647, %v1643, %v1644
        %v1651 = vsel %vm1647, %v1642, %v1643
        %v1652 = vsel %vm1647, %v1641, %v1642
        %v1653 = vsel %vm1647, %v1640, %v1641
        %v1654 = vsel %vm1647, %v1639, %v1640
        %v1655 = vsel %vm1647, %v1638, %v1639
        %v1656 = vsel %vm1647, %v1637, %v1638
        %v1657 = vsel %vm1647, %v1636, %v1637
        %v1658 = vsel %vm1647, %v1635, %v1636
        %v1659 = vsel %vm1647, %v1634, %v1635
        %v1660 = vsel %vm1647, %v1633, %v1634
        %v1661 = vsel %vm1647, %v1632, %v1633
        %v1662 = vsel %vm1647, %v1631, %v1632
        %v1663 = vsel %vm1647, %v1630, %v1631
        %v1664 = vsel %vm1647, %v1629, %v1630
        %v1665 = vsel %vm1647, %v1628, %v1629
        %v1666 = vsel %vm1647, %v1627, %v1628
        %v1667 = vsel %vm1647, %v1646, %v1627
        %v1668 = vadd.s32 %v1184, 1
        %v1669 = vadd.s32 %v1185, 1
        %v1670 = vadd.s32 %v1186, 1
        %v1671 = vadd.s32 %v1187, 1
        %v1672 = vadd.s32 %v1188, 1
        %v1673 = vadd.s32 %v1189, 1
        %v1674 = vadd.s32 %v1190, 1
        %v1675 = vadd.s32 %v1191, 1
        %v1676 = vadd.s32 %v1192, 1
        %v1677 = vadd.s32 %v1193, 1
        %v1678 = vadd.s32 %v1194, 1
        %v1679 = vadd.s32 %v1195, 1
        %v1680 = vadd.s32 %v1196, 1
        %v1681 = vadd.s32 %v1197, 1
        %v1682 = vadd.s32 %v1198, 1
        %v1683 = vadd.s32 %v1199, 1
        %v1684 = vadd.s32 %v1200, 1
        %v1685 = vadd.s32 %v1201, 1
        %v1686 = vadd.s32 %v1202, 1
        %v1687 = vadd.s32 %v1203, 1
        %vm1688 = vcmp.ge.s32.totalorder %v1668, 0
        %vm1689 = vcmp.ge.s32.totalorder %v1669, 0
        %vm1690 = vcmp.ge.s32.totalorder %v1670, 0
        %vm1691 = vcmp.ge.s32.totalorder %v1671, 0
        %vm1692 = vcmp.ge.s32.totalorder %v1672, 0
        %vm1693 = vcmp.ge.s32.totalorder %v1673, 0
        %vm1694 = vcmp.ge.s32.totalorder %v1674, 0
        %vm1695 = vcmp.ge.s32.totalorder %v1675, 0
        %vm1696 = vcmp.ge.s32.totalorder %v1676, 0
        %vm1697 = vcmp.ge.s32.totalorder %v1677, 0
        %vm1698 = vcmp.ge.s32.totalorder %v1678, 0
        %vm1699 = vcmp.ge.s32.totalorder %v1679, 0
        %vm1700 = vcmp.ge.s32.totalorder %v1680, 0
        %vm1701 = vcmp.ge.s32.totalorder %v1681, 0
        %vm1702 = vcmp.ge.s32.totalorder %v1682, 0
        %vm1703 = vcmp.ge.s32.totalorder %v1683, 0
        %vm1704 = vcmp.ge.s32.totalorder %v1684, 0
        %vm1705 = vcmp.ge.s32.totalorder %v1685, 0
        %vm1706 = vcmp.ge.s32.totalorder %v1686, 0
        %vm1707 = vcmp.ge.s32.totalorder %v1687, 0
        %vm1708 = vcmp.le.s32.totalorder %v1668, 15
        %vm1709 = vcmp.le.s32.totalorder %v1669, 15
        %vm1710 = vcmp.le.s32.totalorder %v1670, 15
        %vm1711 = vcmp.le.s32.totalorder %v1671, 15
        %vm1712 = vcmp.le.s32.totalorder %v1672, 15
        %vm1713 = vcmp.le.s32.totalorder %v1673, 15
        %vm1714 = vcmp.le.s32.totalorder %v1674, 15
        %vm1715 = vcmp.le.s32.totalorder %v1675, 15
        %vm1716 = vcmp.le.s32.totalorder %v1676, 15
        %vm1717 = vcmp.le.s32.totalorder %v1677, 15
        %vm1718 = vcmp.le.s32.totalorder %v1678, 15
        %vm1719 = vcmp.le.s32.totalorder %v1679, 15
        %vm1720 = vcmp.le.s32.totalorder %v1680, 15
        %vm1721 = vcmp.le.s32.totalorder %v1681, 15
        %vm1722 = vcmp.le.s32.totalorder %v1682, 15
        %vm1723 = vcmp.le.s32.totalorder %v1683, 15
        %vm1724 = vcmp.le.s32.totalorder %v1684, 15
        %vm1725 = vcmp.le.s32.totalorder %v1685, 15
        %vm1726 = vcmp.le.s32.totalorder %v1686, 15
        %vm1727 = vcmp.le.s32.totalorder %v1687, 15
        %vm1728 = vmand %vm1688, %vm1708
        %vm1729 = vmand %vm1689, %vm1709
        %vm1730 = vmand %vm1690, %vm1710
        %vm1731 = vmand %vm1691, %vm1711
        %vm1732 = vmand %vm1692, %vm1712
        %vm1733 = vmand %vm1693, %vm1713
        %vm1734 = vmand %vm1694, %vm1714
        %vm1735 = vmand %vm1695, %vm1715
        %vm1736 = vmand %vm1696, %vm1716
        %vm1737 = vmand %vm1697, %vm1717
        %vm1738 = vmand %vm1698, %vm1718
        %vm1739 = vmand %vm1699, %vm1719
        %vm1740 = vmand %vm1700, %vm1720
        %vm1741 = vmand %vm1701, %vm1721
        %vm1742 = vmand %vm1702, %vm1722
        %vm1743 = vmand %vm1703, %vm1723
        %vm1744 = vmand %vm1704, %vm1724
        %vm1745 = vmand %vm1705, %vm1725
        %vm1746 = vmand %vm1706, %vm1726
        %vm1747 = vmand %vm1707, %vm1727
        %v1748 = vsel %vm1728, 1, 0
        %v1749 = vsel %vm1729, 1, 0
        %v1750 = vsel %vm1730, 1, 0
        %v1751 = vsel %vm1731, 1, 0
        %v1752 = vsel %vm1732, 1, 0
        %v1753 = vsel %vm1733, 1, 0
        %v1754 = vsel %vm1734, 1, 0
        %v1755 = vsel %vm1735, 1, 0
        %v1756 = vsel %vm1736, 1, 0
        %v1757 = vsel %vm1737, 1, 0
        %v1758 = vsel %vm1738, 1, 0
        %v1759 = vsel %vm1739, 1, 0
        %v1760 = vsel %vm1740, 1, 0
        %v1761 = vsel %vm1741, 1, 0
        %v1762 = vsel %vm1742, 1, 0
        %v1763 = vsel %vm1743, 1, 0
        %v1764 = vsel %vm1744, 1, 0
        %v1765 = vsel %vm1745, 1, 0
        %v1766 = vsel %vm1746, 1, 0
        %v1767 = vsel %vm1747, 1, 0
        %vm1768 = vcmp.eq.s32.totalorder %v1748, 1
        %vm1769 = vcmp.eq.s32.totalorder %v1749, 1
        %vm1770 = vcmp.eq.s32.totalorder %v1750, 1
        %vm1771 = vcmp.eq.s32.totalorder %v1751, 1
        %vm1772 = vcmp.eq.s32.totalorder %v1752, 1
        %vm1773 = vcmp.eq.s32.totalorder %v1753, 1
        %vm1774 = vcmp.eq.s32.totalorder %v1754, 1
        %vm1775 = vcmp.eq.s32.totalorder %v1755, 1
        %vm1776 = vcmp.eq.s32.totalorder %v1756, 1
        %vm1777 = vcmp.eq.s32.totalorder %v1757, 1
        %vm1778 = vcmp.eq.s32.totalorder %v1758, 1
        %vm1779 = vcmp.eq.s32.totalorder %v1759, 1
        %vm1780 = vcmp.eq.s32.totalorder %v1760, 1
        %vm1781 = vcmp.eq.s32.totalorder %v1761, 1
        %vm1782 = vcmp.eq.s32.totalorder %v1762, 1
        %vm1783 = vcmp.eq.s32.totalorder %v1763, 1
        %vm1784 = vcmp.eq.s32.totalorder %v1764, 1
        %vm1785 = vcmp.eq.s32.totalorder %v1765, 1
        %vm1786 = vcmp.eq.s32.totalorder %v1766, 1
        %vm1787 = vcmp.eq.s32.totalorder %v1767, 1
        %v1788 = vsel %vm1768, %v1666, 0.0
        %v1789 = vsel %vm1769, %v1665, 0.0
        %v1790 = vsel %vm1770, %v1664, 0.0
        %v1791 = vsel %vm1771, %v1663, 0.0
        %v1792 = vsel %vm1772, %v1662, 0.0
        %v1793 = vsel %vm1773, %v1661, 0.0
        %v1794 = vsel %vm1774, %v1660, 0.0
        %v1795 = vsel %vm1775, %v1659, 0.0
        %v1796 = vsel %vm1776, %v1658, 0.0
        %v1797 = vsel %vm1777, %v1657, 0.0
        %v1798 = vsel %vm1778, %v1656, 0.0
        %v1799 = vsel %vm1779, %v1655, 0.0
        %v1800 = vsel %vm1780, %v1654, 0.0
        %v1801 = vsel %vm1781, %v1653, 0.0
        %v1802 = vsel %vm1782, %v1652, 0.0
        %v1803 = vsel %vm1783, %v1651, 0.0
        %v1804 = vsel %vm1784, %v1650, 0.0
        %v1805 = vsel %vm1785, %v1649, 0.0
        %v1806 = vsel %vm1786, %v1648, 0.0
        %v1807 = vsel %vm1787, %v1667, 0.0
        %v1808 = vpack.c.bf16 %v1789, %v1788
        %v1809 = vpack.c.bf16 %v1791, %v1790
        %v1810 = vpack.c.bf16 %v1793, %v1792
        %v1811 = vpack.c.bf16 %v1795, %v1794
        %v1812 = vpack.c.bf16 %v1797, %v1796
        %v1813 = vpack.c.bf16 %v1799, %v1798
        %v1814 = vpack.c.bf16 %v1801, %v1800
        %v1815 = vpack.c.bf16 %v1803, %v1802
        %v1816 = vpack.c.bf16 %v1805, %v1804
        %v1817 = vpack.c.bf16 %v1807, %v1806
        %v1819 = vsel %vm1395, %v1808, 0
        %v1821 = vsel %vm1395, %v1809, 0
        %v1823 = vsel %vm1395, %v1810, 0
        %v1825 = vsel %vm1395, %v1811, 0
        %v1827 = vsel %vm1395, %v1812, 0
        %v1829 = vsel %vm1395, %v1813, 0
        %v1831 = vsel %vm1395, %v1814, 0
        %v1833 = vsel %vm1395, %v1815, 0
        %v1835 = vsel %vm1395, %v1816, 0
        %v1837 = vsel %vm1395, %v1817, 0
        %v1848 = vunpack.c.l.b16 %v1819
        %v1849 = vunpack.c.h.b16 %v1819
        %v1850 = vunpack.c.l.b16 %v1821
        %v1851 = vunpack.c.h.b16 %v1821
        %v1852 = vunpack.c.l.b16 %v1823
        %v1853 = vunpack.c.h.b16 %v1823
        %v1854 = vunpack.c.l.b16 %v1825
        %v1855 = vunpack.c.h.b16 %v1825
        %v1856 = vunpack.c.l.b16 %v1827
        %v1857 = vunpack.c.h.b16 %v1827
        %v1858 = vunpack.c.l.b16 %v1829
        %v1859 = vunpack.c.h.b16 %v1829
        %v1860 = vunpack.c.l.b16 %v1831
        %v1861 = vunpack.c.h.b16 %v1831
        %v1862 = vunpack.c.l.b16 %v1833
        %v1863 = vunpack.c.h.b16 %v1833
        %v1864 = vunpack.c.l.b16 %v1835
        %v1865 = vunpack.c.h.b16 %v1835
        %v1866 = vunpack.c.l.b16 %v1837
        %v1867 = vunpack.c.h.b16 %v1837
        %v1868 = vpack.c.b16 %v1848, %v1848
        %v1869 = vpack.c.b16 %v1849, %v1849
        %v1870 = vpack.c.b16 %v1850, %v1850
        %v1871 = vpack.c.b16 %v1851, %v1851
        %v1872 = vpack.c.b16 %v1852, %v1852
        %v1873 = vpack.c.b16 %v1853, %v1853
        %v1874 = vpack.c.b16 %v1854, %v1854
        %v1875 = vpack.c.b16 %v1855, %v1855
        %v1876 = vpack.c.b16 %v1856, %v1856
        %v1877 = vpack.c.b16 %v1857, %v1857
        %v1878 = vpack.c.b16 %v1858, %v1858
        %v1879 = vpack.c.b16 %v1859, %v1859
        %v1880 = vpack.c.b16 %v1860, %v1860
        %v1881 = vpack.c.b16 %v1861, %v1861
        %v1882 = vpack.c.b16 %v1862, %v1862
        %v1883 = vpack.c.b16 %v1863, %v1863
        %v1884 = vpack.c.b16 %v1864, %v1864
        %v1885 = vpack.c.b16 %v1865, %v1865
        %v1886 = vpack.c.b16 %v1866, %v1866
        %v1887 = vpack.c.b16 %v1867, %v1867
        %1908 = vst [vmem:[#allocation2 + $0x8] sm:$0xf] %v1868
        %1909 = vst [vmem:[#allocation2 + $0x14] sm:$0xf] %v1869
        %1910 = vst [vmem:[#allocation2 + $0x20] sm:$0xf] %v1870
        %1911 = vst [vmem:[#allocation2 + $0x2c] sm:$0xf] %v1871
        %1912 = vst [vmem:[#allocation2 + $0x38] sm:$0xf] %v1872
        %1913 = vst [vmem:[#allocation2 + $0x44] sm:$0xf] %v1873
        %1914 = vst [vmem:[#allocation2 + $0x50] sm:$0xf] %v1874
        %1915 = vst [vmem:[#allocation2 + $0x5c] sm:$0xf] %v1875
        %1916 = vst [vmem:[#allocation2 + $0x68] sm:$0xf] %v1876
        %1917 = vst [vmem:[#allocation2 + $0x74] sm:$0xf] %v1877
        %1918 = vst [vmem:[#allocation2 + $0x80] sm:$0xf] %v1878
        %1919 = vst [vmem:[#allocation2 + $0x8c] sm:$0xf] %v1879
        %1920 = vst [vmem:[#allocation2 + $0x98] sm:$0xf] %v1880
        %1921 = vst [vmem:[#allocation2 + $0xa4] sm:$0xf] %v1881
        %1922 = vst [vmem:[#allocation2 + $0xb0] sm:$0xf] %v1882
        %1923 = vst [vmem:[#allocation2 + $0xbc] sm:$0xf] %v1883
        %1924 = vst [vmem:[#allocation2 + $0xc8] sm:$0xf] %v1884
        %1925 = vst [vmem:[#allocation2 + $0xd4] sm:$0xf] %v1885
        %1926 = vst [vmem:[#allocation2 + $0xe0] sm:$0xf] %v1886
        %1927 = vst [vmem:[#allocation2 + $0xec] sm:$0xf] %v1887
        %v1928 = vld [vmem:[#allocation2] sm:$0xff]
        %v1929 = vld [vmem:[#allocation2 + $0x8] sm:$0xf]
        %v1930 = vld [vmem:[#allocation2 + $0xc] sm:$0xff]
        %v1931 = vld [vmem:[#allocation2 + $0x14] sm:$0xf]
        %v1932 = vld [vmem:[#allocation2 + $0x18] sm:$0xff]
        %v1933 = vld [vmem:[#allocation2 + $0x20] sm:$0xf]
        %v1934 = vld [vmem:[#allocation2 + $0x24] sm:$0xff]
        %v1935 = vld [vmem:[#allocation2 + $0x2c] sm:$0xf]
        %v1936 = vld [vmem:[#allocation2 + $0x30] sm:$0xff]
        %v1937 = vld [vmem:[#allocation2 + $0x38] sm:$0xf]
        %v1938 = vld [vmem:[#allocation2 + $0x3c] sm:$0xff]
        %v1939 = vld [vmem:[#allocation2 + $0x44] sm:$0xf]
        %v1940 = vld [vmem:[#allocation2 + $0x48] sm:$0xff]
        %v1941 = vld [vmem:[#allocation2 + $0x50] sm:$0xf]
        %v1942 = vld [vmem:[#allocation2 + $0x54] sm:$0xff]
        %v1943 = vld [vmem:[#allocation2 + $0x5c] sm:$0xf]
        %v1944 = vld [vmem:[#allocation2 + $0x60] sm:$0xff]
        %v1945 = vld [vmem:[#allocation2 + $0x68] sm:$0xf]
        %v1946 = vld [vmem:[#allocation2 + $0x6c] sm:$0xff]
        %v1947 = vld [vmem:[#allocation2 + $0x74] sm:$0xf]
        %v1948 = vld [vmem:[#allocation2 + $0x78] sm:$0xff]
        %v1949 = vld [vmem:[#allocation2 + $0x80] sm:$0xf]
        %v1950 = vld [vmem:[#allocation2 + $0x84] sm:$0xff]
        %v1951 = vld [vmem:[#allocation2 + $0x8c] sm:$0xf]
        %v1952 = vld [vmem:[#allocation2 + $0x90] sm:$0xff]
        %v1953 = vld [vmem:[#allocation2 + $0x98] sm:$0xf]
        %v1954 = vld [vmem:[#allocation2 + $0x9c] sm:$0xff]
        %v1955 = vld [vmem:[#allocation2 + $0xa4] sm:$0xf]
        %v1956 = vld [vmem:[#allocation2 + $0xa8] sm:$0xff]
        %v1957 = vld [vmem:[#allocation2 + $0xb0] sm:$0xf]
        %v1958 = vld [vmem:[#allocation2 + $0xb4] sm:$0xff]
        %v1959 = vld [vmem:[#allocation2 + $0xbc] sm:$0xf]
        %v1960 = vld [vmem:[%s4] sm:$0xf]
        %v1961 = vld [vmem:[%s4 + $0x4] sm:$0xf]
        %v1962 = vld [vmem:[%s4 + $0x8] sm:$0xf]
        %v1963 = vld [vmem:[%s4 + $0xc] sm:$0xf]
        %v1964 = vld [vmem:[%s4 + $0x10] sm:$0xf]
        %v1965 = vld [vmem:[%s4 + $0x14] sm:$0xf]
        %v1966 = vld [vmem:[%s4 + $0x18] sm:$0xf]
        %v1967 = vld [vmem:[%s4 + $0x1c] sm:$0xf]
        %v1968 = vld [vmem:[%s4 + $0x20] sm:$0xf]
        %v1969 = vld [vmem:[%s4 + $0x24] sm:$0xf]
        %v1970 = vld [vmem:[%s4 + $0x28] sm:$0xf]
        %v1971 = vld [vmem:[%s4 + $0x2c] sm:$0xf]
        %v1972 = vld [vmem:[%s4 + $0x30] sm:$0xf]
        %v1973 = vld [vmem:[%s4 + $0x34] sm:$0xf]
        %v1974 = vld [vmem:[%s4 + $0x38] sm:$0xf]
        %v1975 = vld [vmem:[%s4 + $0x3c] sm:$0xf]
        %v1976 = vld [vmem:[%s4 + $0x40] sm:$0xf]
        %v1977 = vld [vmem:[%s4 + $0x44] sm:$0xf]
        %v1978 = vld [vmem:[%s4 + $0x48] sm:$0xf]
        %v1979 = vld [vmem:[%s4 + $0x4c] sm:$0xf]
        %v1980 = vld [vmem:[%s4 + $0x50] sm:$0xf]
        %v1981 = vld [vmem:[%s4 + $0x54] sm:$0xf]
        %v1982 = vld [vmem:[%s4 + $0x58] sm:$0xf]
        %v1983 = vld [vmem:[%s4 + $0x5c] sm:$0xf]
        %v1984 = vld [vmem:[%s4 + $0x60] sm:$0xf]
        %v1985 = vld [vmem:[%s4 + $0x64] sm:$0xf]
        %v1986 = vld [vmem:[%s4 + $0x68] sm:$0xf]
        %v1987 = vld [vmem:[%s4 + $0x6c] sm:$0xf]
        %v1988 = vld [vmem:[%s4 + $0x70] sm:$0xf]
        %v1989 = vld [vmem:[%s4 + $0x74] sm:$0xf]
        %v1990 = vld [vmem:[%s4 + $0x78] sm:$0xf]
        %v1991 = vld [vmem:[%s4 + $0x7c] sm:$0xf]
        %v1992 = vld [vmem:[%s4 + $0x80] sm:$0xf]
        %v1993 = vld [vmem:[%s4 + $0x84] sm:$0xf]
        %v1994 = vld [vmem:[%s4 + $0x88] sm:$0xf]
        %v1995 = vld [vmem:[%s4 + $0x8c] sm:$0xf]
        %v1996 = vld [vmem:[%s4 + $0x90] sm:$0xf]
        %v1997 = vld [vmem:[%s4 + $0x94] sm:$0xf]
        %v1998 = vld [vmem:[%s4 + $0x98] sm:$0xf]
        %v1999 = vld [vmem:[%s4 + $0x9c] sm:$0xf]
        %v2000 = vld [vmem:[%s4 + $0xa0] sm:$0xf]
        %v2001 = vld [vmem:[%s4 + $0xa4] sm:$0xf]
        %v2002 = vld [vmem:[%s4 + $0xa8] sm:$0xf]
        %v2003 = vld [vmem:[%s4 + $0xac] sm:$0xf]
        %v2004 = vld [vmem:[%s4 + $0xb0] sm:$0xf]
        %v2005 = vld [vmem:[%s4 + $0xb4] sm:$0xf]
        %v2006 = vld [vmem:[%s4 + $0xb8] sm:$0xf]
        %v2007 = vld [vmem:[%s4 + $0xbc] sm:$0xf]
        %v2008 = vld [vmem:[#allocation2 + $0xc0] sm:$0xff]
        %v2009 = vld [vmem:[#allocation2 + $0xc8] sm:$0xf]
        %v2010 = vld [vmem:[#allocation2 + $0xcc] sm:$0xff]
        %v2011 = vld [vmem:[#allocation2 + $0xd4] sm:$0xf]
        %s2012 = scalar_lea.vmem %s4, 192
        %v2013 = vld [vmem:[%s2012] sm:$0xf]
        %v2014 = vld [vmem:[%s2012 + $0x4] sm:$0xf]
        %v2015 = vld [vmem:[%s2012 + $0x8] sm:$0xf]
        %v2016 = vld [vmem:[%s2012 + $0xc] sm:$0xf]
        %v2017 = vld [vmem:[%s2012 + $0x10] sm:$0xf]
        %v2018 = vld [vmem:[%s2012 + $0x14] sm:$0xf]
        %v2019 = vld [vmem:[%s2012 + $0x18] sm:$0xf]
        %v2020 = vld [vmem:[%s2012 + $0x1c] sm:$0xf]
        %v2021 = vld [vmem:[%s2012 + $0x20] sm:$0xf]
        %v2022 = vld [vmem:[%s2012 + $0x24] sm:$0xf]
        %v2023 = vld [vmem:[%s2012 + $0x28] sm:$0xf]
        %v2024 = vld [vmem:[%s2012 + $0x2c] sm:$0xf]
        %v2025 = vld [vmem:[%s2012 + $0x30] sm:$0xf]
        %v2026 = vld [vmem:[%s2012 + $0x34] sm:$0xf]
        %v2027 = vld [vmem:[%s2012 + $0x38] sm:$0xf]
        %v2028 = vld [vmem:[%s2012 + $0x3c] sm:$0xf]
        %v2029 = vld [vmem:[%s2012 + $0x40] sm:$0xf]
        %v2030 = vld [vmem:[%s2012 + $0x44] sm:$0xf]
        %v2031 = vld [vmem:[%s2012 + $0x48] sm:$0xf]
        %v2032 = vld [vmem:[%s2012 + $0x4c] sm:$0xf]
        %v2033 = vld [vmem:[%s2012 + $0x50] sm:$0xf]
        %v2034 = vld [vmem:[%s2012 + $0x54] sm:$0xf]
        %v2035 = vld [vmem:[%s2012 + $0x58] sm:$0xf]
        %v2036 = vld [vmem:[%s2012 + $0x5c] sm:$0xf]
        %v2037 = vld [vmem:[%s2012 + $0x60] sm:$0xf]
        %v2038 = vld [vmem:[%s2012 + $0x64] sm:$0xf]
        %v2039 = vld [vmem:[%s2012 + $0x68] sm:$0xf]
        %v2040 = vld [vmem:[%s2012 + $0x6c] sm:$0xf]
        %v2041 = vld [vmem:[%s2012 + $0x70] sm:$0xf]
        %v2042 = vld [vmem:[%s2012 + $0x74] sm:$0xf]
        %v2043 = vld [vmem:[%s2012 + $0x78] sm:$0xf]
        %v2044 = vld [vmem:[%s2012 + $0x7c] sm:$0xf]
        %v2045 = vld [vmem:[%s2012 + $0x80] sm:$0xf]
        %v2046 = vld [vmem:[%s2012 + $0x84] sm:$0xf]
        %v2047 = vld [vmem:[%s2012 + $0x88] sm:$0xf]
        %v2048 = vld [vmem:[%s2012 + $0x8c] sm:$0xf]
        %v2049 = vld [vmem:[%s2012 + $0x90] sm:$0xf]
        %v2050 = vld [vmem:[%s2012 + $0x94] sm:$0xf]
        %v2051 = vld [vmem:[%s2012 + $0x98] sm:$0xf]
        %v2052 = vld [vmem:[%s2012 + $0x9c] sm:$0xf]
        %v2053 = vld [vmem:[%s2012 + $0xa0] sm:$0xf]
        %v2054 = vld [vmem:[%s2012 + $0xa4] sm:$0xf]
        %v2055 = vld [vmem:[%s2012 + $0xa8] sm:$0xf]
        %v2056 = vld [vmem:[%s2012 + $0xac] sm:$0xf]
        %v2057 = vld [vmem:[%s2012 + $0xb0] sm:$0xf]
        %v2058 = vld [vmem:[%s2012 + $0xb4] sm:$0xf]
        %v2059 = vld [vmem:[%s2012 + $0xb8] sm:$0xf]
        %v2060 = vld [vmem:[%s2012 + $0xbc] sm:$0xf]
        %v2093 = vunpack.c.l.b16 %v1932
        %v2094 = vunpack.c.h.b16 %v1932
        %v2095 = vunpack.c.l.b16 %v1933
        %v2096 = vunpack.c.l.b16 %v1934
        %v2097 = vunpack.c.h.b16 %v1934
        %v2098 = vunpack.c.l.b16 %v1935
        %v2099 = vunpack.c.l.b16 %v1936
        %v2100 = vunpack.c.h.b16 %v1936
        %v2101 = vunpack.c.l.b16 %v1937
        %v2102 = vunpack.c.l.b16 %v1938
        %v2103 = vunpack.c.h.b16 %v1938
        %v2104 = vunpack.c.l.b16 %v1939
        %v2105 = vunpack.c.l.b16 %v1940
        %v2106 = vunpack.c.h.b16 %v1940
        %v2107 = vunpack.c.l.b16 %v1941
        %v2108 = vunpack.c.l.b16 %v1942
        %v2109 = vunpack.c.h.b16 %v1942
        %v2110 = vunpack.c.l.b16 %v1943
        %v2111 = vunpack.c.l.b16 %v1944
        %v2112 = vunpack.c.h.b16 %v1944
        %v2113 = vunpack.c.l.b16 %v1945
        %v2114 = vunpack.c.l.b16 %v1946
        %v2115 = vunpack.c.h.b16 %v1946
        %v2116 = vunpack.c.l.b16 %v1947
        %v2117 = vunpack.c.l.b16 %v1948
        %v2118 = vunpack.c.h.b16 %v1948
        %v2119 = vunpack.c.l.b16 %v1949
        %v2120 = vunpack.c.l.b16 %v1950
        %v2121 = vunpack.c.h.b16 %v1950
        %v2122 = vunpack.c.l.b16 %v1951
        %v2123 = vunpack.c.l.b16 %v1952
        %v2124 = vunpack.c.h.b16 %v1952
        %v2125 = vunpack.c.l.b16 %v1953
        %v2126 = vunpack.c.l.b16 %v1954
        %v2127 = vunpack.c.h.b16 %v1954
        %v2128 = vunpack.c.l.b16 %v1955
        %v2129 = vunpack.c.l.b16 %v1956
        %v2130 = vunpack.c.h.b16 %v1956
        %v2131 = vunpack.c.l.b16 %v1957
        %v2132 = vunpack.c.l.b16 %v1958
        %v2133 = vunpack.c.h.b16 %v1958
        %v2134 = vunpack.c.l.b16 %v1959
        %v2135 = vunpack.c.l.b16 %v2008
        %v2136 = vunpack.c.h.b16 %v2008
        %v2137 = vunpack.c.l.b16 %v2009
        %v2138 = vunpack.c.l.b16 %v2010
        %v2139 = vunpack.c.h.b16 %v2010
        %v2140 = vunpack.c.l.b16 %v2011
        %v2141 = vpack.c.b16 %v2096, %v2093
        %v2142 = vpack.c.b16 %v2097, %v2094
        %v2143 = vpack.c.b16 %v2098, %v2095
        %v2144 = vpack.c.b16 %v2102, %v2099
        %v2145 = vpack.c.b16 %v2103, %v2100
        %v2146 = vpack.c.b16 %v2104, %v2101
        %v2147 = vpack.c.b16 %v2108, %v2105
        %v2148 = vpack.c.b16 %v2109, %v2106
        %v2149 = vpack.c.b16 %v2110, %v2107
        %v2150 = vpack.c.b16 %v2114, %v2111
        %v2151 = vpack.c.b16 %v2115, %v2112
        %v2152 = vpack.c.b16 %v2116, %v2113
        %v2153 = vpack.c.b16 %v2120, %v2117
        %v2154 = vpack.c.b16 %v2121, %v2118
        %v2155 = vpack.c.b16 %v2122, %v2119
        %v2156 = vpack.c.b16 %v2126, %v2123
        %v2157 = vpack.c.b16 %v2127, %v2124
        %v2158 = vpack.c.b16 %v2128, %v2125
        %v2159 = vpack.c.b16 %v2132, %v2129
        %v2160 = vpack.c.b16 %v2133, %v2130
        %v2161 = vpack.c.b16 %v2134, %v2131
        %v2162 = vpack.c.b16 %v2138, %v2135
        %v2163 = vpack.c.b16 %v2139, %v2136
        %v2164 = vpack.c.b16 %v2140, %v2137
        %v2237 = vunpack.c.l.b16 %v2013
        %v2238 = vunpack.c.l.b16 %v2014
        %v2239 = vunpack.c.l.b16 %v2015
        %v2240 = vunpack.c.l.b16 %v2016
        %v2241 = vunpack.c.l.b16 %v2017
        %v2242 = vunpack.c.l.b16 %v2018
        %v2243 = vunpack.c.l.b16 %v2019
        %v2244 = vunpack.c.l.b16 %v2020
        %v2245 = vunpack.c.l.b16 %v2021
        %v2246 = vunpack.c.l.b16 %v2022
        %v2247 = vunpack.c.l.b16 %v2023
        %v2248 = vunpack.c.l.b16 %v2024
        %v2249 = vunpack.c.l.b16 %v2025
        %v2250 = vunpack.c.l.b16 %v2026
        %v2251 = vunpack.c.l.b16 %v2027
        %v2252 = vunpack.c.l.b16 %v2028
        %v2253 = vunpack.c.l.b16 %v2029
        %v2254 = vunpack.c.l.b16 %v2030
        %v2255 = vunpack.c.l.b16 %v2031
        %v2256 = vunpack.c.l.b16 %v2032
        %v2257 = vunpack.c.l.b16 %v2033
        %v2258 = vunpack.c.l.b16 %v2034
        %v2259 = vunpack.c.l.b16 %v2035
        %v2260 = vunpack.c.l.b16 %v2036
        %v2261 = vunpack.c.l.b16 %v2037
        %v2262 = vunpack.c.l.b16 %v2038
        %v2263 = vunpack.c.l.b16 %v2039
        %v2264 = vunpack.c.l.b16 %v2040
        %v2265 = vunpack.c.l.b16 %v2041
        %v2266 = vunpack.c.l.b16 %v2042
        %v2267 = vunpack.c.l.b16 %v2043
        %v2268 = vunpack.c.l.b16 %v2044
        %v2269 = vunpack.c.l.b16 %v2045
        %v2270 = vunpack.c.l.b16 %v2046
        %v2271 = vunpack.c.l.b16 %v2047
        %v2272 = vunpack.c.l.b16 %v2048
        %v2273 = vunpack.c.l.b16 %v2049
        %v2274 = vunpack.c.l.b16 %v2050
        %v2275 = vunpack.c.l.b16 %v2051
        %v2276 = vunpack.c.l.b16 %v2052
        %v2277 = vunpack.c.l.b16 %v2053
        %v2278 = vunpack.c.l.b16 %v2054
        %v2279 = vunpack.c.l.b16 %v2055
        %v2280 = vunpack.c.l.b16 %v2056
        %v2281 = vunpack.c.l.b16 %v2057
        %v2282 = vunpack.c.l.b16 %v2058
        %v2283 = vunpack.c.l.b16 %v2059
        %v2284 = vunpack.c.l.b16 %v2060
        %v2285 = vpack.c.b16 %v2238, %v2237
        %v2286 = vpack.c.b16 %v2240, %v2239
        %v2287 = vpack.c.b16 %v2242, %v2241
        %v2288 = vpack.c.b16 %v2244, %v2243
        %v2289 = vpack.c.b16 %v2246, %v2245
        %v2290 = vpack.c.b16 %v2248, %v2247
        %v2291 = vpack.c.b16 %v2250, %v2249
        %v2292 = vpack.c.b16 %v2252, %v2251
        %v2293 = vpack.c.b16 %v2254, %v2253
        %v2294 = vpack.c.b16 %v2256, %v2255
        %v2295 = vpack.c.b16 %v2258, %v2257
        %v2296 = vpack.c.b16 %v2260, %v2259
        %v2297 = vpack.c.b16 %v2262, %v2261
        %v2298 = vpack.c.b16 %v2264, %v2263
        %v2299 = vpack.c.b16 %v2266, %v2265
        %v2300 = vpack.c.b16 %v2268, %v2267
        %v2301 = vpack.c.b16 %v2270, %v2269
        %v2302 = vpack.c.b16 %v2272, %v2271
        %v2303 = vpack.c.b16 %v2274, %v2273
        %v2304 = vpack.c.b16 %v2276, %v2275
        %v2305 = vpack.c.b16 %v2278, %v2277
        %v2306 = vpack.c.b16 %v2280, %v2279
        %v2307 = vpack.c.b16 %v2282, %v2281
        %v2308 = vpack.c.b16 %v2284, %v2283
        %2333 = vmatprep.subr.bf16.mxu0 0
        %2334 = vmatpush1.bf16.msra.mxu0 %v2292
        %2335 = vmatprep.subr.bf16.mxu0 0
        %2336 = vmatpush1.bf16.msra.mxu0 %v2291
        %2337 = vmatprep.subr.bf16.mxu0 0
        %2338 = vmatpush1.bf16.msra.mxu0 %v2290
        %2339 = vmatprep.subr.bf16.mxu0 0
        %2340 = vmatpush1.bf16.msra.mxu0 %v2289
        %2341 = vmatprep.subr.bf16.mxu0 0
        %2342 = vmatpush1.bf16.msra.mxu0 %v2288
        %2343 = vmatprep.subr.bf16.mxu0 0
        %2344 = vmatpush1.bf16.msra.mxu0 %v2287
        %2345 = vmatprep.subr.bf16.mxu0 0
        %2346 = vmatpush1.bf16.msra.mxu0 %v2286
        %2347 = vmatprep.subr.bf16.mxu0 0
        %2348 = vmatpush1.bf16.msra.mxu0 %v2285
        %2349 = vmatprep.subr.bf16.mxu0 0
        %2350 = vmatpush2.bf16.msra.mxu0 %v2300
        %2351 = vmatprep.subr.bf16.mxu0 0
        %2352 = vmatpush2.bf16.msra.mxu0 %v2299
        %2353 = vmatprep.subr.bf16.mxu0 0
        %2354 = vmatpush2.bf16.msra.mxu0 %v2298
        %2355 = vmatprep.subr.bf16.mxu0 0
        %2356 = vmatpush2.bf16.msra.mxu0 %v2297
        %2357 = vmatprep.subr.bf16.mxu0 0
        %2358 = vmatpush2.bf16.msra.mxu0 %v2296
        %2359 = vmatprep.subr.bf16.mxu0 0
        %2360 = vmatpush2.bf16.msra.mxu0 %v2295
        %2361 = vmatprep.subr.bf16.mxu0 0
        %2362 = vmatpush2.bf16.msra.mxu0 %v2294
        %2363 = vmatprep.subr.bf16.mxu0 0
        %2364 = vmatpush2.bf16.msra.mxu0 %v2293
        %2365 = vmatprep.mubr.bf16.mxu0 %v2142
        %2366 = vmatmul.mubr.bf16.gmra.mxu0 %v2141
        %v2367 = vpop.f32.mrf.mxu0
        %v2368 = vadd.f32 0.0, %v2367
        %v2369 = vpop.f32.mrf.mxu0
        %v2370 = vpop.f32.mrf.mxu0
        %v2371 = vadd.f32 0.0, %v2370
        %v2372 = vpop.f32.mrf.mxu0
        %2373 = vmatprep.mubr.bf16.mxu0 %v2145
        %2374 = vmatmul.mubr.bf16.gmra.mxu0 %v2144
        %v2375 = vpop.f32.mrf.mxu0
        %v2376 = vadd.f32 0.0, %v2375
        %v2377 = vpop.f32.mrf.mxu0
        %v2378 = vpop.f32.mrf.mxu0
        %v2379 = vadd.f32 0.0, %v2378
        %v2380 = vpop.f32.mrf.mxu0
        %2381 = vmatprep.mubr.bf16.mxu0 %v2148
        %2382 = vmatmul.mubr.bf16.gmra.mxu0 %v2147
        %v2383 = vpop.f32.mrf.mxu0
        %v2384 = vadd.f32 0.0, %v2383
        %v2385 = vpop.f32.mrf.mxu0
        %v2386 = vpop.f32.mrf.mxu0
        %v2387 = vadd.f32 0.0, %v2386
        %v2388 = vpop.f32.mrf.mxu0
        %2389 = vmatprep.mubr.bf16.mxu0 %v2151
        %2390 = vmatmul.mubr.bf16.gmra.mxu0 %v2150
        %v2391 = vpop.f32.mrf.mxu0
        %v2392 = vadd.f32 0.0, %v2391
        %v2393 = vpop.f32.mrf.mxu0
        %v2394 = vpop.f32.mrf.mxu0
        %v2395 = vadd.f32 0.0, %v2394
        %v2396 = vpop.f32.mrf.mxu0
        %2397 = vmatprep.mubr.bf16.mxu0 %v2154
        %2398 = vmatmul.mubr.bf16.gmra.mxu0 %v2153
        %v2399 = vpop.f32.mrf.mxu0
        %v2400 = vadd.f32 0.0, %v2399
        %v2401 = vpop.f32.mrf.mxu0
        %v2402 = vpop.f32.mrf.mxu0
        %v2403 = vadd.f32 0.0, %v2402
        %v2404 = vpop.f32.mrf.mxu0
        %2405 = vmatprep.mubr.bf16.mxu0 %v2157
        %2406 = vmatmul.mubr.bf16.gmra.mxu0 %v2156
        %v2407 = vpop.f32.mrf.mxu0
        %v2408 = vadd.f32 0.0, %v2407
        %v2409 = vpop.f32.mrf.mxu0
        %v2410 = vpop.f32.mrf.mxu0
        %v2411 = vadd.f32 0.0, %v2410
        %v2412 = vpop.f32.mrf.mxu0
        %2413 = vmatprep.mubr.bf16.mxu0 %v2160
        %2414 = vmatmul.mubr.bf16.gmra.mxu0 %v2159
        %v2415 = vpop.f32.mrf.mxu0
        %v2416 = vadd.f32 0.0, %v2415
        %v2417 = vpop.f32.mrf.mxu0
        %v2418 = vpop.f32.mrf.mxu0
        %v2419 = vadd.f32 0.0, %v2418
        %v2420 = vpop.f32.mrf.mxu0
        %2421 = vmatprep.mubr.bf16.mxu0 %v2163
        %2422 = vmatmul.mubr.bf16.gmra.mxu0 %v2162
        %v2423 = vpop.f32.mrf.mxu0
        %v2424 = vadd.f32 0.0, %v2423
        %v2425 = vpop.f32.mrf.mxu0
        %v2426 = vpop.f32.mrf.mxu0
        %v2427 = vadd.f32 0.0, %v2426
        %v2428 = vpop.f32.mrf.mxu0
        %2429 = vdwg.mxu0
        %2430 = vmatprep.subr.bf16.mxu0 0
        %2431 = vmatpush1.bf16.msra.mxu0 %v2308
        %2432 = vmatprep.subr.bf16.mxu0 0
        %2433 = vmatpush1.bf16.msra.mxu0 %v2307
        %2434 = vmatprep.subr.bf16.mxu0 0
        %2435 = vmatpush1.bf16.msra.mxu0 %v2306
        %2436 = vmatprep.subr.bf16.mxu0 0
        %2437 = vmatpush1.bf16.msra.mxu0 %v2305
        %2438 = vmatprep.subr.bf16.mxu0 0
        %2439 = vmatpush1.bf16.msra.mxu0 %v2304
        %2440 = vmatprep.subr.bf16.mxu0 0
        %2441 = vmatpush1.bf16.msra.mxu0 %v2303
        %2442 = vmatprep.subr.bf16.mxu0 0
        %2443 = vmatpush1.bf16.msra.mxu0 %v2302
        %2444 = vmatprep.subr.bf16.mxu0 0
        %2445 = vmatpush1.bf16.msra.mxu0 %v2301
        %2446 = vmatprep.subr.bf16.mxu0 0
        %2447 = vmatpush2.bf16.msra.mxu0 0
        %2448 = vmatprep.subr.bf16.mxu0 0
        %2449 = vmatpush2.bf16.msra.mxu0 0
        %2450 = vmatprep.subr.bf16.mxu0 0
        %2451 = vmatpush2.bf16.msra.mxu0 0
        %2452 = vmatprep.subr.bf16.mxu0 0
        %2453 = vmatpush2.bf16.msra.mxu0 0
        %2454 = vmatprep.subr.bf16.mxu0 0
        %2455 = vmatpush2.bf16.msra.mxu0 0
        %2456 = vmatprep.subr.bf16.mxu0 0
        %2457 = vmatpush2.bf16.msra.mxu0 0
        %2458 = vmatprep.subr.bf16.mxu0 0
        %2459 = vmatpush2.bf16.msra.mxu0 0
        %2460 = vmatprep.subr.bf16.mxu0 0
        %2461 = vmatpush2.bf16.msra.mxu0 0
        %2462 = vmatprep.mubr.bf16.mxu0 0
        %2463 = vmatmul.mubr.bf16.gmra.mxu0 %v2143
        %v2464 = vpop.f32.mrf.mxu0
        %v2465 = vadd.f32 %v2368, %v2464
        %v2466 = vpop.f32.mrf.mxu0
        %v2467 = vpop.f32.mrf.mxu0
        %v2468 = vadd.f32 %v2371, %v2467
        %v2469 = vpop.f32.mrf.mxu0
        %2470 = vmatprep.mubr.bf16.mxu0 0
        %2471 = vmatmul.mubr.bf16.gmra.mxu0 %v2146
        %v2472 = vpop.f32.mrf.mxu0
        %v2473 = vadd.f32 %v2376, %v2472
        %v2474 = vpop.f32.mrf.mxu0
        %v2475 = vpop.f32.mrf.mxu0
        %v2476 = vadd.f32 %v2379, %v2475
        %v2477 = vpop.f32.mrf.mxu0
        %2478 = vmatprep.mubr.bf16.mxu0 0
        %2479 = vmatmul.mubr.bf16.gmra.mxu0 %v2149
        %v2480 = vpop.f32.mrf.mxu0
        %v2481 = vadd.f32 %v2384, %v2480
        %v2482 = vpop.f32.mrf.mxu0
        %v2483 = vpop.f32.mrf.mxu0
        %v2484 = vadd.f32 %v2387, %v2483
        %v2485 = vpop.f32.mrf.mxu0
        %2486 = vmatprep.mubr.bf16.mxu0 0
        %2487 = vmatmul.mubr.bf16.gmra.mxu0 %v2152
        %v2488 = vpop.f32.mrf.mxu0
        %v2489 = vadd.f32 %v2392, %v2488
        %v2490 = vpop.f32.mrf.mxu0
        %v2491 = vpop.f32.mrf.mxu0
        %v2492 = vadd.f32 %v2395, %v2491
        %v2493 = vpop.f32.mrf.mxu0
        %2494 = vmatprep.mubr.bf16.mxu0 0
        %2495 = vmatmul.mubr.bf16.gmra.mxu0 %v2155
        %v2496 = vpop.f32.mrf.mxu0
        %v2497 = vadd.f32 %v2400, %v2496
        %v2498 = vpop.f32.mrf.mxu0
        %v2499 = vpop.f32.mrf.mxu0
        %v2500 = vadd.f32 %v2403, %v2499
        %v2501 = vpop.f32.mrf.mxu0
        %2502 = vmatprep.mubr.bf16.mxu0 0
        %2503 = vmatmul.mubr.bf16.gmra.mxu0 %v2158
        %v2504 = vpop.f32.mrf.mxu0
        %v2505 = vadd.f32 %v2408, %v2504
        %v2506 = vpop.f32.mrf.mxu0
        %v2507 = vpop.f32.mrf.mxu0
        %v2508 = vadd.f32 %v2411, %v2507
        %v2509 = vpop.f32.mrf.mxu0
        %2510 = vmatprep.mubr.bf16.mxu0 0
        %2511 = vmatmul.mubr.bf16.gmra.mxu0 %v2161
        %v2512 = vpop.f32.mrf.mxu0
        %v2513 = vadd.f32 %v2416, %v2512
        %v2514 = vpop.f32.mrf.mxu0
        %v2515 = vpop.f32.mrf.mxu0
        %v2516 = vadd.f32 %v2419, %v2515
        %v2517 = vpop.f32.mrf.mxu0
        %2518 = vmatprep.mubr.bf16.mxu0 0
        %2519 = vmatmul.mubr.bf16.gmra.mxu0 %v2164
        %v2520 = vpop.f32.mrf.mxu0
        %v2521 = vadd.f32 %v2424, %v2520
        %v2522 = vpop.f32.mrf.mxu0
        %v2523 = vpop.f32.mrf.mxu0
        %v2524 = vadd.f32 %v2427, %v2523
        %v2525 = vpop.f32.mrf.mxu0
        %2526 = vdwg.mxu0
        %v2531 = vunpack.c.l.b16 %v1928
        %v2532 = vunpack.c.h.b16 %v1928
        %v2533 = vunpack.c.l.b16 %v1929
        %v2534 = vunpack.c.l.b16 %v1930
        %v2535 = vunpack.c.h.b16 %v1930
        %v2536 = vunpack.c.l.b16 %v1931
        %v2537 = vpack.c.b16 %v2534, %v2531
        %v2538 = vpack.c.b16 %v2535, %v2532
        %v2539 = vpack.c.b16 %v2536, %v2533
        %v2591 = vunpack.c.l.b16 %v1960
        %v2592 = vunpack.c.l.b16 %v1961
        %v2593 = vunpack.c.l.b16 %v1962
        %v2594 = vunpack.c.l.b16 %v1963
        %v2595 = vunpack.c.l.b16 %v1964
        %v2596 = vunpack.c.l.b16 %v1965
        %v2597 = vunpack.c.l.b16 %v1966
        %v2598 = vunpack.c.l.b16 %v1967
        %v2599 = vunpack.c.l.b16 %v1968
        %v2600 = vunpack.c.l.b16 %v1969
        %v2601 = vunpack.c.l.b16 %v1970
        %v2602 = vunpack.c.l.b16 %v1971
        %v2603 = vunpack.c.l.b16 %v1972
        %v2604 = vunpack.c.l.b16 %v1973
        %v2605 = vunpack.c.l.b16 %v1974
        %v2606 = vunpack.c.l.b16 %v1975
        %v2607 = vunpack.c.l.b16 %v1976
        %v2608 = vunpack.c.l.b16 %v1977
        %v2609 = vunpack.c.l.b16 %v1978
        %v2610 = vunpack.c.l.b16 %v1979
        %v2611 = vunpack.c.l.b16 %v1980
        %v2612 = vunpack.c.l.b16 %v1981
        %v2613 = vunpack.c.l.b16 %v1982
        %v2614 = vunpack.c.l.b16 %v1983
        %v2615 = vunpack.c.l.b16 %v1984
        %v2616 = vunpack.c.l.b16 %v1985
        %v2617 = vunpack.c.l.b16 %v1986
        %v2618 = vunpack.c.l.b16 %v1987
        %v2619 = vunpack.c.l.b16 %v1988
        %v2620 = vunpack.c.l.b16 %v1989
        %v2621 = vunpack.c.l.b16 %v1990
        %v2622 = vunpack.c.l.b16 %v1991
        %v2623 = vunpack.c.l.b16 %v1992
        %v2624 = vunpack.c.l.b16 %v1993
        %v2625 = vunpack.c.l.b16 %v1994
        %v2626 = vunpack.c.l.b16 %v1995
        %v2627 = vunpack.c.l.b16 %v1996
        %v2628 = vunpack.c.l.b16 %v1997
        %v2629 = vunpack.c.l.b16 %v1998
        %v2630 = vunpack.c.l.b16 %v1999
        %v2631 = vunpack.c.l.b16 %v2000
        %v2632 = vunpack.c.l.b16 %v2001
        %v2633 = vunpack.c.l.b16 %v2002
        %v2634 = vunpack.c.l.b16 %v2003
        %v2635 = vunpack.c.l.b16 %v2004
        %v2636 = vunpack.c.l.b16 %v2005
        %v2637 = vunpack.c.l.b16 %v2006
        %v2638 = vunpack.c.l.b16 %v2007
        %v2639 = vpack.c.b16 %v2592, %v2591
        %v2640 = vpack.c.b16 %v2594, %v2593
        %v2641 = vpack.c.b16 %v2596, %v2595
        %v2642 = vpack.c.b16 %v2598, %v2597
        %v2643 = vpack.c.b16 %v2600, %v2599
        %v2644 = vpack.c.b16 %v2602, %v2601
        %v2645 = vpack.c.b16 %v2604, %v2603
        %v2646 = vpack.c.b16 %v2606, %v2605
        %v2647 = vpack.c.b16 %v2608, %v2607
        %v2648 = vpack.c.b16 %v2610, %v2609
        %v2649 = vpack.c.b16 %v2612, %v2611
        %v2650 = vpack.c.b16 %v2614, %v2613
        %v2651 = vpack.c.b16 %v2616, %v2615
        %v2652 = vpack.c.b16 %v2618, %v2617
        %v2653 = vpack.c.b16 %v2620, %v2619
        %v2654 = vpack.c.b16 %v2622, %v2621
        %v2655 = vpack.c.b16 %v2624, %v2623
        %v2656 = vpack.c.b16 %v2626, %v2625
        %v2657 = vpack.c.b16 %v2628, %v2627
        %v2658 = vpack.c.b16 %v2630, %v2629
        %v2659 = vpack.c.b16 %v2632, %v2631
        %v2660 = vpack.c.b16 %v2634, %v2633
        %v2661 = vpack.c.b16 %v2636, %v2635
        %v2662 = vpack.c.b16 %v2638, %v2637
        %2687 = vmatprep.subr.bf16.mxu0 0
        %2688 = vmatpush1.bf16.msra.mxu0 %v2646
        %2689 = vmatprep.subr.bf16.mxu0 0
        %2690 = vmatpush1.bf16.msra.mxu0 %v2645
        %2691 = vmatprep.subr.bf16.mxu0 0
        %2692 = vmatpush1.bf16.msra.mxu0 %v2644
        %2693 = vmatprep.subr.bf16.mxu0 0
        %2694 = vmatpush1.bf16.msra.mxu0 %v2643
        %2695 = vmatprep.subr.bf16.mxu0 0
        %2696 = vmatpush1.bf16.msra.mxu0 %v2642
        %2697 = vmatprep.subr.bf16.mxu0 0
        %2698 = vmatpush1.bf16.msra.mxu0 %v2641
        %2699 = vmatprep.subr.bf16.mxu0 0
        %2700 = vmatpush1.bf16.msra.mxu0 %v2640
        %2701 = vmatprep.subr.bf16.mxu0 0
        %2702 = vmatpush1.bf16.msra.mxu0 %v2639
        %2703 = vmatprep.subr.bf16.mxu0 0
        %2704 = vmatpush2.bf16.msra.mxu0 %v2654
        %2705 = vmatprep.subr.bf16.mxu0 0
        %2706 = vmatpush2.bf16.msra.mxu0 %v2653
        %2707 = vmatprep.subr.bf16.mxu0 0
        %2708 = vmatpush2.bf16.msra.mxu0 %v2652
        %2709 = vmatprep.subr.bf16.mxu0 0
        %2710 = vmatpush2.bf16.msra.mxu0 %v2651
        %2711 = vmatprep.subr.bf16.mxu0 0
        %2712 = vmatpush2.bf16.msra.mxu0 %v2650
        %2713 = vmatprep.subr.bf16.mxu0 0
        %2714 = vmatpush2.bf16.msra.mxu0 %v2649
        %2715 = vmatprep.subr.bf16.mxu0 0
        %2716 = vmatpush2.bf16.msra.mxu0 %v2648
        %2717 = vmatprep.subr.bf16.mxu0 0
        %2718 = vmatpush2.bf16.msra.mxu0 %v2647
        %2719 = vmatprep.mubr.bf16.mxu0 %v2538
        %2720 = vmatmul.mubr.bf16.gmra.mxu0 %v2537
        %v2721 = vpop.f32.mrf.mxu0
        %v2722 = vadd.f32 %v2465, %v2721
        %v2723 = vpop.f32.mrf.mxu0
        %v2724 = vpop.f32.mrf.mxu0
        %v2725 = vadd.f32 %v2468, %v2724
        %v2726 = vpop.f32.mrf.mxu0
        %2727 = vmatprep.mubr.bf16.mxu0 %v2142
        %2728 = vmatmul.mubr.bf16.gmra.mxu0 %v2141
        %v2729 = vpop.f32.mrf.mxu0
        %v2730 = vadd.f32 %v2473, %v2729
        %v2731 = vpop.f32.mrf.mxu0
        %v2732 = vpop.f32.mrf.mxu0
        %v2733 = vadd.f32 %v2476, %v2732
        %v2734 = vpop.f32.mrf.mxu0
        %2735 = vmatprep.mubr.bf16.mxu0 %v2145
        %2736 = vmatmul.mubr.bf16.gmra.mxu0 %v2144
        %v2737 = vpop.f32.mrf.mxu0
        %v2738 = vadd.f32 %v2481, %v2737
        %v2739 = vpop.f32.mrf.mxu0
        %v2740 = vpop.f32.mrf.mxu0
        %v2741 = vadd.f32 %v2484, %v2740
        %v2742 = vpop.f32.mrf.mxu0
        %2743 = vmatprep.mubr.bf16.mxu0 %v2148
        %2744 = vmatmul.mubr.bf16.gmra.mxu0 %v2147
        %v2745 = vpop.f32.mrf.mxu0
        %v2746 = vadd.f32 %v2489, %v2745
        %v2747 = vpop.f32.mrf.mxu0
        %v2748 = vpop.f32.mrf.mxu0
        %v2749 = vadd.f32 %v2492, %v2748
        %v2750 = vpop.f32.mrf.mxu0
        %2751 = vmatprep.mubr.bf16.mxu0 %v2151
        %2752 = vmatmul.mubr.bf16.gmra.mxu0 %v2150
        %v2753 = vpop.f32.mrf.mxu0
        %v2754 = vadd.f32 %v2497, %v2753
        %v2755 = vpop.f32.mrf.mxu0
        %v2756 = vpop.f32.mrf.mxu0
        %v2757 = vadd.f32 %v2500, %v2756
        %v2758 = vpop.f32.mrf.mxu0
        %2759 = vmatprep.mubr.bf16.mxu0 %v2154
        %2760 = vmatmul.mubr.bf16.gmra.mxu0 %v2153
        %v2761 = vpop.f32.mrf.mxu0
        %v2762 = vadd.f32 %v2505, %v2761
        %v2763 = vpop.f32.mrf.mxu0
        %v2764 = vpop.f32.mrf.mxu0
        %v2765 = vadd.f32 %v2508, %v2764
        %v2766 = vpop.f32.mrf.mxu0
        %2767 = vmatprep.mubr.bf16.mxu0 %v2157
        %2768 = vmatmul.mubr.bf16.gmra.mxu0 %v2156
        %v2769 = vpop.f32.mrf.mxu0
        %v2770 = vadd.f32 %v2513, %v2769
        %v2771 = vpop.f32.mrf.mxu0
        %v2772 = vpop.f32.mrf.mxu0
        %v2773 = vadd.f32 %v2516, %v2772
        %v2774 = vpop.f32.mrf.mxu0
        %2775 = vmatprep.mubr.bf16.mxu0 %v2160
        %2776 = vmatmul.mubr.bf16.gmra.mxu0 %v2159
        %v2777 = vpop.f32.mrf.mxu0
        %v2778 = vadd.f32 %v2521, %v2777
        %v2779 = vpop.f32.mrf.mxu0
        %v2780 = vpop.f32.mrf.mxu0
        %v2781 = vadd.f32 %v2524, %v2780
        %v2782 = vpop.f32.mrf.mxu0
        %2783 = vdwg.mxu0
        %2784 = vmatprep.subr.bf16.mxu0 0
        %2785 = vmatpush1.bf16.msra.mxu0 %v2662
        %2786 = vmatprep.subr.bf16.mxu0 0
        %2787 = vmatpush1.bf16.msra.mxu0 %v2661
        %2788 = vmatprep.subr.bf16.mxu0 0
        %2789 = vmatpush1.bf16.msra.mxu0 %v2660
        %2790 = vmatprep.subr.bf16.mxu0 0
        %2791 = vmatpush1.bf16.msra.mxu0 %v2659
        %2792 = vmatprep.subr.bf16.mxu0 0
        %2793 = vmatpush1.bf16.msra.mxu0 %v2658
        %2794 = vmatprep.subr.bf16.mxu0 0
        %2795 = vmatpush1.bf16.msra.mxu0 %v2657
        %2796 = vmatprep.subr.bf16.mxu0 0
        %2797 = vmatpush1.bf16.msra.mxu0 %v2656
        %2798 = vmatprep.subr.bf16.mxu0 0
        %2799 = vmatpush1.bf16.msra.mxu0 %v2655
        %2800 = vmatprep.subr.bf16.mxu0 0
        %2801 = vmatpush2.bf16.msra.mxu0 0
        %2802 = vmatprep.subr.bf16.mxu0 0
        %2803 = vmatpush2.bf16.msra.mxu0 0
        %2804 = vmatprep.subr.bf16.mxu0 0
        %2805 = vmatpush2.bf16.msra.mxu0 0
        %2806 = vmatprep.subr.bf16.mxu0 0
        %2807 = vmatpush2.bf16.msra.mxu0 0
        %2808 = vmatprep.subr.bf16.mxu0 0
        %2809 = vmatpush2.bf16.msra.mxu0 0
        %2810 = vmatprep.subr.bf16.mxu0 0
        %2811 = vmatpush2.bf16.msra.mxu0 0
        %2812 = vmatprep.subr.bf16.mxu0 0
        %2813 = vmatpush2.bf16.msra.mxu0 0
        %2814 = vmatprep.subr.bf16.mxu0 0
        %2815 = vmatpush2.bf16.msra.mxu0 0
        %2816 = vmatprep.mubr.bf16.mxu0 0
        %2817 = vmatmul.mubr.bf16.gmra.mxu0 %v2539
        %v2818 = vpop.f32.mrf.mxu0
        %v2819 = vadd.f32 %v2722, %v2818
        %v2820 = vpop.f32.mrf.mxu0
        %v2821 = vpop.f32.mrf.mxu0
        %v2822 = vadd.f32 %v2725, %v2821
        %v2823 = vpop.f32.mrf.mxu0
        %2824 = vmatprep.mubr.bf16.mxu0 0
        %2825 = vmatmul.mubr.bf16.gmra.mxu0 %v2143
        %v2826 = vpop.f32.mrf.mxu0
        %v2827 = vadd.f32 %v2730, %v2826
        %v2828 = vpop.f32.mrf.mxu0
        %v2829 = vpop.f32.mrf.mxu0
        %v2830 = vadd.f32 %v2733, %v2829
        %v2831 = vpop.f32.mrf.mxu0
        %2832 = vmatprep.mubr.bf16.mxu0 0
        %2833 = vmatmul.mubr.bf16.gmra.mxu0 %v2146
        %v2834 = vpop.f32.mrf.mxu0
        %v2835 = vadd.f32 %v2738, %v2834
        %v2836 = vpop.f32.mrf.mxu0
        %v2837 = vpop.f32.mrf.mxu0
        %v2838 = vadd.f32 %v2741, %v2837
        %v2839 = vpop.f32.mrf.mxu0
        %2840 = vmatprep.mubr.bf16.mxu0 0
        %2841 = vmatmul.mubr.bf16.gmra.mxu0 %v2149
        %v2842 = vpop.f32.mrf.mxu0
        %v2843 = vadd.f32 %v2746, %v2842
        %v2844 = vpop.f32.mrf.mxu0
        %v2845 = vpop.f32.mrf.mxu0
        %v2846 = vadd.f32 %v2749, %v2845
        %v2847 = vpop.f32.mrf.mxu0
        %2848 = vmatprep.mubr.bf16.mxu0 0
        %2849 = vmatmul.mubr.bf16.gmra.mxu0 %v2152
        %v2850 = vpop.f32.mrf.mxu0
        %v2851 = vadd.f32 %v2754, %v2850
        %v2852 = vpop.f32.mrf.mxu0
        %v2853 = vpop.f32.mrf.mxu0
        %v2854 = vadd.f32 %v2757, %v2853
        %v2855 = vpop.f32.mrf.mxu0
        %2856 = vmatprep.mubr.bf16.mxu0 0
        %2857 = vmatmul.mubr.bf16.gmra.mxu0 %v2155
        %v2858 = vpop.f32.mrf.mxu0
        %v2859 = vadd.f32 %v2762, %v2858
        %v2860 = vpop.f32.mrf.mxu0
        %v2861 = vpop.f32.mrf.mxu0
        %v2862 = vadd.f32 %v2765, %v2861
        %v2863 = vpop.f32.mrf.mxu0
        %2864 = vmatprep.mubr.bf16.mxu0 0
        %2865 = vmatmul.mubr.bf16.gmra.mxu0 %v2158
        %v2866 = vpop.f32.mrf.mxu0
        %v2867 = vadd.f32 %v2770, %v2866
        %v2868 = vpop.f32.mrf.mxu0
        %v2869 = vpop.f32.mrf.mxu0
        %v2870 = vadd.f32 %v2773, %v2869
        %v2871 = vpop.f32.mrf.mxu0
        %2872 = vmatprep.mubr.bf16.mxu0 0
        %2873 = vmatmul.mubr.bf16.gmra.mxu0 %v2161
        %v2874 = vpop.f32.mrf.mxu0
        %v2875 = vadd.f32 %v2778, %v2874
        %v2876 = vpop.f32.mrf.mxu0
        %v2877 = vpop.f32.mrf.mxu0
        %v2878 = vadd.f32 %v2781, %v2877
        %v2879 = vpop.f32.mrf.mxu0
        %2880 = vdwg.mxu0
        %v2881 = vld [vmem:[#allocation2 + $0x30] sm:$0xff]
        %v2882 = vld [vmem:[#allocation2 + $0x38] sm:$0xf]
        %v2883 = vld [vmem:[#allocation2 + $0x3c] sm:$0xff]
        %v2884 = vld [vmem:[#allocation2 + $0x44] sm:$0xf]
        %v2885 = vld [vmem:[#allocation2 + $0x48] sm:$0xff]
        %v2886 = vld [vmem:[#allocation2 + $0x50] sm:$0xf]
        %v2887 = vld [vmem:[#allocation2 + $0x54] sm:$0xff]
        %v2888 = vld [vmem:[#allocation2 + $0x5c] sm:$0xf]
        %v2889 = vld [vmem:[#allocation2 + $0x60] sm:$0xff]
        %v2890 = vld [vmem:[#allocation2 + $0x68] sm:$0xf]
        %v2891 = vld [vmem:[#allocation2 + $0x6c] sm:$0xff]
        %v2892 = vld [vmem:[#allocation2 + $0x74] sm:$0xf]
        %v2893 = vld [vmem:[#allocation2 + $0x78] sm:$0xff]
        %v2894 = vld [vmem:[#allocation2 + $0x80] sm:$0xf]
        %v2895 = vld [vmem:[#allocation2 + $0x84] sm:$0xff]
        %v2896 = vld [vmem:[#allocation2 + $0x8c] sm:$0xf]
        %v2897 = vld [vmem:[#allocation2 + $0x90] sm:$0xff]
        %v2898 = vld [vmem:[#allocation2 + $0x98] sm:$0xf]
        %v2899 = vld [vmem:[#allocation2 + $0x9c] sm:$0xff]
        %v2900 = vld [vmem:[#allocation2 + $0xa4] sm:$0xf]
        %v2901 = vld [vmem:[#allocation2 + $0xa8] sm:$0xff]
        %v2902 = vld [vmem:[#allocation2 + $0xb0] sm:$0xf]
        %v2903 = vld [vmem:[#allocation2 + $0xb4] sm:$0xff]
        %v2904 = vld [vmem:[#allocation2 + $0xbc] sm:$0xf]
        %v2905 = vld [vmem:[#allocation2 + $0xc0] sm:$0xff]
        %v2906 = vld [vmem:[#allocation2 + $0xc8] sm:$0xf]
        %v2907 = vld [vmem:[#allocation2 + $0xcc] sm:$0xff]
        %v2908 = vld [vmem:[#allocation2 + $0xd4] sm:$0xf]
        %v2909 = vld [vmem:[#allocation2 + $0xd8] sm:$0xff]
        %v2910 = vld [vmem:[#allocation2 + $0xe0] sm:$0xf]
        %v2911 = vld [vmem:[#allocation2 + $0xe4] sm:$0xff]
        %v2912 = vld [vmem:[#allocation2 + $0xec] sm:$0xf]
        %s2913 = scalar_lea.vmem %s4, 384
        %v2914 = vld [vmem:[%s2913] sm:$0xf]
        %v2915 = vld [vmem:[%s2913 + $0x4] sm:$0xf]
        %v2916 = vld [vmem:[%s2913 + $0x8] sm:$0xf]
        %v2917 = vld [vmem:[%s2913 + $0xc] sm:$0xf]
        %v2918 = vld [vmem:[%s2913 + $0x10] sm:$0xf]
        %v2919 = vld [vmem:[%s2913 + $0x14] sm:$0xf]
        %v2920 = vld [vmem:[%s2913 + $0x18] sm:$0xf]
        %v2921 = vld [vmem:[%s2913 + $0x1c] sm:$0xf]
        %v2922 = vld [vmem:[%s2913 + $0x20] sm:$0xf]
        %v2923 = vld [vmem:[%s2913 + $0x24] sm:$0xf]
        %v2924 = vld [vmem:[%s2913 + $0x28] sm:$0xf]
        %v2925 = vld [vmem:[%s2913 + $0x2c] sm:$0xf]
        %v2926 = vld [vmem:[%s2913 + $0x30] sm:$0xf]
        %v2927 = vld [vmem:[%s2913 + $0x34] sm:$0xf]
        %v2928 = vld [vmem:[%s2913 + $0x38] sm:$0xf]
        %v2929 = vld [vmem:[%s2913 + $0x3c] sm:$0xf]
        %v2930 = vld [vmem:[%s2913 + $0x40] sm:$0xf]
        %v2931 = vld [vmem:[%s2913 + $0x44] sm:$0xf]
        %v2932 = vld [vmem:[%s2913 + $0x48] sm:$0xf]
        %v2933 = vld [vmem:[%s2913 + $0x4c] sm:$0xf]
        %v2934 = vld [vmem:[%s2913 + $0x50] sm:$0xf]
        %v2935 = vld [vmem:[%s2913 + $0x54] sm:$0xf]
        %v2936 = vld [vmem:[%s2913 + $0x58] sm:$0xf]
        %v2937 = vld [vmem:[%s2913 + $0x5c] sm:$0xf]
        %v2938 = vld [vmem:[%s2913 + $0x60] sm:$0xf]
        %v2939 = vld [vmem:[%s2913 + $0x64] sm:$0xf]
        %v2940 = vld [vmem:[%s2913 + $0x68] sm:$0xf]
        %v2941 = vld [vmem:[%s2913 + $0x6c] sm:$0xf]
        %v2942 = vld [vmem:[%s2913 + $0x70] sm:$0xf]
        %v2943 = vld [vmem:[%s2913 + $0x74] sm:$0xf]
        %v2944 = vld [vmem:[%s2913 + $0x78] sm:$0xf]
        %v2945 = vld [vmem:[%s2913 + $0x7c] sm:$0xf]
        %v2946 = vld [vmem:[%s2913 + $0x80] sm:$0xf]
        %v2947 = vld [vmem:[%s2913 + $0x84] sm:$0xf]
        %v2948 = vld [vmem:[%s2913 + $0x88] sm:$0xf]
        %v2949 = vld [vmem:[%s2913 + $0x8c] sm:$0xf]
        %v2950 = vld [vmem:[%s2913 + $0x90] sm:$0xf]
        %v2951 = vld [vmem:[%s2913 + $0x94] sm:$0xf]
        %v2952 = vld [vmem:[%s2913 + $0x98] sm:$0xf]
        %v2953 = vld [vmem:[%s2913 + $0x9c] sm:$0xf]
        %v2954 = vld [vmem:[%s2913 + $0xa0] sm:$0xf]
        %v2955 = vld [vmem:[%s2913 + $0xa4] sm:$0xf]
        %v2956 = vld [vmem:[%s2913 + $0xa8] sm:$0xf]
        %v2957 = vld [vmem:[%s2913 + $0xac] sm:$0xf]
        %v2958 = vld [vmem:[%s2913 + $0xb0] sm:$0xf]
        %v2959 = vld [vmem:[%s2913 + $0xb4] sm:$0xf]
        %v2960 = vld [vmem:[%s2913 + $0xb8] sm:$0xf]
        %v2961 = vld [vmem:[%s2913 + $0xbc] sm:$0xf]
        %v2994 = vunpack.c.l.b16 %v2881
        %v2995 = vunpack.c.h.b16 %v2881
        %v2996 = vunpack.c.l.b16 %v2882
        %v2997 = vunpack.c.l.b16 %v2883
        %v2998 = vunpack.c.h.b16 %v2883
        %v2999 = vunpack.c.l.b16 %v2884
        %v3000 = vunpack.c.l.b16 %v2885
        %v3001 = vunpack.c.h.b16 %v2885
        %v3002 = vunpack.c.l.b16 %v2886
        %v3003 = vunpack.c.l.b16 %v2887
        %v3004 = vunpack.c.h.b16 %v2887
        %v3005 = vunpack.c.l.b16 %v2888
        %v3006 = vunpack.c.l.b16 %v2889
        %v3007 = vunpack.c.h.b16 %v2889
        %v3008 = vunpack.c.l.b16 %v2890
        %v3009 = vunpack.c.l.b16 %v2891
        %v3010 = vunpack.c.h.b16 %v2891
        %v3011 = vunpack.c.l.b16 %v2892
        %v3012 = vunpack.c.l.b16 %v2893
        %v3013 = vunpack.c.h.b16 %v2893
        %v3014 = vunpack.c.l.b16 %v2894
        %v3015 = vunpack.c.l.b16 %v2895
        %v3016 = vunpack.c.h.b16 %v2895
        %v3017 = vunpack.c.l.b16 %v2896
        %v3018 = vunpack.c.l.b16 %v2897
        %v3019 = vunpack.c.h.b16 %v2897
        %v3020 = vunpack.c.l.b16 %v2898
        %v3021 = vunpack.c.l.b16 %v2899
        %v3022 = vunpack.c.h.b16 %v2899
        %v3023 = vunpack.c.l.b16 %v2900
        %v3024 = vunpack.c.l.b16 %v2901
        %v3025 = vunpack.c.h.b16 %v2901
        %v3026 = vunpack.c.l.b16 %v2902
        %v3027 = vunpack.c.l.b16 %v2903
        %v3028 = vunpack.c.h.b16 %v2903
        %v3029 = vunpack.c.l.b16 %v2904
        %v3030 = vunpack.c.l.b16 %v2905
        %v3031 = vunpack.c.h.b16 %v2905
        %v3032 = vunpack.c.l.b16 %v2906
        %v3033 = vunpack.c.l.b16 %v2907
        %v3034 = vunpack.c.h.b16 %v2907
        %v3035 = vunpack.c.l.b16 %v2908
        %v3036 = vunpack.c.l.b16 %v2909
        %v3037 = vunpack.c.h.b16 %v2909
        %v3038 = vunpack.c.l.b16 %v2910
        %v3039 = vunpack.c.l.b16 %v2911
        %v3040 = vunpack.c.h.b16 %v2911
        %v3041 = vunpack.c.l.b16 %v2912
        %v3042 = vpack.c.b16 %v2997, %v2994
        %v3043 = vpack.c.b16 %v2998, %v2995
        %v3044 = vpack.c.b16 %v2999, %v2996
        %v3045 = vpack.c.b16 %v3003, %v3000
        %v3046 = vpack.c.b16 %v3004, %v3001
        %v3047 = vpack.c.b16 %v3005, %v3002
        %v3048 = vpack.c.b16 %v3009, %v3006
        %v3049 = vpack.c.b16 %v3010, %v3007
        %v3050 = vpack.c.b16 %v3011, %v3008
        %v3051 = vpack.c.b16 %v3015, %v3012
        %v3052 = vpack.c.b16 %v3016, %v3013
        %v3053 = vpack.c.b16 %v3017, %v3014
        %v3054 = vpack.c.b16 %v3021, %v3018
        %v3055 = vpack.c.b16 %v3022, %v3019
        %v3056 = vpack.c.b16 %v3023, %v3020
        %v3057 = vpack.c.b16 %v3027, %v3024
        %v3058 = vpack.c.b16 %v3028, %v3025
        %v3059 = vpack.c.b16 %v3029, %v3026
        %v3060 = vpack.c.b16 %v3033, %v3030
        %v3061 = vpack.c.b16 %v3034, %v3031
        %v3062 = vpack.c.b16 %v3035, %v3032
        %v3063 = vpack.c.b16 %v3039, %v3036
        %v3064 = vpack.c.b16 %v3040, %v3037
        %v3065 = vpack.c.b16 %v3041, %v3038
        %v3138 = vunpack.c.l.b16 %v2914
        %v3139 = vunpack.c.l.b16 %v2915
        %v3140 = vunpack.c.l.b16 %v2916
        %v3141 = vunpack.c.l.b16 %v2917
        %v3142 = vunpack.c.l.b16 %v2918
        %v3143 = vunpack.c.l.b16 %v2919
        %v3144 = vunpack.c.l.b16 %v2920
        %v3145 = vunpack.c.l.b16 %v2921
        %v3146 = vunpack.c.l.b16 %v2922
        %v3147 = vunpack.c.l.b16 %v2923
        %v3148 = vunpack.c.l.b16 %v2924
        %v3149 = vunpack.c.l.b16 %v2925
        %v3150 = vunpack.c.l.b16 %v2926
        %v3151 = vunpack.c.l.b16 %v2927
        %v3152 = vunpack.c.l.b16 %v2928
        %v3153 = vunpack.c.l.b16 %v2929
        %v3154 = vunpack.c.l.b16 %v2930
        %v3155 = vunpack.c.l.b16 %v2931
        %v3156 = vunpack.c.l.b16 %v2932
        %v3157 = vunpack.c.l.b16 %v2933
        %v3158 = vunpack.c.l.b16 %v2934
        %v3159 = vunpack.c.l.b16 %v2935
        %v3160 = vunpack.c.l.b16 %v2936
        %v3161 = vunpack.c.l.b16 %v2937
        %v3162 = vunpack.c.l.b16 %v2938
        %v3163 = vunpack.c.l.b16 %v2939
        %v3164 = vunpack.c.l.b16 %v2940
        %v3165 = vunpack.c.l.b16 %v2941
        %v3166 = vunpack.c.l.b16 %v2942
        %v3167 = vunpack.c.l.b16 %v2943
        %v3168 = vunpack.c.l.b16 %v2944
        %v3169 = vunpack.c.l.b16 %v2945
        %v3170 = vunpack.c.l.b16 %v2946
        %v3171 = vunpack.c.l.b16 %v2947
        %v3172 = vunpack.c.l.b16 %v2948
        %v3173 = vunpack.c.l.b16 %v2949
        %v3174 = vunpack.c.l.b16 %v2950
        %v3175 = vunpack.c.l.b16 %v2951
        %v3176 = vunpack.c.l.b16 %v2952
        %v3177 = vunpack.c.l.b16 %v2953
        %v3178 = vunpack.c.l.b16 %v2954
        %v3179 = vunpack.c.l.b16 %v2955
        %v3180 = vunpack.c.l.b16 %v2956
        %v3181 = vunpack.c.l.b16 %v2957
        %v3182 = vunpack.c.l.b16 %v2958
        %v3183 = vunpack.c.l.b16 %v2959
        %v3184 = vunpack.c.l.b16 %v2960
        %v3185 = vunpack.c.l.b16 %v2961
        %v3186 = vpack.c.b16 %v3139, %v3138
        %v3187 = vpack.c.b16 %v3141, %v3140
        %v3188 = vpack.c.b16 %v3143, %v3142
        %v3189 = vpack.c.b16 %v3145, %v3144
        %v3190 = vpack.c.b16 %v3147, %v3146
        %v3191 = vpack.c.b16 %v3149, %v3148
        %v3192 = vpack.c.b16 %v3151, %v3150
        %v3193 = vpack.c.b16 %v3153, %v3152
        %v3194 = vpack.c.b16 %v3155, %v3154
        %v3195 = vpack.c.b16 %v3157, %v3156
        %v3196 = vpack.c.b16 %v3159, %v3158
        %v3197 = vpack.c.b16 %v3161, %v3160
        %v3198 = vpack.c.b16 %v3163, %v3162
        %v3199 = vpack.c.b16 %v3165, %v3164
        %v3200 = vpack.c.b16 %v3167, %v3166
        %v3201 = vpack.c.b16 %v3169, %v3168
        %v3202 = vpack.c.b16 %v3171, %v3170
        %v3203 = vpack.c.b16 %v3173, %v3172
        %v3204 = vpack.c.b16 %v3175, %v3174
        %v3205 = vpack.c.b16 %v3177, %v3176
        %v3206 = vpack.c.b16 %v3179, %v3178
        %v3207 = vpack.c.b16 %v3181, %v3180
        %v3208 = vpack.c.b16 %v3183, %v3182
        %v3209 = vpack.c.b16 %v3185, %v3184
        %3234 = vmatprep.subr.bf16.mxu0 0
        %3235 = vmatpush1.bf16.msra.mxu0 %v3193
        %3236 = vmatprep.subr.bf16.mxu0 0
        %3237 = vmatpush1.bf16.msra.mxu0 %v3192
        %3238 = vmatprep.subr.bf16.mxu0 0
        %3239 = vmatpush1.bf16.msra.mxu0 %v3191
        %3240 = vmatprep.subr.bf16.mxu0 0
        %3241 = vmatpush1.bf16.msra.mxu0 %v3190
        %3242 = vmatprep.subr.bf16.mxu0 0
        %3243 = vmatpush1.bf16.msra.mxu0 %v3189
        %3244 = vmatprep.subr.bf16.mxu0 0
        %3245 = vmatpush1.bf16.msra.mxu0 %v3188
        %3246 = vmatprep.subr.bf16.mxu0 0
        %3247 = vmatpush1.bf16.msra.mxu0 %v3187
        %3248 = vmatprep.subr.bf16.mxu0 0
        %3249 = vmatpush1.bf16.msra.mxu0 %v3186
        %3250 = vmatprep.subr.bf16.mxu0 0
        %3251 = vmatpush2.bf16.msra.mxu0 %v3201
        %3252 = vmatprep.subr.bf16.mxu0 0
        %3253 = vmatpush2.bf16.msra.mxu0 %v3200
        %3254 = vmatprep.subr.bf16.mxu0 0
        %3255 = vmatpush2.bf16.msra.mxu0 %v3199
        %3256 = vmatprep.subr.bf16.mxu0 0
        %3257 = vmatpush2.bf16.msra.mxu0 %v3198
        %3258 = vmatprep.subr.bf16.mxu0 0
        %3259 = vmatpush2.bf16.msra.mxu0 %v3197
        %3260 = vmatprep.subr.bf16.mxu0 0
        %3261 = vmatpush2.bf16.msra.mxu0 %v3196
        %3262 = vmatprep.subr.bf16.mxu0 0
        %3263 = vmatpush2.bf16.msra.mxu0 %v3195
        %3264 = vmatprep.subr.bf16.mxu0 0
        %3265 = vmatpush2.bf16.msra.mxu0 %v3194
        %3266 = vmatprep.mubr.bf16.mxu0 %v3043
        %3267 = vmatmul.mubr.bf16.gmra.mxu0 %v3042
        %v3268 = vpop.f32.mrf.mxu0
        %v3269 = vadd.f32 0.0, %v3268
        %v3270 = vpop.f32.mrf.mxu0
        %v3271 = vpop.f32.mrf.mxu0
        %v3272 = vadd.f32 0.0, %v3271
        %v3273 = vpop.f32.mrf.mxu0
        %3274 = vmatprep.mubr.bf16.mxu0 %v3046
        %3275 = vmatmul.mubr.bf16.gmra.mxu0 %v3045
        %v3276 = vpop.f32.mrf.mxu0
        %v3277 = vadd.f32 0.0, %v3276
        %v3278 = vpop.f32.mrf.mxu0
        %v3279 = vpop.f32.mrf.mxu0
        %v3280 = vadd.f32 0.0, %v3279
        %v3281 = vpop.f32.mrf.mxu0
        %3282 = vmatprep.mubr.bf16.mxu0 %v3049
        %3283 = vmatmul.mubr.bf16.gmra.mxu0 %v3048
        %v3284 = vpop.f32.mrf.mxu0
        %v3285 = vadd.f32 0.0, %v3284
        %v3286 = vpop.f32.mrf.mxu0
        %v3287 = vpop.f32.mrf.mxu0
        %v3288 = vadd.f32 0.0, %v3287
        %v3289 = vpop.f32.mrf.mxu0
        %3290 = vmatprep.mubr.bf16.mxu0 %v3052
        %3291 = vmatmul.mubr.bf16.gmra.mxu0 %v3051
        %v3292 = vpop.f32.mrf.mxu0
        %v3293 = vadd.f32 0.0, %v3292
        %v3294 = vpop.f32.mrf.mxu0
        %v3295 = vpop.f32.mrf.mxu0
        %v3296 = vadd.f32 0.0, %v3295
        %v3297 = vpop.f32.mrf.mxu0
        %3298 = vmatprep.mubr.bf16.mxu0 %v3055
        %3299 = vmatmul.mubr.bf16.gmra.mxu0 %v3054
        %v3300 = vpop.f32.mrf.mxu0
        %v3301 = vadd.f32 0.0, %v3300
        %v3302 = vpop.f32.mrf.mxu0
        %v3303 = vpop.f32.mrf.mxu0
        %v3304 = vadd.f32 0.0, %v3303
        %v3305 = vpop.f32.mrf.mxu0
        %3306 = vmatprep.mubr.bf16.mxu0 %v3058
        %3307 = vmatmul.mubr.bf16.gmra.mxu0 %v3057
        %v3308 = vpop.f32.mrf.mxu0
        %v3309 = vadd.f32 0.0, %v3308
        %v3310 = vpop.f32.mrf.mxu0
        %v3311 = vpop.f32.mrf.mxu0
        %v3312 = vadd.f32 0.0, %v3311
        %v3313 = vpop.f32.mrf.mxu0
        %3314 = vmatprep.mubr.bf16.mxu0 %v3061
        %3315 = vmatmul.mubr.bf16.gmra.mxu0 %v3060
        %v3316 = vpop.f32.mrf.mxu0
        %v3317 = vadd.f32 0.0, %v3316
        %v3318 = vpop.f32.mrf.mxu0
        %v3319 = vpop.f32.mrf.mxu0
        %v3320 = vadd.f32 0.0, %v3319
        %v3321 = vpop.f32.mrf.mxu0
        %3322 = vmatprep.mubr.bf16.mxu0 %v3064
        %3323 = vmatmul.mubr.bf16.gmra.mxu0 %v3063
        %v3324 = vpop.f32.mrf.mxu0
        %v3325 = vadd.f32 0.0, %v3324
        %v3326 = vpop.f32.mrf.mxu0
        %v3327 = vpop.f32.mrf.mxu0
        %v3328 = vadd.f32 0.0, %v3327
        %v3329 = vpop.f32.mrf.mxu0
        %3330 = vdwg.mxu0
        %3331 = vmatprep.subr.bf16.mxu0 0
        %3332 = vmatpush1.bf16.msra.mxu0 %v3209
        %3333 = vmatprep.subr.bf16.mxu0 0
        %3334 = vmatpush1.bf16.msra.mxu0 %v3208
        %3335 = vmatprep.subr.bf16.mxu0 0
        %3336 = vmatpush1.bf16.msra.mxu0 %v3207
        %3337 = vmatprep.subr.bf16.mxu0 0
        %3338 = vmatpush1.bf16.msra.mxu0 %v3206
        %3339 = vmatprep.subr.bf16.mxu0 0
        %3340 = vmatpush1.bf16.msra.mxu0 %v3205
        %3341 = vmatprep.subr.bf16.mxu0 0
        %3342 = vmatpush1.bf16.msra.mxu0 %v3204
        %3343 = vmatprep.subr.bf16.mxu0 0
        %3344 = vmatpush1.bf16.msra.mxu0 %v3203
        %3345 = vmatprep.subr.bf16.mxu0 0
        %3346 = vmatpush1.bf16.msra.mxu0 %v3202
        %3347 = vmatprep.subr.bf16.mxu0 0
        %3348 = vmatpush2.bf16.msra.mxu0 0
        %3349 = vmatprep.subr.bf16.mxu0 0
        %3350 = vmatpush2.bf16.msra.mxu0 0
        %3351 = vmatprep.subr.bf16.mxu0 0
        %3352 = vmatpush2.bf16.msra.mxu0 0
        %3353 = vmatprep.subr.bf16.mxu0 0
        %3354 = vmatpush2.bf16.msra.mxu0 0
        %3355 = vmatprep.subr.bf16.mxu0 0
        %3356 = vmatpush2.bf16.msra.mxu0 0
        %3357 = vmatprep.subr.bf16.mxu0 0
        %3358 = vmatpush2.bf16.msra.mxu0 0
        %3359 = vmatprep.subr.bf16.mxu0 0
        %3360 = vmatpush2.bf16.msra.mxu0 0
        %3361 = vmatprep.subr.bf16.mxu0 0
        %3362 = vmatpush2.bf16.msra.mxu0 0
        %3363 = vmatprep.mubr.bf16.mxu0 0
        %3364 = vmatmul.mubr.bf16.gmra.mxu0 %v3044
        %v3365 = vpop.f32.mrf.mxu0
        %v3366 = vadd.f32 %v3269, %v3365
        %v3367 = vpop.f32.mrf.mxu0
        %v3368 = vpop.f32.mrf.mxu0
        %v3369 = vadd.f32 %v3272, %v3368
        %v3370 = vpop.f32.mrf.mxu0
        %3371 = vmatprep.mubr.bf16.mxu0 0
        %3372 = vmatmul.mubr.bf16.gmra.mxu0 %v3047
        %v3373 = vpop.f32.mrf.mxu0
        %v3374 = vadd.f32 %v3277, %v3373
        %v3375 = vpop.f32.mrf.mxu0
        %v3376 = vpop.f32.mrf.mxu0
        %v3377 = vadd.f32 %v3280, %v3376
        %v3378 = vpop.f32.mrf.mxu0
        %3379 = vmatprep.mubr.bf16.mxu0 0
        %3380 = vmatmul.mubr.bf16.gmra.mxu0 %v3050
        %v3381 = vpop.f32.mrf.mxu0
        %v3382 = vadd.f32 %v3285, %v3381
        %v3383 = vpop.f32.mrf.mxu0
        %v3384 = vpop.f32.mrf.mxu0
        %v3385 = vadd.f32 %v3288, %v3384
        %v3386 = vpop.f32.mrf.mxu0
        %3387 = vmatprep.mubr.bf16.mxu0 0
        %3388 = vmatmul.mubr.bf16.gmra.mxu0 %v3053
        %v3389 = vpop.f32.mrf.mxu0
        %v3390 = vadd.f32 %v3293, %v3389
        %v3391 = vpop.f32.mrf.mxu0
        %v3392 = vpop.f32.mrf.mxu0
        %v3393 = vadd.f32 %v3296, %v3392
        %v3394 = vpop.f32.mrf.mxu0
        %3395 = vmatprep.mubr.bf16.mxu0 0
        %3396 = vmatmul.mubr.bf16.gmra.mxu0 %v3056
        %v3397 = vpop.f32.mrf.mxu0
        %v3398 = vadd.f32 %v3301, %v3397
        %v3399 = vpop.f32.mrf.mxu0
        %v3400 = vpop.f32.mrf.mxu0
        %v3401 = vadd.f32 %v3304, %v3400
        %v3402 = vpop.f32.mrf.mxu0
        %3403 = vmatprep.mubr.bf16.mxu0 0
        %3404 = vmatmul.mubr.bf16.gmra.mxu0 %v3059
        %v3405 = vpop.f32.mrf.mxu0
        %v3406 = vadd.f32 %v3309, %v3405
        %v3407 = vpop.f32.mrf.mxu0
        %v3408 = vpop.f32.mrf.mxu0
        %v3409 = vadd.f32 %v3312, %v3408
        %v3410 = vpop.f32.mrf.mxu0
        %3411 = vmatprep.mubr.bf16.mxu0 0
        %3412 = vmatmul.mubr.bf16.gmra.mxu0 %v3062
        %v3413 = vpop.f32.mrf.mxu0
        %v3414 = vadd.f32 %v3317, %v3413
        %v3415 = vpop.f32.mrf.mxu0
        %v3416 = vpop.f32.mrf.mxu0
        %v3417 = vadd.f32 %v3320, %v3416
        %v3418 = vpop.f32.mrf.mxu0
        %3419 = vmatprep.mubr.bf16.mxu0 0
        %3420 = vmatmul.mubr.bf16.gmra.mxu0 %v3065
        %v3421 = vpop.f32.mrf.mxu0
        %v3422 = vadd.f32 %v3325, %v3421
        %v3423 = vpop.f32.mrf.mxu0
        %v3424 = vpop.f32.mrf.mxu0
        %v3425 = vadd.f32 %v3328, %v3424
        %v3426 = vpop.f32.mrf.mxu0
        %3427 = vdwg.mxu0
        %v3428 = vadd.f32 %v2819, %v3366
        %v3429 = vadd.f32 %v2822, %v3369
        %v3430 = vadd.f32 %v2827, %v3374
        %v3431 = vadd.f32 %v2830, %v3377
        %v3432 = vadd.f32 %v2835, %v3382
        %v3433 = vadd.f32 %v2838, %v3385
        %v3434 = vadd.f32 %v2843, %v3390
        %v3435 = vadd.f32 %v2846, %v3393
        %v3436 = vadd.f32 %v2851, %v3398
        %v3437 = vadd.f32 %v2854, %v3401
        %v3438 = vadd.f32 %v2859, %v3406
        %v3439 = vadd.f32 %v2862, %v3409
        %v3440 = vadd.f32 %v2867, %v3414
        %v3441 = vadd.f32 %v2870, %v3417
        %v3442 = vadd.f32 %v2875, %v3422
        %v3443 = vadd.f32 %v2878, %v3425
        %v3444 = vld [vmem:[%s7] sm:$0x1]
        %v3446 = vlaneseq
        %v3447 = vshrl.u32 %v3446, 7
        %v3448 = vsub.s32 0, %v3447
        %v3449 = vrot.slane %v3444, %v3448
        %v3451 = vadd.f32 %v3428, %v3449
        %v3452 = vadd.f32 %v3429, %v3449
        %v3453 = vadd.f32 %v3430, %v3449
        %v3454 = vadd.f32 %v3431, %v3449
        %v3455 = vadd.f32 %v3432, %v3449
        %v3456 = vadd.f32 %v3433, %v3449
        %v3457 = vadd.f32 %v3434, %v3449
        %v3458 = vadd.f32 %v3435, %v3449
        %v3459 = vadd.f32 %v3436, %v3449
        %v3460 = vadd.f32 %v3437, %v3449
        %v3461 = vadd.f32 %v3438, %v3449
        %v3462 = vadd.f32 %v3439, %v3449
        %v3463 = vadd.f32 %v3440, %v3449
        %v3464 = vadd.f32 %v3441, %v3449
        %v3465 = vadd.f32 %v3442, %v3449
        %v3466 = vadd.f32 %v3443, %v3449
        %v3467 = vmax.f32 %v3451, 0.0
        %v3468 = vmax.f32 %v3452, 0.0
        %v3469 = vmax.f32 %v3453, 0.0
        %v3470 = vmax.f32 %v3454, 0.0
        %v3471 = vmax.f32 %v3455, 0.0
        %v3472 = vmax.f32 %v3456, 0.0
        %v3473 = vmax.f32 %v3457, 0.0
        %v3474 = vmax.f32 %v3458, 0.0
        %v3475 = vmax.f32 %v3459, 0.0
        %v3476 = vmax.f32 %v3460, 0.0
        %v3477 = vmax.f32 %v3461, 0.0
        %v3478 = vmax.f32 %v3462, 0.0
        %v3479 = vmax.f32 %v3463, 0.0
        %v3480 = vmax.f32 %v3464, 0.0
        %v3481 = vmax.f32 %v3465, 0.0
        %v3482 = vmax.f32 %v3466, 0.0
        %v3483 = vpack.c.bf16 %v3468, %v3467
        %v3484 = vpack.c.bf16 %v3470, %v3469
        %v3485 = vpack.c.bf16 %v3472, %v3471
        %v3486 = vpack.c.bf16 %v3474, %v3473
        %v3487 = vpack.c.bf16 %v3476, %v3475
        %v3488 = vpack.c.bf16 %v3478, %v3477
        %v3489 = vpack.c.bf16 %v3480, %v3479
        %v3490 = vpack.c.bf16 %v3482, %v3481
        %v3491 = vld [vmem:[%s5] sm:$0xf]
        %v3492 = vld [vmem:[%s5 + $0x4] sm:$0xf]
        %v3493 = vld [vmem:[%s5 + $0x8] sm:$0xf]
        %v3494 = vld [vmem:[%s5 + $0xc] sm:$0xf]
        %v3495 = vld [vmem:[%s8] sm:$0x1]
        %v3497 = vlaneseq
        %v3498 = vshrl.u32 %v3497, 7
        %v3499 = vsub.s32 0, %v3498
        %v3500 = vrot.slane %v3495, %v3499
        %v3506 = vunpack.c.l.b16 %v3491
        %v3507 = vunpack.c.l.b16 %v3492
        %v3508 = vunpack.c.l.b16 %v3493
        %v3509 = vunpack.c.l.b16 %v3494
        %v3510 = vpack.c.b16 %v3507, %v3506
        %v3511 = vpack.c.b16 %v3509, %v3508
        %v3515 = vsel %vm1395, %v3483, 0
        %v3518 = vsel %vm1395, %v3484, 0
        %v3521 = vsel %vm1395, %v3485, 0
        %v3524 = vsel %vm1395, %v3486, 0
        %v3527 = vsel %vm1395, %v3487, 0
        %v3530 = vsel %vm1395, %v3488, 0
        %v3533 = vsel %vm1395, %v3489, 0
        %v3536 = vsel %vm1395, %v3490, 0
        %3538 = vmatprep.subr.bf16.mxu0 0
        %3539 = vmatpush1.bf16.msra.mxu0 0
        %3540 = vmatprep.subr.bf16.mxu0 0
        %3541 = vmatpush1.bf16.msra.mxu0 0
        %3542 = vmatprep.subr.bf16.mxu0 0
        %3543 = vmatpush1.bf16.msra.mxu0 0
        %3544 = vmatprep.subr.bf16.mxu0 0
        %3545 = vmatpush1.bf16.msra.mxu0 0
        %3546 = vmatprep.subr.bf16.mxu0 0
        %3547 = vmatpush1.bf16.msra.mxu0 0
        %3548 = vmatprep.subr.bf16.mxu0 0
        %3549 = vmatpush1.bf16.msra.mxu0 0
        %3550 = vmatprep.subr.bf16.mxu0 0
        %3551 = vmatpush1.bf16.msra.mxu0 %v3511
        %3552 = vmatprep.subr.bf16.mxu0 0
        %3553 = vmatpush1.bf16.msra.mxu0 %v3510
        %3554 = vmatprep.subr.bf16.mxu0 0
        %3555 = vmatpush2.bf16.msra.mxu0 0
        %3556 = vmatprep.subr.bf16.mxu0 0
        %3557 = vmatpush2.bf16.msra.mxu0 0
        %3558 = vmatprep.subr.bf16.mxu0 0
        %3559 = vmatpush2.bf16.msra.mxu0 0
        %3560 = vmatprep.subr.bf16.mxu0 0
        %3561 = vmatpush2.bf16.msra.mxu0 0
        %3562 = vmatprep.subr.bf16.mxu0 0
        %3563 = vmatpush2.bf16.msra.mxu0 0
        %3564 = vmatprep.subr.bf16.mxu0 0
        %3565 = vmatpush2.bf16.msra.mxu0 0
        %3566 = vmatprep.subr.bf16.mxu0 0
        %3567 = vmatpush2.bf16.msra.mxu0 0
        %3568 = vmatprep.subr.bf16.mxu0 0
        %3569 = vmatpush2.bf16.msra.mxu0 0
        %3570 = vmatprep.mubr.bf16.mxu0 0
        %3571 = vmatmul.mubr.bf16.gmra.mxu0 %v3515
        %v3572 = vpop.f32.mrf.mxu0
        %v3573 = vadd.f32 %v3500, %v3572
        %v3574 = vpop.f32.mrf.mxu0
        %v3575 = vpop.f32.mrf.mxu0
        %v3576 = vadd.f32 %v3500, %v3575
        %v3577 = vpop.f32.mrf.mxu0
        %3578 = vmatprep.mubr.bf16.mxu0 0
        %3579 = vmatmul.mubr.bf16.gmra.mxu0 %v3518
        %v3580 = vpop.f32.mrf.mxu0
        %v3581 = vadd.f32 %v3500, %v3580
        %v3582 = vpop.f32.mrf.mxu0
        %v3583 = vpop.f32.mrf.mxu0
        %v3584 = vadd.f32 %v3500, %v3583
        %v3585 = vpop.f32.mrf.mxu0
        %3586 = vmatprep.mubr.bf16.mxu0 0
        %3587 = vmatmul.mubr.bf16.gmra.mxu0 %v3521
        %v3588 = vpop.f32.mrf.mxu0
        %v3589 = vadd.f32 %v3500, %v3588
        %v3590 = vpop.f32.mrf.mxu0
        %v3591 = vpop.f32.mrf.mxu0
        %v3592 = vadd.f32 %v3500, %v3591
        %v3593 = vpop.f32.mrf.mxu0
        %3594 = vmatprep.mubr.bf16.mxu0 0
        %3595 = vmatmul.mubr.bf16.gmra.mxu0 %v3524
        %v3596 = vpop.f32.mrf.mxu0
        %v3597 = vadd.f32 %v3500, %v3596
        %v3598 = vpop.f32.mrf.mxu0
        %v3599 = vpop.f32.mrf.mxu0
        %v3600 = vadd.f32 %v3500, %v3599
        %v3601 = vpop.f32.mrf.mxu0
        %3602 = vmatprep.mubr.bf16.mxu0 0
        %3603 = vmatmul.mubr.bf16.gmra.mxu0 %v3527
        %v3604 = vpop.f32.mrf.mxu0
        %v3605 = vadd.f32 %v3500, %v3604
        %v3606 = vpop.f32.mrf.mxu0
        %v3607 = vpop.f32.mrf.mxu0
        %v3608 = vadd.f32 %v3500, %v3607
        %v3609 = vpop.f32.mrf.mxu0
        %3610 = vmatprep.mubr.bf16.mxu0 0
        %3611 = vmatmul.mubr.bf16.gmra.mxu0 %v3530
        %v3612 = vpop.f32.mrf.mxu0
        %v3613 = vadd.f32 %v3500, %v3612
        %v3614 = vpop.f32.mrf.mxu0
        %v3615 = vpop.f32.mrf.mxu0
        %v3616 = vadd.f32 %v3500, %v3615
        %v3617 = vpop.f32.mrf.mxu0
        %3618 = vmatprep.mubr.bf16.mxu0 0
        %3619 = vmatmul.mubr.bf16.gmra.mxu0 %v3533
        %v3620 = vpop.f32.mrf.mxu0
        %v3621 = vadd.f32 %v3500, %v3620
        %v3622 = vpop.f32.mrf.mxu0
        %v3623 = vpop.f32.mrf.mxu0
        %v3624 = vadd.f32 %v3500, %v3623
        %v3625 = vpop.f32.mrf.mxu0
        %3626 = vmatprep.mubr.bf16.mxu0 0
        %3627 = vmatmul.mubr.bf16.gmra.mxu0 %v3536
        %v3628 = vpop.f32.mrf.mxu0
        %v3629 = vadd.f32 %v3500, %v3628
        %v3630 = vpop.f32.mrf.mxu0
        %v3631 = vpop.f32.mrf.mxu0
        %v3632 = vadd.f32 %v3500, %v3631
        %v3633 = vpop.f32.mrf.mxu0
        %3634 = vdwg.mxu0
        %v3635 = vld [vmem:[%s469] sm:$0xf]
        %v3636 = vld [vmem:[%s469 + $0x4] sm:$0xf]
        %v3637 = vld [vmem:[%s469 + $0x8] sm:$0xf]
        %v3638 = vld [vmem:[%s469 + $0xc] sm:$0xf]
        %v3639 = vld [vmem:[%s469 + $0x10] sm:$0xf]
        %v3640 = vld [vmem:[%s469 + $0x14] sm:$0xf]
        %v3641 = vld [vmem:[%s469 + $0x18] sm:$0xf]
        %v3642 = vld [vmem:[%s469 + $0x1c] sm:$0xf]
        %v3643 = vld [vmem:[%s469 + $0x20] sm:$0xf]
        %v3644 = vld [vmem:[%s469 + $0x24] sm:$0xf]
        %v3645 = vld [vmem:[%s469 + $0x28] sm:$0xf]
        %v3646 = vld [vmem:[%s469 + $0x2c] sm:$0xf]
        %v3647 = vld [vmem:[%s469 + $0x30] sm:$0xf]
        %v3648 = vld [vmem:[%s469 + $0x34] sm:$0xf]
        %v3649 = vld [vmem:[%s469 + $0x38] sm:$0xf]
        %v3650 = vld [vmem:[%s469 + $0x3c] sm:$0xf]
        %v3651 = vunpack.c.l.bf16 %v3635
        %v3652 = vunpack.c.l.bf16 %v3636
        %v3653 = vunpack.c.l.bf16 %v3637
        %v3654 = vunpack.c.l.bf16 %v3638
        %v3655 = vunpack.c.l.bf16 %v3639
        %v3656 = vunpack.c.l.bf16 %v3640
        %v3657 = vunpack.c.l.bf16 %v3641
        %v3658 = vunpack.c.l.bf16 %v3642
        %v3659 = vunpack.c.l.bf16 %v3643
        %v3660 = vunpack.c.l.bf16 %v3644
        %v3661 = vunpack.c.l.bf16 %v3645
        %v3662 = vunpack.c.l.bf16 %v3646
        %v3663 = vunpack.c.l.bf16 %v3647
        %v3664 = vunpack.c.l.bf16 %v3648
        %v3665 = vunpack.c.l.bf16 %v3649
        %v3666 = vunpack.c.l.bf16 %v3650
        %v3667 = vadd.f32 %v3573, %v3651
        %v3668 = vadd.f32 %v3576, %v3652
        %v3669 = vadd.f32 %v3581, %v3653
        %v3670 = vadd.f32 %v3584, %v3654
        %v3671 = vadd.f32 %v3589, %v3655
        %v3672 = vadd.f32 %v3592, %v3656
        %v3673 = vadd.f32 %v3597, %v3657
        %v3674 = vadd.f32 %v3600, %v3658
        %v3675 = vadd.f32 %v3605, %v3659
        %v3676 = vadd.f32 %v3608, %v3660
        %v3677 = vadd.f32 %v3613, %v3661
        %v3678 = vadd.f32 %v3616, %v3662
        %v3679 = vadd.f32 %v3621, %v3663
        %v3680 = vadd.f32 %v3624, %v3664
        %v3681 = vadd.f32 %v3629, %v3665
        %v3682 = vadd.f32 %v3632, %v3666
        %v3683 = vmax.f32 %v3667, 0.0
        %v3684 = vmax.f32 %v3668, 0.0
        %v3685 = vmax.f32 %v3669, 0.0
        %v3686 = vmax.f32 %v3670, 0.0
        %v3687 = vmax.f32 %v3671, 0.0
        %v3688 = vmax.f32 %v3672, 0.0
        %v3689 = vmax.f32 %v3673, 0.0
        %v3690 = vmax.f32 %v3674, 0.0
        %v3691 = vmax.f32 %v3675, 0.0
        %v3692 = vmax.f32 %v3676, 0.0
        %v3693 = vmax.f32 %v3677, 0.0
        %v3694 = vmax.f32 %v3678, 0.0
        %v3695 = vmax.f32 %v3679, 0.0
        %v3696 = vmax.f32 %v3680, 0.0
        %v3697 = vmax.f32 %v3681, 0.0
        %v3698 = vmax.f32 %v3682, 0.0
        %v3699 = vpack.c.bf16 %v3684, %v3683
        %v3700 = vpack.c.bf16 %v3686, %v3685
        %v3701 = vpack.c.bf16 %v3688, %v3687
        %v3702 = vpack.c.bf16 %v3690, %v3689
        %v3703 = vpack.c.bf16 %v3692, %v3691
        %v3704 = vpack.c.bf16 %v3694, %v3693
        %v3705 = vpack.c.bf16 %v3696, %v3695
        %v3706 = vpack.c.bf16 %v3698, %v3697
        %v3715 = vunpack.c.l.b16 %v3699
        %v3716 = vunpack.c.h.b16 %v3699
        %v3717 = vunpack.c.l.b16 %v3700
        %v3718 = vunpack.c.h.b16 %v3700
        %v3719 = vunpack.c.l.b16 %v3701
        %v3720 = vunpack.c.h.b16 %v3701
        %v3721 = vunpack.c.l.b16 %v3702
        %v3722 = vunpack.c.h.b16 %v3702
        %v3723 = vunpack.c.l.b16 %v3703
        %v3724 = vunpack.c.h.b16 %v3703
        %v3725 = vunpack.c.l.b16 %v3704
        %v3726 = vunpack.c.h.b16 %v3704
        %v3727 = vunpack.c.l.b16 %v3705
        %v3728 = vunpack.c.h.b16 %v3705
        %v3729 = vunpack.c.l.b16 %v3706
        %v3730 = vunpack.c.h.b16 %v3706
        %v3731 = vpack.c.b16 %v3715, %v3715
        %v3732 = vpack.c.b16 %v3716, %v3716
        %v3733 = vpack.c.b16 %v3717, %v3717
        %v3734 = vpack.c.b16 %v3718, %v3718
        %v3735 = vpack.c.b16 %v3719, %v3719
        %v3736 = vpack.c.b16 %v3720, %v3720
        %v3737 = vpack.c.b16 %v3721, %v3721
        %v3738 = vpack.c.b16 %v3722, %v3722
        %v3739 = vpack.c.b16 %v3723, %v3723
        %v3740 = vpack.c.b16 %v3724, %v3724
        %v3741 = vpack.c.b16 %v3725, %v3725
        %v3742 = vpack.c.b16 %v3726, %v3726
        %v3743 = vpack.c.b16 %v3727, %v3727
        %v3744 = vpack.c.b16 %v3728, %v3728
        %v3745 = vpack.c.b16 %v3729, %v3729
        %v3746 = vpack.c.b16 %v3730, %v3730
        %3763 = vst [vmem:[%s442] sm:$0xf] %v3731
        %3764 = vst [vmem:[%s442 + $0x4] sm:$0xf] %v3732
        %3765 = vst [vmem:[%s442 + $0x8] sm:$0xf] %v3733
        %3766 = vst [vmem:[%s442 + $0xc] sm:$0xf] %v3734
        %3767 = vst [vmem:[%s442 + $0x10] sm:$0xf] %v3735
        %3768 = vst [vmem:[%s442 + $0x14] sm:$0xf] %v3736
        %3769 = vst [vmem:[%s442 + $0x18] sm:$0xf] %v3737
        %3770 = vst [vmem:[%s442 + $0x1c] sm:$0xf] %v3738
        %3771 = vst [vmem:[%s442 + $0x20] sm:$0xf] %v3739
        %3772 = vst [vmem:[%s442 + $0x24] sm:$0xf] %v3740
        %3773 = vst [vmem:[%s442 + $0x28] sm:$0xf] %v3741
        %3774 = vst [vmem:[%s442 + $0x2c] sm:$0xf] %v3742
        %3775 = vst [vmem:[%s442 + $0x30] sm:$0xf] %v3743
        %3776 = vst [vmem:[%s442 + $0x34] sm:$0xf] %v3744
        %3777 = vst [vmem:[%s442 + $0x38] sm:$0xf] %v3745
        %3778 = vst [vmem:[%s442 + $0x3c] sm:$0xf] %v3746
        %s3779 = sand.u32 %s271, 1
        %s3780 = scalar_lea.sflag [#allocation4], %s3779
        %s3781 = sand.u32 %s271, 1
        %s3782 = smul.addr %s3781, 64
        %s3783 = scalar_lea.vmem [#allocation3], %s3782
        // Predicated region
        $region57: #{tpu_custom_call.1} parent=55 // pred_check
          %p3784 = pneg %p281
        $region58: #{tpu_custom_call.1} parent=55 // pred_check_branch
          %3786 = sbr.rel (%p3784) target = $region60
        $region59: #{tpu_custom_call.1} parent=55 // pred_region
          %s3787 = smul.u32 16, %s28
          %s3789 = ssub.s32 1024, 1024
          %3790 = vsyncadd %s3780, %s3789
          %s3791 = smul.addr %s27, 32
          %s3792 = sadd.s32 %s3787, %s3791
          %s3793 = smul.addr %s3792, 64
          %s3794 = scalar_lea.hbm %s9, %s3793
          %s3795 = sshll.u32 %s3783, 4
          %s3796 = int_to_ptr.vmem [resolvable:$true] %s3795
          %3801 = dma.vmem_to_hbm [thread:$0]  %s3796, 1024, %s3794, %s3780, 64, 64, 4
        $region60: #{tpu_custom_call.1} parent=55 // pred_fallthru
          _
      $region56: #{tpu_custom_call.1} parent=5 // pred_fallthru
        _
      %p3802 = scmp.le.s32.totalorder 2, %s18
      // Predicated region
      $region61: #{tpu_custom_call.1} parent=5 // pred_check
        %p3803 = pneg %p3802
      $region62: #{tpu_custom_call.1} parent=5 // pred_check_branch
        %3805 = sbr.rel (%p3803) target = $region64
      $region63: #{tpu_custom_call.1} parent=5 // pred_region
        %s3806 = ssub.s32 %s18, 2
        // Predicated region
        $region65: #{tpu_custom_call.1} parent=63 // pred_check
          %p3807 = pneg %p287
        $region66: #{tpu_custom_call.1} parent=63 // pred_check_branch
          %3809 = sbr.rel (%p3807) target = $region68
        $region67: #{tpu_custom_call.1} parent=63 // pred_region
          %s3810 = sand.u32 %s272, 1
          %s3811 = scalar_lea.sflag [#allocation4], %s3810
          %s3812 = sand.u32 %s272, 1
          %s3813 = smul.addr %s3812, 64
          %s3814 = scalar_lea.vmem [#allocation3], %s3813
          %3815 = dma.done %s3811, 1024
        $region68: #{tpu_custom_call.1} parent=63 // pred_fallthru
          _
      $region64: #{tpu_custom_call.1} parent=5 // pred_fallthru
        _
    $region6: #{tpu_custom_call.1} parent=1 // loop_footer
      %s22 = sadd.s32 1, %s18
    $region7: #{tpu_custom_call.1} parent=1 // loop_footer_branch
      %17 = sbr.rel target = $region3
    $region8: #{tpu_custom_call.1} parent=1 // loop_exit
      _
    %3816 = vsyncpa [#allocation4], 1
    %s3817 = scalar_lea.sflag [#allocation4], 1
    %3818 = vsyncpa %s3817, 1

</llo_original>
